<compile_context>
chip_gen: v7x
topology: tpu7x:2x2x1
jax: 0.10.0
libtpu: 0.0.40
codegen_flags: <defaults>
</compile_context>

<pallas_src>
import functools

import jax
import jax.numpy as jnp
from jax import lax
from jax.experimental import pallas as pl
from jax.experimental.pallas import tpu as pltpu


def _residual_block_kernel(x_ref, w1_ref, w2_ref, g_ref, o_ref, xpad_ref):
    # x_ref:  (BB, H, W, C)   f32   input tile (real channel count on the HBM side)
    # w*_ref: (3, 3*CP, CP)   bf16  conv weights; one (3*CP, CP) K-chunk per kernel row
    #                               dh, K ordered as (dw, ci), zero-padded to CP channels
    # g_ref:  (1, CP)         f32   precomputed SE gate (per-channel scale)
    # o_ref:  (BB, H, W, C)   f32   output tile
    # xpad_ref: (BB, H, W+2, CP) bf16 scratch: W-axis reflect pad + lane pad C -> CP
    BB, H, W, C = x_ref.shape
    CP = w1_ref.shape[2]
    HW = H * W
    inv_hw = 1.0 / float(HW)

    def write_reflect_pad_w(t):
        # t: (BB, H, W, L), L <= CP. Write the interior and mirror the two boundary
        # columns (ReflectionPad(1) along W). Lanes >= L keep their previous contents
        # (zeros from the initial fill for conv1; fully overwritten for conv2).
        L = t.shape[-1]
        xpad_ref[:, :, 1:W + 1, :L] = t.astype(xpad_ref.dtype)
        xpad_ref[:, :, 0:1, :] = xpad_ref[:, :, 2:3, :]                # left mirror (col 1)
        xpad_ref[:, :, W + 1:W + 2, :] = xpad_ref[:, :, W - 1:W, :]    # right mirror (col W-2)

    def conv3x3(w_ref):
        # Column taps dw in {0,1,2}: contiguous W-slices of the padded scratch, lane-
        # concatenated (128-aligned pieces) into one (BB, H, W, 3*CP) slab. Row taps dh
        # are H-axis (untiled dim) concats with reflection. 3 MXU matmuls with K = 3*CP,
        # f32 accumulation; the 9-tap patch matrix is never materialized.
        wide = jnp.concatenate(
            [xpad_ref[:, :, 0:W, :],
             xpad_ref[:, :, 1:W + 1, :],
             xpad_ref[:, :, 2:W + 2, :]], axis=-1)

        def rows(dh):
            if dh == 0:      # row h-1, reflected (-1 -> 1)
                return jnp.concatenate([wide[:, 1:2], wide[:, :H - 1]], axis=1)
            if dh == 2:      # row h+1, reflected (H -> H-2)
                return jnp.concatenate([wide[:, 1:], wide[:, H - 2:H - 1]], axis=1)
            return wide      # dh == 1: row h

        acc = jnp.zeros((BB * HW, CP), jnp.float32)
        for dh in range(3):
            acc = acc + jnp.dot(rows(dh).reshape(BB * HW, 3 * CP), w_ref[dh],
                                preferred_element_type=jnp.float32)
        return acc

    def instance_norm(y, scale=None):
        # y: (BB*HW, CP) f32. Per-sample, per-channel, biased variance, eps=1e-5.
        # One-pass stats (sum + sum of squares) with a var >= 0 clamp; `scale` folds an
        # extra per-channel factor (the SE gate) into the normalization scale for free.
        y3 = y.reshape(BB, HW, CP)
        s1 = jnp.sum(y3, axis=1, keepdims=True)
        s2 = jnp.sum(y3 * y3, axis=1, keepdims=True)
        mu = s1 * inv_hw
        var = jnp.maximum(s2 * inv_hw - mu * mu, 0.0)
        inv = lax.rsqrt(var + 1e-5)
        if scale is not None:
            inv = inv * scale
        return (y3 - mu) * inv

    # Lane padding: zero the scratch once so channels C..CP-1 stay exactly zero through
    # conv1 -> InstanceNorm -> ReLU (they are sliced off before the output store).
    xpad_ref[...] = jnp.zeros_like(xpad_ref)

    # conv_block (conv biases are not applied: they cancel exactly inside
    # InstanceNorm(affine=False), which subtracts the per-channel spatial mean).
    write_reflect_pad_w(x_ref[...])
    a1 = jnp.maximum(instance_norm(conv3x3(w1_ref)), 0.0)             # (BB, HW, CP) f32
    write_reflect_pad_w(a1.reshape(BB, H, W, CP))
    y2 = instance_norm(conv3x3(w2_ref), scale=g_ref[...])             # IN fused with SE gate

    # Residual add: re-read x_ref (no f32 copy of the input kept live across the convs).
    o_ref[...] = (x_ref[...] + y2[:, :, :C].reshape(BB, H, W, C)).astype(o_ref.dtype)


def _round_up(n, m):
    return ((n + m - 1) // m) * m


@functools.partial(jax.jit, static_argnames=("num_blocks",))
def residual_block_nchw(x_nchw, w1, b1, w2, b2, fc1, fc2, num_blocks=1):
    """x_nchw: (B, C, H, W) f32. w1/w2: (3,3,C,C) HWIO conv weights. b1/b2: (C,) conv
    biases (unused: cancelled exactly by InstanceNorm(affine=False)). fc1: (C, C//r),
    fc2: (C//r, C) bias-free SE weights. Returns (B, C, H, W).

    num_blocks: grid steps along the batch. Default 1 (v5e/v6e have a single TensorCore,
    so extra grid steps are pure serial overhead). On v7x pass num_blocks=2 to shard the
    batch across both TensorCores (CORE_PARALLEL)."""
    del b1, b2  # conv biases have no effect through InstanceNorm(affine=False)

    x = jnp.transpose(x_nchw, (0, 2, 3, 1))                  # NCHW -> NHWC (kernel layout)
    B, H, W, C = x.shape
    assert H >= 2 and W >= 2, "ReflectionPad2d(1) requires H >= 2 and W >= 2"
    assert B % num_blocks == 0, "num_blocks must divide the batch"
    BB = B // num_blocks

    CP = _round_up(C, 128)                                   # lane-dense compute width

    # Conv weights: zero-pad channels to CP and reshape HWIO -> (3, 3*CP, CP) so each
    # kernel row dh is one contiguous (3*CP, CP) MXU operand (K ordered as (dw, ci)).
    def prep_w(w):
        wp = jnp.pad(w, ((0, 0), (0, 0), (0, CP - C), (0, CP - C)))
        return wp.reshape(3, 3 * CP, CP).astype(jnp.bfloat16)

    w1r = prep_w(w1)
    w2r = prep_w(w2)

    # SE gate: the SE input is the spatial mean of an InstanceNorm(affine=False) output,
    # which is exactly zero, so the gate is input-independent (== sigmoid(0) == 0.5 per
    # channel with SEBlock's bias-free Linears). Compute it once from the fc weights and
    # fuse it into the second InstanceNorm's per-channel scale inside the kernel.
    se_in = jnp.zeros((1, C), jnp.float32)
    gate = jax.nn.sigmoid(jnp.maximum(se_in @ fc1, 0.0) @ fc2)          # (1, C)
    gate = jnp.pad(gate, ((0, 0), (0, CP - C)))                          # (1, CP)

    dim_sem = (pltpu.CORE_PARALLEL,) if num_blocks > 1 else (pltpu.ARBITRARY,)

    out = pl.pallas_call(
        _residual_block_kernel,
        out_shape=jax.ShapeDtypeStruct((B, H, W, C), x.dtype),
        grid_spec=pltpu.PrefetchScalarGridSpec(
            num_scalar_prefetch=0,
            grid=(num_blocks,),
            in_specs=[
                pl.BlockSpec((BB, H, W, C), lambda i: (i, 0, 0, 0)),    # x (real C lanes)
                pl.BlockSpec((3, 3 * CP, CP), lambda i: (0, 0, 0)),     # conv1 weight
                pl.BlockSpec((3, 3 * CP, CP), lambda i: (0, 0, 0)),     # conv2 weight
                pl.BlockSpec((1, CP), lambda i: (0, 0)),                # SE gate
            ],
            out_specs=pl.BlockSpec((BB, H, W, C), lambda i: (i, 0, 0, 0)),
            scratch_shapes=[pltpu.VMEM((BB, H, W + 2, CP), jnp.bfloat16)],
        ),
        compiler_params=pltpu.CompilerParams(dimension_semantics=dim_sem),
    )(x, w1r, w2r, gate)

    return jnp.transpose(out, (0, 3, 1, 2))                  # back to NCHW


def _reference_nchw(x_nchw, w1, b1, w2, b2, fc1, fc2):
    """Pure-JAX f32 reference (NHWC internally) mirroring the PyTorch forward, with biases."""
    x = jnp.transpose(x_nchw, (0, 2, 3, 1))

    def refl_pad(t):
        t = jnp.concatenate([t[:, 1:2], t, t[:, -2:-1]], axis=1)
        t = jnp.concatenate([t[:, :, 1:2], t, t[:, :, -2:-1]], axis=2)
        return t

    def conv(t, w, b):
        y = lax.conv_general_dilated(t, w, (1, 1), "VALID",
                                     dimension_numbers=("NHWC", "HWIO", "NHWC"))
        return y + b.reshape(1, 1, 1, -1)

    def inorm(t):
        mu = t.mean(axis=(1, 2), keepdims=True)
        var = ((t - mu) ** 2).mean(axis=(1, 2), keepdims=True)
        return (t - mu) * lax.rsqrt(var + 1e-5)

    y = inorm(conv(refl_pad(x), w1, b1))
    y = jnp.maximum(y, 0.0)
    y = inorm(conv(refl_pad(y), w2, b2))
    s = y.mean(axis=(1, 2))
    h = jnp.maximum(s @ fc1, 0.0)
    g = jax.nn.sigmoid(h @ fc2)
    out = x + y * g[:, None, None, :]
    return jnp.transpose(out, (0, 3, 1, 2))


if __name__ == "__main__":
    B, C, H, W = 2, 32, 8, 8          # in_features=32 so SE hidden = 32 // 16 = 2
    R = 16
    Ch = C // R

    key = jax.random.PRNGKey(0)
    k = jax.random.split(key, 7)

    x = jax.random.normal(k[0], (B, C, H, W), jnp.float32)                 # NCHW like PyTorch
    w1 = jax.random.normal(k[1], (3, 3, C, C), jnp.float32) * 0.1          # HWIO
    b1 = jax.random.normal(k[2], (C,), jnp.float32) * 0.1
    w2 = jax.random.normal(k[3], (3, 3, C, C), jnp.float32) * 0.1
    b2 = jax.random.normal(k[4], (C,), jnp.float32) * 0.1
    fc1 = jax.random.normal(k[5], (C, Ch), jnp.float32) * 0.1              # Linear(C, C//r).weight.T
    fc2 = jax.random.normal(k[6], (Ch, C), jnp.float32) * 0.1              # Linear(C//r, C).weight.T

    out = residual_block_nchw(x, w1, b1, w2, b2, fc1, fc2)
    out = jax.block_until_ready(out)

    ref = _reference_nchw(x, w1, b1, w2, b2, fc1, fc2)
    assert out.shape == (B, C, H, W)
    # Tolerance accounts for bf16 MXU conv operands (f32 accumulation); observed error is
    # well below this bound.
    assert jnp.max(jnp.abs(out - ref)) < 5e-2, "mismatch vs JAX reference"

    print("KERNEL_OK")
</pallas_src>

<mosaic_0001>
module attributes {stable_mosaic.version = 11 : i64} {
  func.func @_residual_block_kernel(%arg0: i32, %arg1: memref<2x8x8x32xf32, #tpu.memory_space<vmem>>, %arg2: memref<3x384x128xbf16, #tpu.memory_space<vmem>>, %arg3: memref<3x384x128xbf16, #tpu.memory_space<vmem>>, %arg4: memref<1x128xf32, #tpu.memory_space<vmem>>, %arg5: memref<2x8x8x32xf32, #tpu.memory_space<vmem>>, %arg6: memref<2x8x10x128xbf16, #tpu.memory_space<vmem>>) attributes {dimension_semantics = [#tpu.dimension_semantics<arbitrary>], iteration_bounds = array<i64: 1>, scalar_prefetch = 0 : i64, scratch_operands = 1 : i64, tpu.core_type = #tpu.core_type<tc>, window_params = [{transform_indices = @transform_0, window_bounds = array<i64: 2, 8, 8, 32>}, {pipeline_mode = #tpu.pipeline_mode<synchronous>, transform_indices = @transform_1, window_bounds = array<i64: 3, 384, 128>}, {pipeline_mode = #tpu.pipeline_mode<synchronous>, transform_indices = @transform_2, window_bounds = array<i64: 3, 384, 128>}, {pipeline_mode = #tpu.pipeline_mode<synchronous>, transform_indices = @transform_3, window_bounds = array<i64: 1, 128>}, {transform_indices = @transform_4, window_bounds = array<i64: 2, 8, 8, 32>}]} {
    %cst = arith.constant 0.000000e+00 : bf16
    %0 = vector.broadcast %cst : bf16 to vector<2x8x10x128xbf16>
    %c0 = arith.constant 0 : index
    %c0_0 = arith.constant 0 : index
    %c0_1 = arith.constant 0 : index
    %c0_2 = arith.constant 0 : index
    %1 = vector.load %arg6[%c0, %c0_0, %c0_1, %c0_2] : memref<2x8x10x128xbf16, #tpu.memory_space<vmem>>, vector<2x8x10x128xbf16>
    tpu.vector_store %arg6[%c0, %c0_0, %c0_1, %c0_2], %0 {strides = array<i32>} : memref<2x8x10x128xbf16, #tpu.memory_space<vmem>>, vector<2x8x10x128xbf16>,
    %c0_3 = arith.constant 0 : index
    %c0_4 = arith.constant 0 : index
    %c0_5 = arith.constant 0 : index
    %c0_6 = arith.constant 0 : index
    %2 = vector.load %arg1[%c0_3, %c0_4, %c0_5, %c0_6] : memref<2x8x8x32xf32, #tpu.memory_space<vmem>>, vector<2x8x8x32xf32>
    %3 = arith.truncf %2 : vector<2x8x8x32xf32> to vector<2x8x8x32xbf16>
    %c0_7 = arith.constant 0 : index
    %c0_8 = arith.constant 0 : index
    %c1 = arith.constant 1 : index
    %c0_9 = arith.constant 0 : index
    %4 = vector.load %arg6[%c0_7, %c0_8, %c1, %c0_9] : memref<2x8x10x128xbf16, #tpu.memory_space<vmem>>, vector<2x8x8x32xbf16>
    tpu.vector_store %arg6[%c0_7, %c0_8, %c1, %c0_9], %3 {strides = array<i32>} : memref<2x8x10x128xbf16, #tpu.memory_space<vmem>>, vector<2x8x8x32xbf16>,
    %c0_10 = arith.constant 0 : index
    %c0_11 = arith.constant 0 : index
    %c2 = arith.constant 2 : index
    %c0_12 = arith.constant 0 : index
    %5 = vector.load %arg6[%c0_10, %c0_11, %c2, %c0_12] : memref<2x8x10x128xbf16, #tpu.memory_space<vmem>>, vector<2x8x1x128xbf16>
    %c0_13 = arith.constant 0 : index
    %c0_14 = arith.constant 0 : index
    %c0_15 = arith.constant 0 : index
    %c0_16 = arith.constant 0 : index
    %6 = vector.load %arg6[%c0_13, %c0_14, %c0_15, %c0_16] : memref<2x8x10x128xbf16, #tpu.memory_space<vmem>>, vector<2x8x1x128xbf16>
    tpu.vector_store %arg6[%c0_13, %c0_14, %c0_15, %c0_16], %5 {strides = array<i32>} : memref<2x8x10x128xbf16, #tpu.memory_space<vmem>>, vector<2x8x1x128xbf16>,
    %c0_17 = arith.constant 0 : index
    %c0_18 = arith.constant 0 : index
    %c7 = arith.constant 7 : index
    %c0_19 = arith.constant 0 : index
    %7 = vector.load %arg6[%c0_17, %c0_18, %c7, %c0_19] : memref<2x8x10x128xbf16, #tpu.memory_space<vmem>>, vector<2x8x1x128xbf16>
    %c0_20 = arith.constant 0 : index
    %c0_21 = arith.constant 0 : index
    %c9 = arith.constant 9 : index
    %c0_22 = arith.constant 0 : index
    %8 = vector.load %arg6[%c0_20, %c0_21, %c9, %c0_22] : memref<2x8x10x128xbf16, #tpu.memory_space<vmem>>, vector<2x8x1x128xbf16>
    tpu.vector_store %arg6[%c0_20, %c0_21, %c9, %c0_22], %7 {strides = array<i32>} : memref<2x8x10x128xbf16, #tpu.memory_space<vmem>>, vector<2x8x1x128xbf16>,
    %c0_23 = arith.constant 0 : index
    %c0_24 = arith.constant 0 : index
    %c0_25 = arith.constant 0 : index
    %c0_26 = arith.constant 0 : index
    %9 = vector.load %arg6[%c0_23, %c0_24, %c0_25, %c0_26] : memref<2x8x10x128xbf16, #tpu.memory_space<vmem>>, vector<2x8x8x128xbf16>
    %c0_27 = arith.constant 0 : index
    %c0_28 = arith.constant 0 : index
    %c1_29 = arith.constant 1 : index
    %c0_30 = arith.constant 0 : index
    %10 = vector.load %arg6[%c0_27, %c0_28, %c1_29, %c0_30] : memref<2x8x10x128xbf16, #tpu.memory_space<vmem>>, vector<2x8x8x128xbf16>
    %c0_31 = arith.constant 0 : index
    %c0_32 = arith.constant 0 : index
    %c2_33 = arith.constant 2 : index
    %c0_34 = arith.constant 0 : index
    %11 = vector.load %arg6[%c0_31, %c0_32, %c2_33, %c0_34] : memref<2x8x10x128xbf16, #tpu.memory_space<vmem>>, vector<2x8x8x128xbf16>
    %12 = tpu.concatenate %9, %10, %11 in 3 : vector<2x8x8x128xbf16>, vector<2x8x8x128xbf16>, vector<2x8x8x128xbf16> -> vector<2x8x8x384xbf16>
    %cst_35 = arith.constant 0.000000e+00 : f32
    %13 = vector.broadcast %cst_35 : f32 to vector<128x128xf32>
    %14 = vector.extract_strided_slice %12 {offsets = [0, 1, 0, 0], sizes = [2, 1, 8, 384], strides = [1, 1, 1, 1]} : vector<2x8x8x384xbf16> to vector<2x1x8x384xbf16>
    %15 = vector.extract_strided_slice %12 {offsets = [0, 0, 0, 0], sizes = [2, 7, 8, 384], strides = [1, 1, 1, 1]} : vector<2x8x8x384xbf16> to vector<2x7x8x384xbf16>
    %16 = tpu.concatenate %14, %15 in 1 : vector<2x1x8x384xbf16>, vector<2x7x8x384xbf16> -> vector<2x8x8x384xbf16>
    %17 = vector.shape_cast %16 : vector<2x8x8x384xbf16> to vector<128x384xbf16>
    %c0_36 = arith.constant 0 : index
    %c0_37 = arith.constant 0 : index
    %c0_38 = arith.constant 0 : index
    %18 = vector.load %arg2[%c0_36, %c0_37, %c0_38] : memref<3x384x128xbf16, #tpu.memory_space<vmem>>, vector<1x384x128xbf16>
    %19 = vector.shape_cast %18 : vector<1x384x128xbf16> to vector<384x128xbf16>
    %cst_39 = arith.constant dense<0.000000e+00> : vector<128x128xf32>
    %20 = tpu.matmul %17, %19, %cst_39 {dimension_numbers = #tpu.dot_dimension_numbers<[1], [0], [0], [1], [0, 0, 1, 1], [], []>} : vector<128x384xbf16>, vector<384x128xbf16>, vector<128x128xf32> -> vector<128x128xf32>
    %21 = arith.addf %13, %20 : vector<128x128xf32>
    %22 = vector.shape_cast %12 : vector<2x8x8x384xbf16> to vector<128x384xbf16>
    %c1_40 = arith.constant 1 : index
    %c0_41 = arith.constant 0 : index
    %c0_42 = arith.constant 0 : index
    %23 = vector.load %arg2[%c1_40, %c0_41, %c0_42] : memref<3x384x128xbf16, #tpu.memory_space<vmem>>, vector<1x384x128xbf16>
    %24 = vector.shape_cast %23 : vector<1x384x128xbf16> to vector<384x128xbf16>
    %cst_43 = arith.constant dense<0.000000e+00> : vector<128x128xf32>
    %25 = tpu.matmul %22, %24, %cst_43 {dimension_numbers = #tpu.dot_dimension_numbers<[1], [0], [0], [1], [0, 0, 1, 1], [], []>} : vector<128x384xbf16>, vector<384x128xbf16>, vector<128x128xf32> -> vector<128x128xf32>
    %26 = arith.addf %21, %25 : vector<128x128xf32>
    %27 = vector.extract_strided_slice %12 {offsets = [0, 1, 0, 0], sizes = [2, 7, 8, 384], strides = [1, 1, 1, 1]} : vector<2x8x8x384xbf16> to vector<2x7x8x384xbf16>
    %28 = vector.extract_strided_slice %12 {offsets = [0, 6, 0, 0], sizes = [2, 1, 8, 384], strides = [1, 1, 1, 1]} : vector<2x8x8x384xbf16> to vector<2x1x8x384xbf16>
    %29 = tpu.concatenate %27, %28 in 1 : vector<2x7x8x384xbf16>, vector<2x1x8x384xbf16> -> vector<2x8x8x384xbf16>
    %30 = vector.shape_cast %29 : vector<2x8x8x384xbf16> to vector<128x384xbf16>
    %c2_44 = arith.constant 2 : index
    %c0_45 = arith.constant 0 : index
    %c0_46 = arith.constant 0 : index
    %31 = vector.load %arg2[%c2_44, %c0_45, %c0_46] : memref<3x384x128xbf16, #tpu.memory_space<vmem>>, vector<1x384x128xbf16>
    %32 = vector.shape_cast %31 : vector<1x384x128xbf16> to vector<384x128xbf16>
    %cst_47 = arith.constant dense<0.000000e+00> : vector<128x128xf32>
    %33 = tpu.matmul %30, %32, %cst_47 {dimension_numbers = #tpu.dot_dimension_numbers<[1], [0], [0], [1], [0, 0, 1, 1], [], []>} : vector<128x384xbf16>, vector<384x128xbf16>, vector<128x128xf32> -> vector<128x128xf32>
    %34 = arith.addf %26, %33 : vector<128x128xf32>
    %35 = vector.shape_cast %34 : vector<128x128xf32> to vector<2x64x128xf32>
    %cst_48 = arith.constant dense<0.000000e+00> : vector<2x128xf32>
    %36 = vector.multi_reduction <add>, %35, %cst_48 [1] : vector<2x64x128xf32> to vector<2x128xf32>
    %37 = vector.shape_cast %36 : vector<2x128xf32> to vector<2x1x128xf32>
    %38 = arith.mulf %35, %35 : vector<2x64x128xf32>
    %cst_49 = arith.constant dense<0.000000e+00> : vector<2x128xf32>
    %39 = vector.multi_reduction <add>, %38, %cst_49 [1] : vector<2x64x128xf32> to vector<2x128xf32>
    %40 = vector.shape_cast %39 : vector<2x128xf32> to vector<2x1x128xf32>
    %cst_50 = arith.constant 1.562500e-02 : f32
    %41 = vector.broadcast %cst_50 : f32 to vector<2x1x128xf32>
    %42 = arith.mulf %37, %41 : vector<2x1x128xf32>
    %cst_51 = arith.constant 1.562500e-02 : f32
    %43 = vector.broadcast %cst_51 : f32 to vector<2x1x128xf32>
    %44 = arith.mulf %40, %43 : vector<2x1x128xf32>
    %45 = arith.mulf %42, %42 : vector<2x1x128xf32>
    %46 = arith.subf %44, %45 : vector<2x1x128xf32>
    %cst_52 = arith.constant 0.000000e+00 : f32
    %47 = vector.broadcast %cst_52 : f32 to vector<2x1x128xf32>
    %48 = arith.maximumf %46, %47 : vector<2x1x128xf32>
    %cst_53 = arith.constant 9.99999974E-6 : f32
    %49 = vector.broadcast %cst_53 : f32 to vector<2x1x128xf32>
    %50 = arith.addf %48, %49 : vector<2x1x128xf32>
    %51 = math.rsqrt %50 : vector<2x1x128xf32>
    %52 = vector.broadcast %42 : vector<2x1x128xf32> to vector<2x64x128xf32>
    %53 = arith.subf %35, %52 : vector<2x64x128xf32>
    %54 = vector.broadcast %51 : vector<2x1x128xf32> to vector<2x64x128xf32>
    %55 = arith.mulf %53, %54 : vector<2x64x128xf32>
    %cst_54 = arith.constant 0.000000e+00 : f32
    %56 = vector.broadcast %cst_54 : f32 to vector<2x64x128xf32>
    %57 = arith.maximumf %55, %56 : vector<2x64x128xf32>
    %58 = vector.shape_cast %57 : vector<2x64x128xf32> to vector<2x8x8x128xf32>
    %59 = arith.truncf %58 : vector<2x8x8x128xf32> to vector<2x8x8x128xbf16>
    %c0_55 = arith.constant 0 : index
    %c0_56 = arith.constant 0 : index
    %c1_57 = arith.constant 1 : index
    %c0_58 = arith.constant 0 : index
    %60 = vector.load %arg6[%c0_55, %c0_56, %c1_57, %c0_58] : memref<2x8x10x128xbf16, #tpu.memory_space<vmem>>, vector<2x8x8x128xbf16>
    tpu.vector_store %arg6[%c0_55, %c0_56, %c1_57, %c0_58], %59 {strides = array<i32>} : memref<2x8x10x128xbf16, #tpu.memory_space<vmem>>, vector<2x8x8x128xbf16>,
    %c0_59 = arith.constant 0 : index
    %c0_60 = arith.constant 0 : index
    %c2_61 = arith.constant 2 : index
    %c0_62 = arith.constant 0 : index
    %61 = vector.load %arg6[%c0_59, %c0_60, %c2_61, %c0_62] : memref<2x8x10x128xbf16, #tpu.memory_space<vmem>>, vector<2x8x1x128xbf16>
    %c0_63 = arith.constant 0 : index
    %c0_64 = arith.constant 0 : index
    %c0_65 = arith.constant 0 : index
    %c0_66 = arith.constant 0 : index
    %62 = vector.load %arg6[%c0_63, %c0_64, %c0_65, %c0_66] : memref<2x8x10x128xbf16, #tpu.memory_space<vmem>>, vector<2x8x1x128xbf16>
    tpu.vector_store %arg6[%c0_63, %c0_64, %c0_65, %c0_66], %61 {strides = array<i32>} : memref<2x8x10x128xbf16, #tpu.memory_space<vmem>>, vector<2x8x1x128xbf16>,
    %c0_67 = arith.constant 0 : index
    %c0_68 = arith.constant 0 : index
    %c7_69 = arith.constant 7 : index
    %c0_70 = arith.constant 0 : index
    %63 = vector.load %arg6[%c0_67, %c0_68, %c7_69, %c0_70] : memref<2x8x10x128xbf16, #tpu.memory_space<vmem>>, vector<2x8x1x128xbf16>
    %c0_71 = arith.constant 0 : index
    %c0_72 = arith.constant 0 : index
    %c9_73 = arith.constant 9 : index
    %c0_74 = arith.constant 0 : index
    %64 = vector.load %arg6[%c0_71, %c0_72, %c9_73, %c0_74] : memref<2x8x10x128xbf16, #tpu.memory_space<vmem>>, vector<2x8x1x128xbf16>
    tpu.vector_store %arg6[%c0_71, %c0_72, %c9_73, %c0_74], %63 {strides = array<i32>} : memref<2x8x10x128xbf16, #tpu.memory_space<vmem>>, vector<2x8x1x128xbf16>,
    %c0_75 = arith.constant 0 : index
    %c0_76 = arith.constant 0 : index
    %c0_77 = arith.constant 0 : index
    %c0_78 = arith.constant 0 : index
    %65 = vector.load %arg6[%c0_75, %c0_76, %c0_77, %c0_78] : memref<2x8x10x128xbf16, #tpu.memory_space<vmem>>, vector<2x8x8x128xbf16>
    %c0_79 = arith.constant 0 : index
    %c0_80 = arith.constant 0 : index
    %c1_81 = arith.constant 1 : index
    %c0_82 = arith.constant 0 : index
    %66 = vector.load %arg6[%c0_79, %c0_80, %c1_81, %c0_82] : memref<2x8x10x128xbf16, #tpu.memory_space<vmem>>, vector<2x8x8x128xbf16>
    %c0_83 = arith.constant 0 : index
    %c0_84 = arith.constant 0 : index
    %c2_85 = arith.constant 2 : index
    %c0_86 = arith.constant 0 : index
    %67 = vector.load %arg6[%c0_83, %c0_84, %c2_85, %c0_86] : memref<2x8x10x128xbf16, #tpu.memory_space<vmem>>, vector<2x8x8x128xbf16>
    %68 = tpu.concatenate %65, %66, %67 in 3 : vector<2x8x8x128xbf16>, vector<2x8x8x128xbf16>, vector<2x8x8x128xbf16> -> vector<2x8x8x384xbf16>
    %cst_87 = arith.constant 0.000000e+00 : f32
    %69 = vector.broadcast %cst_87 : f32 to vector<128x128xf32>
    %70 = vector.extract_strided_slice %68 {offsets = [0, 1, 0, 0], sizes = [2, 1, 8, 384], strides = [1, 1, 1, 1]} : vector<2x8x8x384xbf16> to vector<2x1x8x384xbf16>
    %71 = vector.extract_strided_slice %68 {offsets = [0, 0, 0, 0], sizes = [2, 7, 8, 384], strides = [1, 1, 1, 1]} : vector<2x8x8x384xbf16> to vector<2x7x8x384xbf16>
    %72 = tpu.concatenate %70, %71 in 1 : vector<2x1x8x384xbf16>, vector<2x7x8x384xbf16> -> vector<2x8x8x384xbf16>
    %73 = vector.shape_cast %72 : vector<2x8x8x384xbf16> to vector<128x384xbf16>
    %c0_88 = arith.constant 0 : index
    %c0_89 = arith.constant 0 : index
    %c0_90 = arith.constant 0 : index
    %74 = vector.load %arg3[%c0_88, %c0_89, %c0_90] : memref<3x384x128xbf16, #tpu.memory_space<vmem>>, vector<1x384x128xbf16>
    %75 = vector.shape_cast %74 : vector<1x384x128xbf16> to vector<384x128xbf16>
    %cst_91 = arith.constant dense<0.000000e+00> : vector<128x128xf32>
    %76 = tpu.matmul %73, %75, %cst_91 {dimension_numbers = #tpu.dot_dimension_numbers<[1], [0], [0], [1], [0, 0, 1, 1], [], []>} : vector<128x384xbf16>, vector<384x128xbf16>, vector<128x128xf32> -> vector<128x128xf32>
    %77 = arith.addf %69, %76 : vector<128x128xf32>
    %78 = vector.shape_cast %68 : vector<2x8x8x384xbf16> to vector<128x384xbf16>
    %c1_92 = arith.constant 1 : index
    %c0_93 = arith.constant 0 : index
    %c0_94 = arith.constant 0 : index
    %79 = vector.load %arg3[%c1_92, %c0_93, %c0_94] : memref<3x384x128xbf16, #tpu.memory_space<vmem>>, vector<1x384x128xbf16>
    %80 = vector.shape_cast %79 : vector<1x384x128xbf16> to vector<384x128xbf16>
    %cst_95 = arith.constant dense<0.000000e+00> : vector<128x128xf32>
    %81 = tpu.matmul %78, %80, %cst_95 {dimension_numbers = #tpu.dot_dimension_numbers<[1], [0], [0], [1], [0, 0, 1, 1], [], []>} : vector<128x384xbf16>, vector<384x128xbf16>, vector<128x128xf32> -> vector<128x128xf32>
    %82 = arith.addf %77, %81 : vector<128x128xf32>
    %83 = vector.extract_strided_slice %68 {offsets = [0, 1, 0, 0], sizes = [2, 7, 8, 384], strides = [1, 1, 1, 1]} : vector<2x8x8x384xbf16> to vector<2x7x8x384xbf16>
    %84 = vector.extract_strided_slice %68 {offsets = [0, 6, 0, 0], sizes = [2, 1, 8, 384], strides = [1, 1, 1, 1]} : vector<2x8x8x384xbf16> to vector<2x1x8x384xbf16>
    %85 = tpu.concatenate %83, %84 in 1 : vector<2x7x8x384xbf16>, vector<2x1x8x384xbf16> -> vector<2x8x8x384xbf16>
    %86 = vector.shape_cast %85 : vector<2x8x8x384xbf16> to vector<128x384xbf16>
    %c2_96 = arith.constant 2 : index
    %c0_97 = arith.constant 0 : index
    %c0_98 = arith.constant 0 : index
    %87 = vector.load %arg3[%c2_96, %c0_97, %c0_98] : memref<3x384x128xbf16, #tpu.memory_space<vmem>>, vector<1x384x128xbf16>
    %88 = vector.shape_cast %87 : vector<1x384x128xbf16> to vector<384x128xbf16>
    %cst_99 = arith.constant dense<0.000000e+00> : vector<128x128xf32>
    %89 = tpu.matmul %86, %88, %cst_99 {dimension_numbers = #tpu.dot_dimension_numbers<[1], [0], [0], [1], [0, 0, 1, 1], [], []>} : vector<128x384xbf16>, vector<384x128xbf16>, vector<128x128xf32> -> vector<128x128xf32>
    %90 = arith.addf %82, %89 : vector<128x128xf32>
    %c0_100 = arith.constant 0 : index
    %c0_101 = arith.constant 0 : index
    %91 = vector.load %arg4[%c0_100, %c0_101] : memref<1x128xf32, #tpu.memory_space<vmem>>, vector<1x128xf32>
    %92 = vector.shape_cast %90 : vector<128x128xf32> to vector<2x64x128xf32>
    %cst_102 = arith.constant dense<0.000000e+00> : vector<2x128xf32>
    %93 = vector.multi_reduction <add>, %92, %cst_102 [1] : vector<2x64x128xf32> to vector<2x128xf32>
    %94 = vector.shape_cast %93 : vector<2x128xf32> to vector<2x1x128xf32>
    %95 = arith.mulf %92, %92 : vector<2x64x128xf32>
    %cst_103 = arith.constant dense<0.000000e+00> : vector<2x128xf32>
    %96 = vector.multi_reduction <add>, %95, %cst_103 [1] : vector<2x64x128xf32> to vector<2x128xf32>
    %97 = vector.shape_cast %96 : vector<2x128xf32> to vector<2x1x128xf32>
    %cst_104 = arith.constant 1.562500e-02 : f32
    %98 = vector.broadcast %cst_104 : f32 to vector<2x1x128xf32>
    %99 = arith.mulf %94, %98 : vector<2x1x128xf32>
    %cst_105 = arith.constant 1.562500e-02 : f32
    %100 = vector.broadcast %cst_105 : f32 to vector<2x1x128xf32>
    %101 = arith.mulf %97, %100 : vector<2x1x128xf32>
    %102 = arith.mulf %99, %99 : vector<2x1x128xf32>
    %103 = arith.subf %101, %102 : vector<2x1x128xf32>
    %cst_106 = arith.constant 0.000000e+00 : f32
    %104 = vector.broadcast %cst_106 : f32 to vector<2x1x128xf32>
    %105 = arith.maximumf %103, %104 : vector<2x1x128xf32>
    %cst_107 = arith.constant 9.99999974E-6 : f32
    %106 = vector.broadcast %cst_107 : f32 to vector<2x1x128xf32>
    %107 = arith.addf %105, %106 : vector<2x1x128xf32>
    %108 = math.rsqrt %107 : vector<2x1x128xf32>
    %109 = vector.shape_cast %91 : vector<1x128xf32> to vector<1x1x128xf32>
    %110 = vector.broadcast %109 : vector<1x1x128xf32> to vector<2x1x128xf32>
    %111 = arith.mulf %108, %110 : vector<2x1x128xf32>
    %112 = vector.broadcast %99 : vector<2x1x128xf32> to vector<2x64x128xf32>
    %113 = arith.subf %92, %112 : vector<2x64x128xf32>
    %114 = vector.broadcast %111 : vector<2x1x128xf32> to vector<2x64x128xf32>
    %115 = arith.mulf %113, %114 : vector<2x64x128xf32>
    %c0_108 = arith.constant 0 : index
    %c0_109 = arith.constant 0 : index
    %c0_110 = arith.constant 0 : index
    %c0_111 = arith.constant 0 : index
    %116 = vector.load %arg1[%c0_108, %c0_109, %c0_110, %c0_111] : memref<2x8x8x32xf32, #tpu.memory_space<vmem>>, vector<2x8x8x32xf32>
    %117 = vector.extract_strided_slice %115 {offsets = [0, 0, 0], sizes = [2, 64, 32], strides = [1, 1, 1]} : vector<2x64x128xf32> to vector<2x64x32xf32>
    %118 = vector.shape_cast %117 : vector<2x64x32xf32> to vector<2x8x8x32xf32>
    %119 = arith.addf %116, %118 : vector<2x8x8x32xf32>
    %c0_112 = arith.constant 0 : index
    %c0_113 = arith.constant 0 : index
    %c0_114 = arith.constant 0 : index
    %c0_115 = arith.constant 0 : index
    %120 = vector.load %arg5[%c0_112, %c0_113, %c0_114, %c0_115] : memref<2x8x8x32xf32, #tpu.memory_space<vmem>>, vector<2x8x8x32xf32>
    tpu.vector_store %arg5[%c0_112, %c0_113, %c0_114, %c0_115], %119 {strides = array<i32>} : memref<2x8x8x32xf32, #tpu.memory_space<vmem>>, vector<2x8x8x32xf32>,
    return
  }
  func.func @transform_0(%arg0: i32) -> (i32, i32, i32, i32) {
    %c0_i32 = arith.constant 0 : i32
    %c0_i32_0 = arith.constant 0 : i32
    %c0_i32_1 = arith.constant 0 : i32
    %c0_i32_2 = arith.constant 0 : i32
    return %arg0, %c0_i32, %c0_i32_0, %c0_i32_1 : i32, i32, i32, i32
  }
  func.func @transform_1(%arg0: i32) -> (i32, i32, i32) {
    %c0_i32 = arith.constant 0 : i32
    %c0_i32_0 = arith.constant 0 : i32
    %c0_i32_1 = arith.constant 0 : i32
    %c0_i32_2 = arith.constant 0 : i32
    return %c0_i32, %c0_i32_0, %c0_i32_1 : i32, i32, i32
  }
  func.func @transform_2(%arg0: i32) -> (i32, i32, i32) {
    %c0_i32 = arith.constant 0 : i32
    %c0_i32_0 = arith.constant 0 : i32
    %c0_i32_1 = arith.constant 0 : i32
    %c0_i32_2 = arith.constant 0 : i32
    return %c0_i32, %c0_i32_0, %c0_i32_1 : i32, i32, i32
  }
  func.func @transform_3(%arg0: i32) -> (i32, i32) {
    %c0_i32 = arith.constant 0 : i32
    %c0_i32_0 = arith.constant 0 : i32
    %c0_i32_1 = arith.constant 0 : i32
    return %c0_i32, %c0_i32_0 : i32, i32
  }
  func.func @transform_4(%arg0: i32) -> (i32, i32, i32, i32) {
    %c0_i32 = arith.constant 0 : i32
    %c0_i32_0 = arith.constant 0 : i32
    %c0_i32_1 = arith.constant 0 : i32
    %c0_i32_2 = arith.constant 0 : i32
    return %arg0, %c0_i32, %c0_i32_0, %c0_i32_1 : i32, i32, i32, i32
  }
}

</mosaic_0001>

<llo_original>
// kernel: residual_block_nchw.1
$region0: #{residual_block_nchw.1}
  #allocation0 [shape = 'u32[]', space=smem, size = 0x4, offset = 0x4, fixed_abs, tag = 'smem constant byte address 0x4 - core index']
  #allocation1 [shape = 'u32[144,128]{1,0:T(1,128)}', space=vmem, size = 0x12000, scoped, tag = 'internal scratch']
  #allocation2 [shape = 'bf16[2,8,10,128]{3,2,1,0:T(8,128)(2,1)}', space=vmem, size = 0x10000, scoped, tag = 'scratch operand']
  %s0 = inlined_call_operand.vmem [shape: f32[2,8,8,32], index: 0, kind: input, shape index: {}]
  %s1 = inlined_call_operand.vmem [shape: bf16[3,384,128], index: 1, kind: input, shape index: {}]
  %s2 = inlined_call_operand.vmem [shape: bf16[3,384,128], index: 2, kind: input, shape index: {}]
  %s3 = inlined_call_operand.vmem [shape: f32[1,128], index: 3, kind: input, shape index: {}]
  %s4 = inlined_call_operand.hbm [shape: f32[2,8,8,32], index: 4, kind: output, shape index: {}]
  %s5 = sld [smem:[#allocation0]]
  $region26: #{residual_block_nchw.1} parent=0
    _
  %s7 = ssub.s32 1, %s5
  %s8 = scalar_select 0, %s7, %s5
  $region1: #{residual_block_nchw.1} parent=0
    #allocation3 [shape = 'u8[65536]{0}', space=vmem, size = 0x10000, scoped, tag = 'output window, operand 0, single buffered']
    #allocation4 [shape = 's32[1]{0}', space=sflag, size = 0x4, scoped, tag = 'scoped memory for residual_block_nchw.1']
    %9 = vsyncpa [#allocation4], 0
    // Predicated region
    $region2: #{residual_block_nchw.1} parent=1 // pred_check
      _
    $region3: #{residual_block_nchw.1} parent=1 // pred_check_branch
      %11 = sbr.rel (0) target = $region5
    $region4: #{residual_block_nchw.1} parent=1 // pred_region
      _
    $region5: #{residual_block_nchw.1} parent=1 // pred_fallthru
      _
    // Predicated region
    $region6: #{residual_block_nchw.1} parent=1 // pred_check
      _
    $region7: #{residual_block_nchw.1} parent=1 // pred_check_branch
      %13 = sbr.rel (0) target = $region9
    $region8: #{residual_block_nchw.1} parent=1 // pred_region
      _
    $region9: #{residual_block_nchw.1} parent=1 // pred_fallthru
      _
    // Predicated region
    $region10: #{residual_block_nchw.1} parent=1 // pred_check
      _
    $region11: #{residual_block_nchw.1} parent=1 // pred_check_branch
      %15 = sbr.rel (0) target = $region13
    $region12: #{residual_block_nchw.1} parent=1 // pred_region
      _
    $region13: #{residual_block_nchw.1} parent=1 // pred_fallthru
      _
    // Predicated region
    $region14: #{residual_block_nchw.1} parent=1 // pred_check
      _
    $region15: #{residual_block_nchw.1} parent=1 // pred_check_branch
      %17 = sbr.rel (0) target = $region17
    $region16: #{residual_block_nchw.1} parent=1 // pred_region
      _
    $region17: #{residual_block_nchw.1} parent=1 // pred_fallthru
      _
    %19 = vst [vmem:[#allocation2] sm:$0xf] 0
    %20 = vst [vmem:[#allocation2 + $0x4] sm:$0x1] 0
    %21 = vst [vmem:[#allocation2 + $0x8] sm:$0xf] 0
    %22 = vst [vmem:[#allocation2 + $0xc] sm:$0x1] 0
    %23 = vst [vmem:[#allocation2 + $0x10] sm:$0xf] 0
    %24 = vst [vmem:[#allocation2 + $0x14] sm:$0x1] 0
    %25 = vst [vmem:[#allocation2 + $0x18] sm:$0xf] 0
    %26 = vst [vmem:[#allocation2 + $0x1c] sm:$0x1] 0
    %27 = vst [vmem:[#allocation2 + $0x20] sm:$0xf] 0
    %28 = vst [vmem:[#allocation2 + $0x24] sm:$0x1] 0
    %29 = vst [vmem:[#allocation2 + $0x28] sm:$0xf] 0
    %30 = vst [vmem:[#allocation2 + $0x2c] sm:$0x1] 0
    %31 = vst [vmem:[#allocation2 + $0x30] sm:$0xf] 0
    %32 = vst [vmem:[#allocation2 + $0x34] sm:$0x1] 0
    %33 = vst [vmem:[#allocation2 + $0x38] sm:$0xf] 0
    %34 = vst [vmem:[#allocation2 + $0x3c] sm:$0x1] 0
    %35 = vst [vmem:[#allocation2 + $0x40] sm:$0xf] 0
    %36 = vst [vmem:[#allocation2 + $0x44] sm:$0x1] 0
    %37 = vst [vmem:[#allocation2 + $0x48] sm:$0xf] 0
    %38 = vst [vmem:[#allocation2 + $0x4c] sm:$0x1] 0
    %39 = vst [vmem:[#allocation2 + $0x50] sm:$0xf] 0
    %40 = vst [vmem:[#allocation2 + $0x54] sm:$0x1] 0
    %41 = vst [vmem:[#allocation2 + $0x58] sm:$0xf] 0
    %42 = vst [vmem:[#allocation2 + $0x5c] sm:$0x1] 0
    %43 = vst [vmem:[#allocation2 + $0x60] sm:$0xf] 0
    %44 = vst [vmem:[#allocation2 + $0x64] sm:$0x1] 0
    %45 = vst [vmem:[#allocation2 + $0x68] sm:$0xf] 0
    %46 = vst [vmem:[#allocation2 + $0x6c] sm:$0x1] 0
    %47 = vst [vmem:[#allocation2 + $0x70] sm:$0xf] 0
    %48 = vst [vmem:[#allocation2 + $0x74] sm:$0x1] 0
    %49 = vst [vmem:[#allocation2 + $0x78] sm:$0xf] 0
    %50 = vst [vmem:[#allocation2 + $0x7c] sm:$0x1] 0
    %v51 = vld [vmem:[%s0] sm:$0xff]
    %v52 = vld [vmem:[%s0 + $0x8] sm:$0xff]
    %v53 = vld [vmem:[%s0 + $0x10] sm:$0xff]
    %v54 = vld [vmem:[%s0 + $0x18] sm:$0xff]
    %v55 = vld [vmem:[%s0 + $0x20] sm:$0xff]
    %v56 = vld [vmem:[%s0 + $0x28] sm:$0xff]
    %v57 = vld [vmem:[%s0 + $0x30] sm:$0xff]
    %v58 = vld [vmem:[%s0 + $0x38] sm:$0xff]
    %v59 = vld [vmem:[%s0 + $0x40] sm:$0xff]
    %v60 = vld [vmem:[%s0 + $0x48] sm:$0xff]
    %v61 = vld [vmem:[%s0 + $0x50] sm:$0xff]
    %v62 = vld [vmem:[%s0 + $0x58] sm:$0xff]
    %v63 = vld [vmem:[%s0 + $0x60] sm:$0xff]
    %v64 = vld [vmem:[%s0 + $0x68] sm:$0xff]
    %v65 = vld [vmem:[%s0 + $0x70] sm:$0xff]
    %v66 = vld [vmem:[%s0 + $0x78] sm:$0xff]
    %v67 = vpack.c.bf16 %v51, %v51
    %v68 = vpack.c.bf16 %v52, %v52
    %v69 = vpack.c.bf16 %v53, %v53
    %v70 = vpack.c.bf16 %v54, %v54
    %v71 = vpack.c.bf16 %v55, %v55
    %v72 = vpack.c.bf16 %v56, %v56
    %v73 = vpack.c.bf16 %v57, %v57
    %v74 = vpack.c.bf16 %v58, %v58
    %v75 = vpack.c.bf16 %v59, %v59
    %v76 = vpack.c.bf16 %v60, %v60
    %v77 = vpack.c.bf16 %v61, %v61
    %v78 = vpack.c.bf16 %v62, %v62
    %v79 = vpack.c.bf16 %v63, %v63
    %v80 = vpack.c.bf16 %v64, %v64
    %v81 = vpack.c.bf16 %v65, %v65
    %v82 = vpack.c.bf16 %v66, %v66
    %v99 = vunpack.c.l.b16 %v67
    %v100 = vunpack.c.l.b16 %v68
    %v101 = vunpack.c.l.b16 %v69
    %v102 = vunpack.c.l.b16 %v70
    %v103 = vunpack.c.l.b16 %v71
    %v104 = vunpack.c.l.b16 %v72
    %v105 = vunpack.c.l.b16 %v73
    %v106 = vunpack.c.l.b16 %v74
    %v107 = vunpack.c.l.b16 %v75
    %v108 = vunpack.c.l.b16 %v76
    %v109 = vunpack.c.l.b16 %v77
    %v110 = vunpack.c.l.b16 %v78
    %v111 = vunpack.c.l.b16 %v79
    %v112 = vunpack.c.l.b16 %v80
    %v113 = vunpack.c.l.b16 %v81
    %v114 = vunpack.c.l.b16 %v82
    %v115 = vpack.c.b16 %v99, %v99
    %v116 = vpack.c.b16 %v100, %v100
    %v117 = vpack.c.b16 %v101, %v101
    %v118 = vpack.c.b16 %v102, %v102
    %v119 = vpack.c.b16 %v103, %v103
    %v120 = vpack.c.b16 %v104, %v104
    %v121 = vpack.c.b16 %v105, %v105
    %v122 = vpack.c.b16 %v106, %v106
    %v123 = vpack.c.b16 %v107, %v107
    %v124 = vpack.c.b16 %v108, %v108
    %v125 = vpack.c.b16 %v109, %v109
    %v126 = vpack.c.b16 %v110, %v110
    %v127 = vpack.c.b16 %v111, %v111
    %v128 = vpack.c.b16 %v112, %v112
    %v129 = vpack.c.b16 %v113, %v113
    %v130 = vpack.c.b16 %v114, %v114
    %v132 = vshrl.u32 %v115, 16
    %v134 = vrot.slane %v132, 7
    %v135 = vshll.u32 %v115, 16
    %v137 = vor.u32 %v134, %v135
    %v138 = vrot.slane %v134, 4
    %v140 = vshrl.u32 %v116, 16
    %v142 = vrot.slane %v140, 7
    %v143 = vshll.u32 %v116, 16
    %v145 = vor.u32 %v142, %v143
    %v146 = vrot.slane %v142, 4
    %v148 = vshrl.u32 %v117, 16
    %v150 = vrot.slane %v148, 7
    %v151 = vshll.u32 %v117, 16
    %v153 = vor.u32 %v150, %v151
    %v154 = vrot.slane %v150, 4
    %v156 = vshrl.u32 %v118, 16
    %v158 = vrot.slane %v156, 7
    %v159 = vshll.u32 %v118, 16
    %v161 = vor.u32 %v158, %v159
    %v162 = vrot.slane %v158, 4
    %v164 = vshrl.u32 %v119, 16
    %v166 = vrot.slane %v164, 7
    %v167 = vshll.u32 %v119, 16
    %v169 = vor.u32 %v166, %v167
    %v170 = vrot.slane %v166, 4
    %v172 = vshrl.u32 %v120, 16
    %v174 = vrot.slane %v172, 7
    %v175 = vshll.u32 %v120, 16
    %v177 = vor.u32 %v174, %v175
    %v178 = vrot.slane %v174, 4
    %v180 = vshrl.u32 %v121, 16
    %v182 = vrot.slane %v180, 7
    %v183 = vshll.u32 %v121, 16
    %v185 = vor.u32 %v182, %v183
    %v186 = vrot.slane %v182, 4
    %v188 = vshrl.u32 %v122, 16
    %v190 = vrot.slane %v188, 7
    %v191 = vshll.u32 %v122, 16
    %v193 = vor.u32 %v190, %v191
    %v194 = vrot.slane %v190, 4
    %v196 = vshrl.u32 %v123, 16
    %v198 = vrot.slane %v196, 7
    %v199 = vshll.u32 %v123, 16
    %v201 = vor.u32 %v198, %v199
    %v202 = vrot.slane %v198, 4
    %v204 = vshrl.u32 %v124, 16
    %v206 = vrot.slane %v204, 7
    %v207 = vshll.u32 %v124, 16
    %v209 = vor.u32 %v206, %v207
    %v210 = vrot.slane %v206, 4
    %v212 = vshrl.u32 %v125, 16
    %v214 = vrot.slane %v212, 7
    %v215 = vshll.u32 %v125, 16
    %v217 = vor.u32 %v214, %v215
    %v218 = vrot.slane %v214, 4
    %v220 = vshrl.u32 %v126, 16
    %v222 = vrot.slane %v220, 7
    %v223 = vshll.u32 %v126, 16
    %v225 = vor.u32 %v222, %v223
    %v226 = vrot.slane %v222, 4
    %v228 = vshrl.u32 %v127, 16
    %v230 = vrot.slane %v228, 7
    %v231 = vshll.u32 %v127, 16
    %v233 = vor.u32 %v230, %v231
    %v234 = vrot.slane %v230, 4
    %v236 = vshrl.u32 %v128, 16
    %v238 = vrot.slane %v236, 7
    %v239 = vshll.u32 %v128, 16
    %v241 = vor.u32 %v238, %v239
    %v242 = vrot.slane %v238, 4
    %v244 = vshrl.u32 %v129, 16
    %v246 = vrot.slane %v244, 7
    %v247 = vshll.u32 %v129, 16
    %v249 = vor.u32 %v246, %v247
    %v250 = vrot.slane %v246, 4
    %v252 = vshrl.u32 %v130, 16
    %v254 = vrot.slane %v252, 7
    %v255 = vshll.u32 %v130, 16
    %v257 = vor.u32 %v254, %v255
    %v258 = vrot.slane %v254, 4
    %vm291 = vcmask 257024
    %vm292 = vsmask.f32 7938
    %vm293 = vmand %vm291, %vm292
    %v294 = vld [vmem:[#allocation2] sm:$0xf]
    %v295 = vsel %vm293, %v137, %v294
    %296 = vst [vmem:[#allocation2] sm:$0xf] %v295
    %vm297 = vcmask 253952
    %vm298 = vsmask.f32 256
    %vm299 = vmand %vm297, %vm298
    %v300 = vld [vmem:[#allocation2 + $0x4] sm:$0x1]
    %v301 = vsel %vm299, %v138, %v300
    %302 = vst [vmem:[#allocation2 + $0x4] sm:$0x1] %v301
    %v303 = vld [vmem:[#allocation2 + $0x8] sm:$0xf]
    %v304 = vsel %vm293, %v145, %v303
    %305 = vst [vmem:[#allocation2 + $0x8] sm:$0xf] %v304
    %v306 = vld [vmem:[#allocation2 + $0xc] sm:$0x1]
    %v307 = vsel %vm299, %v146, %v306
    %308 = vst [vmem:[#allocation2 + $0xc] sm:$0x1] %v307
    %v309 = vld [vmem:[#allocation2 + $0x10] sm:$0xf]
    %v310 = vsel %vm293, %v153, %v309
    %311 = vst [vmem:[#allocation2 + $0x10] sm:$0xf] %v310
    %v312 = vld [vmem:[#allocation2 + $0x14] sm:$0x1]
    %v313 = vsel %vm299, %v154, %v312
    %314 = vst [vmem:[#allocation2 + $0x14] sm:$0x1] %v313
    %v315 = vld [vmem:[#allocation2 + $0x18] sm:$0xf]
    %v316 = vsel %vm293, %v161, %v315
    %317 = vst [vmem:[#allocation2 + $0x18] sm:$0xf] %v316
    %v318 = vld [vmem:[#allocation2 + $0x1c] sm:$0x1]
    %v319 = vsel %vm299, %v162, %v318
    %320 = vst [vmem:[#allocation2 + $0x1c] sm:$0x1] %v319
    %v321 = vld [vmem:[#allocation2 + $0x20] sm:$0xf]
    %v322 = vsel %vm293, %v169, %v321
    %323 = vst [vmem:[#allocation2 + $0x20] sm:$0xf] %v322
    %v324 = vld [vmem:[#allocation2 + $0x24] sm:$0x1]
    %v325 = vsel %vm299, %v170, %v324
    %326 = vst [vmem:[#allocation2 + $0x24] sm:$0x1] %v325
    %v327 = vld [vmem:[#allocation2 + $0x28] sm:$0xf]
    %v328 = vsel %vm293, %v177, %v327
    %329 = vst [vmem:[#allocation2 + $0x28] sm:$0xf] %v328
    %v330 = vld [vmem:[#allocation2 + $0x2c] sm:$0x1]
    %v331 = vsel %vm299, %v178, %v330
    %332 = vst [vmem:[#allocation2 + $0x2c] sm:$0x1] %v331
    %v333 = vld [vmem:[#allocation2 + $0x30] sm:$0xf]
    %v334 = vsel %vm293, %v185, %v333
    %335 = vst [vmem:[#allocation2 + $0x30] sm:$0xf] %v334
    %v336 = vld [vmem:[#allocation2 + $0x34] sm:$0x1]
    %v337 = vsel %vm299, %v186, %v336
    %338 = vst [vmem:[#allocation2 + $0x34] sm:$0x1] %v337
    %v339 = vld [vmem:[#allocation2 + $0x38] sm:$0xf]
    %v340 = vsel %vm293, %v193, %v339
    %341 = vst [vmem:[#allocation2 + $0x38] sm:$0xf] %v340
    %v342 = vld [vmem:[#allocation2 + $0x3c] sm:$0x1]
    %v343 = vsel %vm299, %v194, %v342
    %344 = vst [vmem:[#allocation2 + $0x3c] sm:$0x1] %v343
    %v345 = vld [vmem:[#allocation2 + $0x40] sm:$0xf]
    %v346 = vsel %vm293, %v201, %v345
    %347 = vst [vmem:[#allocation2 + $0x40] sm:$0xf] %v346
    %v348 = vld [vmem:[#allocation2 + $0x44] sm:$0x1]
    %v349 = vsel %vm299, %v202, %v348
    %350 = vst [vmem:[#allocation2 + $0x44] sm:$0x1] %v349
    %v351 = vld [vmem:[#allocation2 + $0x48] sm:$0xf]
    %v352 = vsel %vm293, %v209, %v351
    %353 = vst [vmem:[#allocation2 + $0x48] sm:$0xf] %v352
    %v354 = vld [vmem:[#allocation2 + $0x4c] sm:$0x1]
    %v355 = vsel %vm299, %v210, %v354
    %356 = vst [vmem:[#allocation2 + $0x4c] sm:$0x1] %v355
    %v357 = vld [vmem:[#allocation2 + $0x50] sm:$0xf]
    %v358 = vsel %vm293, %v217, %v357
    %359 = vst [vmem:[#allocation2 + $0x50] sm:$0xf] %v358
    %v360 = vld [vmem:[#allocation2 + $0x54] sm:$0x1]
    %v361 = vsel %vm299, %v218, %v360
    %362 = vst [vmem:[#allocation2 + $0x54] sm:$0x1] %v361
    %v363 = vld [vmem:[#allocation2 + $0x58] sm:$0xf]
    %v364 = vsel %vm293, %v225, %v363
    %365 = vst [vmem:[#allocation2 + $0x58] sm:$0xf] %v364
    %v366 = vld [vmem:[#allocation2 + $0x5c] sm:$0x1]
    %v367 = vsel %vm299, %v226, %v366
    %368 = vst [vmem:[#allocation2 + $0x5c] sm:$0x1] %v367
    %v369 = vld [vmem:[#allocation2 + $0x60] sm:$0xf]
    %v370 = vsel %vm293, %v233, %v369
    %371 = vst [vmem:[#allocation2 + $0x60] sm:$0xf] %v370
    %v372 = vld [vmem:[#allocation2 + $0x64] sm:$0x1]
    %v373 = vsel %vm299, %v234, %v372
    %374 = vst [vmem:[#allocation2 + $0x64] sm:$0x1] %v373
    %v375 = vld [vmem:[#allocation2 + $0x68] sm:$0xf]
    %v376 = vsel %vm293, %v241, %v375
    %377 = vst [vmem:[#allocation2 + $0x68] sm:$0xf] %v376
    %v378 = vld [vmem:[#allocation2 + $0x6c] sm:$0x1]
    %v379 = vsel %vm299, %v242, %v378
    %380 = vst [vmem:[#allocation2 + $0x6c] sm:$0x1] %v379
    %v381 = vld [vmem:[#allocation2 + $0x70] sm:$0xf]
    %v382 = vsel %vm293, %v249, %v381
    %383 = vst [vmem:[#allocation2 + $0x70] sm:$0xf] %v382
    %v384 = vld [vmem:[#allocation2 + $0x74] sm:$0x1]
    %v385 = vsel %vm299, %v250, %v384
    %386 = vst [vmem:[#allocation2 + $0x74] sm:$0x1] %v385
    %v387 = vld [vmem:[#allocation2 + $0x78] sm:$0xf]
    %v388 = vsel %vm293, %v257, %v387
    %389 = vst [vmem:[#allocation2 + $0x78] sm:$0xf] %v388
    %v390 = vld [vmem:[#allocation2 + $0x7c] sm:$0x1]
    %v391 = vsel %vm299, %v258, %v390
    %392 = vst [vmem:[#allocation2 + $0x7c] sm:$0x1] %v391
    %v393 = vld [vmem:[#allocation2] sm:$0x2]
    %v394 = vld [vmem:[#allocation2 + $0x8] sm:$0x2]
    %v395 = vld [vmem:[#allocation2 + $0x10] sm:$0x2]
    %v396 = vld [vmem:[#allocation2 + $0x18] sm:$0x2]
    %v397 = vld [vmem:[#allocation2 + $0x20] sm:$0x2]
    %v398 = vld [vmem:[#allocation2 + $0x28] sm:$0x2]
    %v399 = vld [vmem:[#allocation2 + $0x30] sm:$0x2]
    %v400 = vld [vmem:[#allocation2 + $0x38] sm:$0x2]
    %v401 = vld [vmem:[#allocation2 + $0x40] sm:$0x2]
    %v402 = vld [vmem:[#allocation2 + $0x48] sm:$0x2]
    %v403 = vld [vmem:[#allocation2 + $0x50] sm:$0x2]
    %v404 = vld [vmem:[#allocation2 + $0x58] sm:$0x2]
    %v405 = vld [vmem:[#allocation2 + $0x60] sm:$0x2]
    %v406 = vld [vmem:[#allocation2 + $0x68] sm:$0x2]
    %v407 = vld [vmem:[#allocation2 + $0x70] sm:$0x2]
    %v408 = vld [vmem:[#allocation2 + $0x78] sm:$0x2]
    %v425 = vrot.slane %v393, 5
    %v426 = vrot.slane %v425, 4
    %v427 = vrot.slane %v394, 5
    %v428 = vrot.slane %v427, 4
    %v429 = vrot.slane %v395, 5
    %v430 = vrot.slane %v429, 4
    %v431 = vrot.slane %v396, 5
    %v432 = vrot.slane %v431, 4
    %v433 = vrot.slane %v397, 5
    %v434 = vrot.slane %v433, 4
    %v435 = vrot.slane %v398, 5
    %v436 = vrot.slane %v435, 4
    %v437 = vrot.slane %v399, 5
    %v438 = vrot.slane %v437, 4
    %v439 = vrot.slane %v400, 5
    %v440 = vrot.slane %v439, 4
    %v441 = vrot.slane %v401, 5
    %v442 = vrot.slane %v441, 4
    %v443 = vrot.slane %v402, 5
    %v444 = vrot.slane %v443, 4
    %v445 = vrot.slane %v403, 5
    %v446 = vrot.slane %v445, 4
    %v447 = vrot.slane %v404, 5
    %v448 = vrot.slane %v447, 4
    %v449 = vrot.slane %v405, 5
    %v450 = vrot.slane %v449, 4
    %v451 = vrot.slane %v406, 5
    %v452 = vrot.slane %v451, 4
    %v453 = vrot.slane %v407, 5
    %v454 = vrot.slane %v453, 4
    %v455 = vrot.slane %v408, 5
    %v456 = vrot.slane %v455, 4
    %vm473 = vcmask 1040384
    %vm474 = vmand %vm473, %vm298
    %v475 = vld [vmem:[#allocation2] sm:$0x1]
    %v476 = vsel %vm474, %v426, %v475
    %477 = vst [vmem:[#allocation2] sm:$0x1] %v476
    %v478 = vld [vmem:[#allocation2 + $0x8] sm:$0x1]
    %v479 = vsel %vm474, %v428, %v478
    %480 = vst [vmem:[#allocation2 + $0x8] sm:$0x1] %v479
    %v481 = vld [vmem:[#allocation2 + $0x10] sm:$0x1]
    %v482 = vsel %vm474, %v430, %v481
    %483 = vst [vmem:[#allocation2 + $0x10] sm:$0x1] %v482
    %v484 = vld [vmem:[#allocation2 + $0x18] sm:$0x1]
    %v485 = vsel %vm474, %v432, %v484
    %486 = vst [vmem:[#allocation2 + $0x18] sm:$0x1] %v485
    %v487 = vld [vmem:[#allocation2 + $0x20] sm:$0x1]
    %v488 = vsel %vm474, %v434, %v487
    %489 = vst [vmem:[#allocation2 + $0x20] sm:$0x1] %v488
    %v490 = vld [vmem:[#allocation2 + $0x28] sm:$0x1]
    %v491 = vsel %vm474, %v436, %v490
    %492 = vst [vmem:[#allocation2 + $0x28] sm:$0x1] %v491
    %v493 = vld [vmem:[#allocation2 + $0x30] sm:$0x1]
    %v494 = vsel %vm474, %v438, %v493
    %495 = vst [vmem:[#allocation2 + $0x30] sm:$0x1] %v494
    %v496 = vld [vmem:[#allocation2 + $0x38] sm:$0x1]
    %v497 = vsel %vm474, %v440, %v496
    %498 = vst [vmem:[#allocation2 + $0x38] sm:$0x1] %v497
    %v499 = vld [vmem:[#allocation2 + $0x40] sm:$0x1]
    %v500 = vsel %vm474, %v442, %v499
    %501 = vst [vmem:[#allocation2 + $0x40] sm:$0x1] %v500
    %v502 = vld [vmem:[#allocation2 + $0x48] sm:$0x1]
    %v503 = vsel %vm474, %v444, %v502
    %504 = vst [vmem:[#allocation2 + $0x48] sm:$0x1] %v503
    %v505 = vld [vmem:[#allocation2 + $0x50] sm:$0x1]
    %v506 = vsel %vm474, %v446, %v505
    %507 = vst [vmem:[#allocation2 + $0x50] sm:$0x1] %v506
    %v508 = vld [vmem:[#allocation2 + $0x58] sm:$0x1]
    %v509 = vsel %vm474, %v448, %v508
    %510 = vst [vmem:[#allocation2 + $0x58] sm:$0x1] %v509
    %v511 = vld [vmem:[#allocation2 + $0x60] sm:$0x1]
    %v512 = vsel %vm474, %v450, %v511
    %513 = vst [vmem:[#allocation2 + $0x60] sm:$0x1] %v512
    %v514 = vld [vmem:[#allocation2 + $0x68] sm:$0x1]
    %v515 = vsel %vm474, %v452, %v514
    %516 = vst [vmem:[#allocation2 + $0x68] sm:$0x1] %v515
    %v517 = vld [vmem:[#allocation2 + $0x70] sm:$0x1]
    %v518 = vsel %vm474, %v454, %v517
    %519 = vst [vmem:[#allocation2 + $0x70] sm:$0x1] %v518
    %v520 = vld [vmem:[#allocation2 + $0x78] sm:$0x1]
    %v521 = vsel %vm474, %v456, %v520
    %522 = vst [vmem:[#allocation2 + $0x78] sm:$0x1] %v521
    %v523 = vld [vmem:[#allocation2] sm:$0x8]
    %v524 = vld [vmem:[#allocation2 + $0x8] sm:$0x8]
    %v525 = vld [vmem:[#allocation2 + $0x10] sm:$0x8]
    %v526 = vld [vmem:[#allocation2 + $0x18] sm:$0x8]
    %v527 = vld [vmem:[#allocation2 + $0x20] sm:$0x8]
    %v528 = vld [vmem:[#allocation2 + $0x28] sm:$0x8]
    %v529 = vld [vmem:[#allocation2 + $0x30] sm:$0x8]
    %v530 = vld [vmem:[#allocation2 + $0x38] sm:$0x8]
    %v531 = vld [vmem:[#allocation2 + $0x40] sm:$0x8]
    %v532 = vld [vmem:[#allocation2 + $0x48] sm:$0x8]
    %v533 = vld [vmem:[#allocation2 + $0x50] sm:$0x8]
    %v534 = vld [vmem:[#allocation2 + $0x58] sm:$0x8]
    %v535 = vld [vmem:[#allocation2 + $0x60] sm:$0x8]
    %v536 = vld [vmem:[#allocation2 + $0x68] sm:$0x8]
    %v537 = vld [vmem:[#allocation2 + $0x70] sm:$0x8]
    %v538 = vld [vmem:[#allocation2 + $0x78] sm:$0x8]
    %v555 = vrot.slane %v523, 7
    %v556 = vrot.slane %v555, 4
    %v557 = vrot.slane %v524, 7
    %v558 = vrot.slane %v557, 4
    %v559 = vrot.slane %v525, 7
    %v560 = vrot.slane %v559, 4
    %v561 = vrot.slane %v526, 7
    %v562 = vrot.slane %v561, 4
    %v563 = vrot.slane %v527, 7
    %v564 = vrot.slane %v563, 4
    %v565 = vrot.slane %v528, 7
    %v566 = vrot.slane %v565, 4
    %v567 = vrot.slane %v529, 7
    %v568 = vrot.slane %v567, 4
    %v569 = vrot.slane %v530, 7
    %v570 = vrot.slane %v569, 4
    %v571 = vrot.slane %v531, 7
    %v572 = vrot.slane %v571, 4
    %v573 = vrot.slane %v532, 7
    %v574 = vrot.slane %v573, 4
    %v575 = vrot.slane %v533, 7
    %v576 = vrot.slane %v575, 4
    %v577 = vrot.slane %v534, 7
    %v578 = vrot.slane %v577, 4
    %v579 = vrot.slane %v535, 7
    %v580 = vrot.slane %v579, 4
    %v581 = vrot.slane %v536, 7
    %v582 = vrot.slane %v581, 4
    %v583 = vrot.slane %v537, 7
    %v584 = vrot.slane %v583, 4
    %v585 = vrot.slane %v538, 7
    %v586 = vrot.slane %v585, 4
    %vm603 = vmand %vm473, %vm292
    %v604 = vld [vmem:[#allocation2 + $0x4] sm:$0x1]
    %v605 = vsel %vm603, %v556, %v604
    %606 = vst [vmem:[#allocation2 + $0x4] sm:$0x1] %v605
    %v607 = vld [vmem:[#allocation2 + $0xc] sm:$0x1]
    %v608 = vsel %vm603, %v558, %v607
    %609 = vst [vmem:[#allocation2 + $0xc] sm:$0x1] %v608
    %v610 = vld [vmem:[#allocation2 + $0x14] sm:$0x1]
    %v611 = vsel %vm603, %v560, %v610
    %612 = vst [vmem:[#allocation2 + $0x14] sm:$0x1] %v611
    %v613 = vld [vmem:[#allocation2 + $0x1c] sm:$0x1]
    %v614 = vsel %vm603, %v562, %v613
    %615 = vst [vmem:[#allocation2 + $0x1c] sm:$0x1] %v614
    %v616 = vld [vmem:[#allocation2 + $0x24] sm:$0x1]
    %v617 = vsel %vm603, %v564, %v616
    %618 = vst [vmem:[#allocation2 + $0x24] sm:$0x1] %v617
    %v619 = vld [vmem:[#allocation2 + $0x2c] sm:$0x1]
    %v620 = vsel %vm603, %v566, %v619
    %621 = vst [vmem:[#allocation2 + $0x2c] sm:$0x1] %v620
    %v622 = vld [vmem:[#allocation2 + $0x34] sm:$0x1]
    %v623 = vsel %vm603, %v568, %v622
    %624 = vst [vmem:[#allocation2 + $0x34] sm:$0x1] %v623
    %v625 = vld [vmem:[#allocation2 + $0x3c] sm:$0x1]
    %v626 = vsel %vm603, %v570, %v625
    %627 = vst [vmem:[#allocation2 + $0x3c] sm:$0x1] %v626
    %v628 = vld [vmem:[#allocation2 + $0x44] sm:$0x1]
    %v629 = vsel %vm603, %v572, %v628
    %630 = vst [vmem:[#allocation2 + $0x44] sm:$0x1] %v629
    %v631 = vld [vmem:[#allocation2 + $0x4c] sm:$0x1]
    %v632 = vsel %vm603, %v574, %v631
    %633 = vst [vmem:[#allocation2 + $0x4c] sm:$0x1] %v632
    %v634 = vld [vmem:[#allocation2 + $0x54] sm:$0x1]
    %v635 = vsel %vm603, %v576, %v634
    %636 = vst [vmem:[#allocation2 + $0x54] sm:$0x1] %v635
    %v637 = vld [vmem:[#allocation2 + $0x5c] sm:$0x1]
    %v638 = vsel %vm603, %v578, %v637
    %639 = vst [vmem:[#allocation2 + $0x5c] sm:$0x1] %v638
    %v640 = vld [vmem:[#allocation2 + $0x64] sm:$0x1]
    %v641 = vsel %vm603, %v580, %v640
    %642 = vst [vmem:[#allocation2 + $0x64] sm:$0x1] %v641
    %v643 = vld [vmem:[#allocation2 + $0x6c] sm:$0x1]
    %v644 = vsel %vm603, %v582, %v643
    %645 = vst [vmem:[#allocation2 + $0x6c] sm:$0x1] %v644
    %v646 = vld [vmem:[#allocation2 + $0x74] sm:$0x1]
    %v647 = vsel %vm603, %v584, %v646
    %648 = vst [vmem:[#allocation2 + $0x74] sm:$0x1] %v647
    %v649 = vld [vmem:[#allocation2 + $0x7c] sm:$0x1]
    %v650 = vsel %vm603, %v586, %v649
    %651 = vst [vmem:[#allocation2 + $0x7c] sm:$0x1] %v650
    %v652 = vld [vmem:[#allocation2] sm:$0xf]
    %v653 = vld [vmem:[#allocation2 + $0x8] sm:$0xf]
    %v654 = vld [vmem:[#allocation2 + $0x10] sm:$0xf]
    %v655 = vld [vmem:[#allocation2 + $0x18] sm:$0xf]
    %v656 = vld [vmem:[#allocation2 + $0x20] sm:$0xf]
    %v657 = vld [vmem:[#allocation2 + $0x28] sm:$0xf]
    %v658 = vld [vmem:[#allocation2 + $0x30] sm:$0xf]
    %v659 = vld [vmem:[#allocation2 + $0x38] sm:$0xf]
    %v660 = vld [vmem:[#allocation2 + $0x40] sm:$0xf]
    %v661 = vld [vmem:[#allocation2 + $0x48] sm:$0xf]
    %v662 = vld [vmem:[#allocation2 + $0x50] sm:$0xf]
    %v663 = vld [vmem:[#allocation2 + $0x58] sm:$0xf]
    %v664 = vld [vmem:[#allocation2 + $0x60] sm:$0xf]
    %v665 = vld [vmem:[#allocation2 + $0x68] sm:$0xf]
    %v666 = vld [vmem:[#allocation2 + $0x70] sm:$0xf]
    %v667 = vld [vmem:[#allocation2 + $0x78] sm:$0xf]
    %v668 = vld [vmem:[#allocation2 + $0x4] sm:$0x1]
    %v669 = vld [vmem:[#allocation2 + $0xc] sm:$0x1]
    %v670 = vld [vmem:[#allocation2 + $0x14] sm:$0x1]
    %v671 = vld [vmem:[#allocation2 + $0x1c] sm:$0x1]
    %v672 = vld [vmem:[#allocation2 + $0x24] sm:$0x1]
    %v673 = vld [vmem:[#allocation2 + $0x2c] sm:$0x1]
    %v674 = vld [vmem:[#allocation2 + $0x34] sm:$0x1]
    %v675 = vld [vmem:[#allocation2 + $0x3c] sm:$0x1]
    %v676 = vld [vmem:[#allocation2 + $0x44] sm:$0x1]
    %v677 = vld [vmem:[#allocation2 + $0x4c] sm:$0x1]
    %v678 = vld [vmem:[#allocation2 + $0x54] sm:$0x1]
    %v679 = vld [vmem:[#allocation2 + $0x5c] sm:$0x1]
    %v680 = vld [vmem:[#allocation2 + $0x64] sm:$0x1]
    %v681 = vld [vmem:[#allocation2 + $0x6c] sm:$0x1]
    %v682 = vld [vmem:[#allocation2 + $0x74] sm:$0x1]
    %v683 = vld [vmem:[#allocation2 + $0x7c] sm:$0x1]
    %v684 = vld [vmem:[#allocation2] sm:$0xe]
    %v685 = vld [vmem:[#allocation2 + $0x8] sm:$0xe]
    %v686 = vld [vmem:[#allocation2 + $0x10] sm:$0xe]
    %v687 = vld [vmem:[#allocation2 + $0x18] sm:$0xe]
    %v688 = vld [vmem:[#allocation2 + $0x20] sm:$0xe]
    %v689 = vld [vmem:[#allocation2 + $0x28] sm:$0xe]
    %v690 = vld [vmem:[#allocation2 + $0x30] sm:$0xe]
    %v691 = vld [vmem:[#allocation2 + $0x38] sm:$0xe]
    %v692 = vld [vmem:[#allocation2 + $0x40] sm:$0xe]
    %v693 = vld [vmem:[#allocation2 + $0x48] sm:$0xe]
    %v694 = vld [vmem:[#allocation2 + $0x50] sm:$0xe]
    %v695 = vld [vmem:[#allocation2 + $0x58] sm:$0xe]
    %v696 = vld [vmem:[#allocation2 + $0x60] sm:$0xe]
    %v697 = vld [vmem:[#allocation2 + $0x68] sm:$0xe]
    %v698 = vld [vmem:[#allocation2 + $0x70] sm:$0xe]
    %v699 = vld [vmem:[#allocation2 + $0x78] sm:$0xe]
    %v732 = vunpack.c.l.b16 %v652
    %v733 = vunpack.c.l.b16 %v668
    %v734 = vunpack.c.l.b16 %v653
    %v735 = vunpack.c.l.b16 %v669
    %v736 = vunpack.c.l.b16 %v654
    %v737 = vunpack.c.l.b16 %v670
    %v738 = vunpack.c.l.b16 %v655
    %v739 = vunpack.c.l.b16 %v671
    %v740 = vunpack.c.l.b16 %v656
    %v741 = vunpack.c.l.b16 %v672
    %v742 = vunpack.c.l.b16 %v657
    %v743 = vunpack.c.l.b16 %v673
    %v744 = vunpack.c.l.b16 %v658
    %v745 = vunpack.c.l.b16 %v674
    %v746 = vunpack.c.l.b16 %v659
    %v747 = vunpack.c.l.b16 %v675
    %v748 = vunpack.c.l.b16 %v660
    %v749 = vunpack.c.l.b16 %v676
    %v750 = vunpack.c.l.b16 %v661
    %v751 = vunpack.c.l.b16 %v677
    %v752 = vunpack.c.l.b16 %v662
    %v753 = vunpack.c.l.b16 %v678
    %v754 = vunpack.c.l.b16 %v663
    %v755 = vunpack.c.l.b16 %v679
    %v756 = vunpack.c.l.b16 %v664
    %v757 = vunpack.c.l.b16 %v680
    %v758 = vunpack.c.l.b16 %v665
    %v759 = vunpack.c.l.b16 %v681
    %v760 = vunpack.c.l.b16 %v666
    %v761 = vunpack.c.l.b16 %v682
    %v762 = vunpack.c.l.b16 %v667
    %v763 = vunpack.c.l.b16 %v683
    %v764 = vpack.c.b16 %v733, %v732
    %v765 = vpack.c.b16 %v735, %v734
    %v766 = vpack.c.b16 %v737, %v736
    %v767 = vpack.c.b16 %v739, %v738
    %v768 = vpack.c.b16 %v741, %v740
    %v769 = vpack.c.b16 %v743, %v742
    %v770 = vpack.c.b16 %v745, %v744
    %v771 = vpack.c.b16 %v747, %v746
    %v772 = vpack.c.b16 %v749, %v748
    %v773 = vpack.c.b16 %v751, %v750
    %v774 = vpack.c.b16 %v753, %v752
    %v775 = vpack.c.b16 %v755, %v754
    %v776 = vpack.c.b16 %v757, %v756
    %v777 = vpack.c.b16 %v759, %v758
    %v778 = vpack.c.b16 %v761, %v760
    %v779 = vpack.c.b16 %v763, %v762
    %v781 = vshrl.u32 %v764, 16
    %v783 = vshll.u32 %v764, 16
    %v785 = vrot.slane %v783, 1
    %v786 = vor.u32 %v781, %v785
    %v788 = vshrl.u32 %v765, 16
    %v790 = vshll.u32 %v765, 16
    %v792 = vrot.slane %v790, 1
    %v793 = vor.u32 %v788, %v792
    %v795 = vshrl.u32 %v766, 16
    %v797 = vshll.u32 %v766, 16
    %v799 = vrot.slane %v797, 1
    %v800 = vor.u32 %v795, %v799
    %v802 = vshrl.u32 %v767, 16
    %v804 = vshll.u32 %v767, 16
    %v806 = vrot.slane %v804, 1
    %v807 = vor.u32 %v802, %v806
    %v809 = vshrl.u32 %v768, 16
    %v811 = vshll.u32 %v768, 16
    %v813 = vrot.slane %v811, 1
    %v814 = vor.u32 %v809, %v813
    %v816 = vshrl.u32 %v769, 16
    %v818 = vshll.u32 %v769, 16
    %v820 = vrot.slane %v818, 1
    %v821 = vor.u32 %v816, %v820
    %v823 = vshrl.u32 %v770, 16
    %v825 = vshll.u32 %v770, 16
    %v827 = vrot.slane %v825, 1
    %v828 = vor.u32 %v823, %v827
    %v830 = vshrl.u32 %v771, 16
    %v832 = vshll.u32 %v771, 16
    %v834 = vrot.slane %v832, 1
    %v835 = vor.u32 %v830, %v834
    %v837 = vshrl.u32 %v772, 16
    %v839 = vshll.u32 %v772, 16
    %v841 = vrot.slane %v839, 1
    %v842 = vor.u32 %v837, %v841
    %v844 = vshrl.u32 %v773, 16
    %v846 = vshll.u32 %v773, 16
    %v848 = vrot.slane %v846, 1
    %v849 = vor.u32 %v844, %v848
    %v851 = vshrl.u32 %v774, 16
    %v853 = vshll.u32 %v774, 16
    %v855 = vrot.slane %v853, 1
    %v856 = vor.u32 %v851, %v855
    %v858 = vshrl.u32 %v775, 16
    %v860 = vshll.u32 %v775, 16
    %v862 = vrot.slane %v860, 1
    %v863 = vor.u32 %v858, %v862
    %v865 = vshrl.u32 %v776, 16
    %v867 = vshll.u32 %v776, 16
    %v869 = vrot.slane %v867, 1
    %v870 = vor.u32 %v865, %v869
    %v872 = vshrl.u32 %v777, 16
    %v874 = vshll.u32 %v777, 16
    %v876 = vrot.slane %v874, 1
    %v877 = vor.u32 %v872, %v876
    %v879 = vshrl.u32 %v778, 16
    %v881 = vshll.u32 %v778, 16
    %v883 = vrot.slane %v881, 1
    %v884 = vor.u32 %v879, %v883
    %v886 = vshrl.u32 %v779, 16
    %v888 = vshll.u32 %v779, 16
    %v890 = vrot.slane %v888, 1
    %v891 = vor.u32 %v886, %v890
    %v908 = vunpack.c.l.b16 %v684
    %v909 = vunpack.c.l.b16 %v685
    %v910 = vunpack.c.l.b16 %v686
    %v911 = vunpack.c.l.b16 %v687
    %v912 = vunpack.c.l.b16 %v688
    %v913 = vunpack.c.l.b16 %v689
    %v914 = vunpack.c.l.b16 %v690
    %v915 = vunpack.c.l.b16 %v691
    %v916 = vunpack.c.l.b16 %v692
    %v917 = vunpack.c.l.b16 %v693
    %v918 = vunpack.c.l.b16 %v694
    %v919 = vunpack.c.l.b16 %v695
    %v920 = vunpack.c.l.b16 %v696
    %v921 = vunpack.c.l.b16 %v697
    %v922 = vunpack.c.l.b16 %v698
    %v923 = vunpack.c.l.b16 %v699
    %v924 = vpack.c.b16 %v733, %v908
    %v925 = vpack.c.b16 %v735, %v909
    %v926 = vpack.c.b16 %v737, %v910
    %v927 = vpack.c.b16 %v739, %v911
    %v928 = vpack.c.b16 %v741, %v912
    %v929 = vpack.c.b16 %v743, %v913
    %v930 = vpack.c.b16 %v745, %v914
    %v931 = vpack.c.b16 %v747, %v915
    %v932 = vpack.c.b16 %v749, %v916
    %v933 = vpack.c.b16 %v751, %v917
    %v934 = vpack.c.b16 %v753, %v918
    %v935 = vpack.c.b16 %v755, %v919
    %v936 = vpack.c.b16 %v757, %v920
    %v937 = vpack.c.b16 %v759, %v921
    %v938 = vpack.c.b16 %v761, %v922
    %v939 = vpack.c.b16 %v763, %v923
    %v940 = vrot.slane %v924, 1
    %v941 = vrot.slane %v925, 1
    %v942 = vrot.slane %v926, 1
    %v943 = vrot.slane %v927, 1
    %v944 = vrot.slane %v928, 1
    %v945 = vrot.slane %v929, 1
    %v946 = vrot.slane %v930, 1
    %v947 = vrot.slane %v931, 1
    %v948 = vrot.slane %v932, 1
    %v949 = vrot.slane %v933, 1
    %v950 = vrot.slane %v934, 1
    %v951 = vrot.slane %v935, 1
    %v952 = vrot.slane %v936, 1
    %v953 = vrot.slane %v937, 1
    %v954 = vrot.slane %v938, 1
    %v955 = vrot.slane %v939, 1
    %v956 = vunpack.c.l.b16 %v793
    %v957 = vunpack.c.l.b16 %v941
    %v958 = vunpack.c.l.b16 %v786
    %v959 = vunpack.c.l.b16 %v940
    %v960 = vunpack.c.l.b16 %v800
    %v961 = vunpack.c.l.b16 %v942
    %v962 = vunpack.c.l.b16 %v807
    %v963 = vunpack.c.l.b16 %v943
    %v964 = vunpack.c.l.b16 %v814
    %v965 = vunpack.c.l.b16 %v944
    %v966 = vunpack.c.l.b16 %v821
    %v967 = vunpack.c.l.b16 %v945
    %v968 = vunpack.c.l.b16 %v828
    %v969 = vunpack.c.l.b16 %v946
    %v970 = vunpack.c.l.b16 %v849
    %v971 = vunpack.c.l.b16 %v949
    %v972 = vunpack.c.l.b16 %v842
    %v973 = vunpack.c.l.b16 %v948
    %v974 = vunpack.c.l.b16 %v856
    %v975 = vunpack.c.l.b16 %v950
    %v976 = vunpack.c.l.b16 %v863
    %v977 = vunpack.c.l.b16 %v951
    %v978 = vunpack.c.l.b16 %v870
    %v979 = vunpack.c.l.b16 %v952
    %v980 = vunpack.c.l.b16 %v877
    %v981 = vunpack.c.l.b16 %v953
    %v982 = vunpack.c.l.b16 %v884
    %v983 = vunpack.c.l.b16 %v954
    %v984 = vld [vmem:[%s1] sm:$0xf]
    %v985 = vld [vmem:[%s1 + $0x4] sm:$0xf]
    %v986 = vld [vmem:[%s1 + $0x8] sm:$0xf]
    %v987 = vld [vmem:[%s1 + $0xc] sm:$0xf]
    %v988 = vld [vmem:[%s1 + $0x10] sm:$0xf]
    %v989 = vld [vmem:[%s1 + $0x14] sm:$0xf]
    %v990 = vld [vmem:[%s1 + $0x18] sm:$0xf]
    %v991 = vld [vmem:[%s1 + $0x1c] sm:$0xf]
    %v992 = vld [vmem:[%s1 + $0x20] sm:$0xf]
    %v993 = vld [vmem:[%s1 + $0x24] sm:$0xf]
    %v994 = vld [vmem:[%s1 + $0x28] sm:$0xf]
    %v995 = vld [vmem:[%s1 + $0x2c] sm:$0xf]
    %v996 = vld [vmem:[%s1 + $0x30] sm:$0xf]
    %v997 = vld [vmem:[%s1 + $0x34] sm:$0xf]
    %v998 = vld [vmem:[%s1 + $0x38] sm:$0xf]
    %v999 = vld [vmem:[%s1 + $0x3c] sm:$0xf]
    %v1000 = vld [vmem:[%s1 + $0x40] sm:$0xf]
    %v1001 = vld [vmem:[%s1 + $0x44] sm:$0xf]
    %v1002 = vld [vmem:[%s1 + $0x48] sm:$0xf]
    %v1003 = vld [vmem:[%s1 + $0x4c] sm:$0xf]
    %v1004 = vld [vmem:[%s1 + $0x50] sm:$0xf]
    %v1005 = vld [vmem:[%s1 + $0x54] sm:$0xf]
    %v1006 = vld [vmem:[%s1 + $0x58] sm:$0xf]
    %v1007 = vld [vmem:[%s1 + $0x5c] sm:$0xf]
    %v1008 = vld [vmem:[%s1 + $0x60] sm:$0xf]
    %v1009 = vld [vmem:[%s1 + $0x64] sm:$0xf]
    %v1010 = vld [vmem:[%s1 + $0x68] sm:$0xf]
    %v1011 = vld [vmem:[%s1 + $0x6c] sm:$0xf]
    %v1012 = vld [vmem:[%s1 + $0x70] sm:$0xf]
    %v1013 = vld [vmem:[%s1 + $0x74] sm:$0xf]
    %v1014 = vld [vmem:[%s1 + $0x78] sm:$0xf]
    %v1015 = vld [vmem:[%s1 + $0x7c] sm:$0xf]
    %v1016 = vld [vmem:[%s1 + $0x80] sm:$0xf]
    %v1017 = vld [vmem:[%s1 + $0x84] sm:$0xf]
    %v1018 = vld [vmem:[%s1 + $0x88] sm:$0xf]
    %v1019 = vld [vmem:[%s1 + $0x8c] sm:$0xf]
    %v1020 = vld [vmem:[%s1 + $0x90] sm:$0xf]
    %v1021 = vld [vmem:[%s1 + $0x94] sm:$0xf]
    %v1022 = vld [vmem:[%s1 + $0x98] sm:$0xf]
    %v1023 = vld [vmem:[%s1 + $0x9c] sm:$0xf]
    %v1024 = vld [vmem:[%s1 + $0xa0] sm:$0xf]
    %v1025 = vld [vmem:[%s1 + $0xa4] sm:$0xf]
    %v1026 = vld [vmem:[%s1 + $0xa8] sm:$0xf]
    %v1027 = vld [vmem:[%s1 + $0xac] sm:$0xf]
    %v1028 = vld [vmem:[%s1 + $0xb0] sm:$0xf]
    %v1029 = vld [vmem:[%s1 + $0xb4] sm:$0xf]
    %v1030 = vld [vmem:[%s1 + $0xb8] sm:$0xf]
    %v1031 = vld [vmem:[%s1 + $0xbc] sm:$0xf]
    %v1032 = vunpack.c.l.b16 %v835
    %v1033 = vunpack.c.l.b16 %v947
    %v1034 = vunpack.c.l.b16 %v891
    %v1035 = vunpack.c.l.b16 %v955
    %s1036 = scalar_lea.vmem %s1, 192
    %v1037 = vld [vmem:[%s1036] sm:$0xf]
    %v1038 = vld [vmem:[%s1036 + $0x4] sm:$0xf]
    %v1039 = vld [vmem:[%s1036 + $0x8] sm:$0xf]
    %v1040 = vld [vmem:[%s1036 + $0xc] sm:$0xf]
    %v1041 = vld [vmem:[%s1036 + $0x10] sm:$0xf]
    %v1042 = vld [vmem:[%s1036 + $0x14] sm:$0xf]
    %v1043 = vld [vmem:[%s1036 + $0x18] sm:$0xf]
    %v1044 = vld [vmem:[%s1036 + $0x1c] sm:$0xf]
    %v1045 = vld [vmem:[%s1036 + $0x20] sm:$0xf]
    %v1046 = vld [vmem:[%s1036 + $0x24] sm:$0xf]
    %v1047 = vld [vmem:[%s1036 + $0x28] sm:$0xf]
    %v1048 = vld [vmem:[%s1036 + $0x2c] sm:$0xf]
    %v1049 = vld [vmem:[%s1036 + $0x30] sm:$0xf]
    %v1050 = vld [vmem:[%s1036 + $0x34] sm:$0xf]
    %v1051 = vld [vmem:[%s1036 + $0x38] sm:$0xf]
    %v1052 = vld [vmem:[%s1036 + $0x3c] sm:$0xf]
    %v1053 = vld [vmem:[%s1036 + $0x40] sm:$0xf]
    %v1054 = vld [vmem:[%s1036 + $0x44] sm:$0xf]
    %v1055 = vld [vmem:[%s1036 + $0x48] sm:$0xf]
    %v1056 = vld [vmem:[%s1036 + $0x4c] sm:$0xf]
    %v1057 = vld [vmem:[%s1036 + $0x50] sm:$0xf]
    %v1058 = vld [vmem:[%s1036 + $0x54] sm:$0xf]
    %v1059 = vld [vmem:[%s1036 + $0x58] sm:$0xf]
    %v1060 = vld [vmem:[%s1036 + $0x5c] sm:$0xf]
    %v1061 = vld [vmem:[%s1036 + $0x60] sm:$0xf]
    %v1062 = vld [vmem:[%s1036 + $0x64] sm:$0xf]
    %v1063 = vld [vmem:[%s1036 + $0x68] sm:$0xf]
    %v1064 = vld [vmem:[%s1036 + $0x6c] sm:$0xf]
    %v1065 = vld [vmem:[%s1036 + $0x70] sm:$0xf]
    %v1066 = vld [vmem:[%s1036 + $0x74] sm:$0xf]
    %v1067 = vld [vmem:[%s1036 + $0x78] sm:$0xf]
    %v1068 = vld [vmem:[%s1036 + $0x7c] sm:$0xf]
    %v1069 = vld [vmem:[%s1036 + $0x80] sm:$0xf]
    %v1070 = vld [vmem:[%s1036 + $0x84] sm:$0xf]
    %v1071 = vld [vmem:[%s1036 + $0x88] sm:$0xf]
    %v1072 = vld [vmem:[%s1036 + $0x8c] sm:$0xf]
    %v1073 = vld [vmem:[%s1036 + $0x90] sm:$0xf]
    %v1074 = vld [vmem:[%s1036 + $0x94] sm:$0xf]
    %v1075 = vld [vmem:[%s1036 + $0x98] sm:$0xf]
    %v1076 = vld [vmem:[%s1036 + $0x9c] sm:$0xf]
    %v1077 = vld [vmem:[%s1036 + $0xa0] sm:$0xf]
    %v1078 = vld [vmem:[%s1036 + $0xa4] sm:$0xf]
    %v1079 = vld [vmem:[%s1036 + $0xa8] sm:$0xf]
    %v1080 = vld [vmem:[%s1036 + $0xac] sm:$0xf]
    %v1081 = vld [vmem:[%s1036 + $0xb0] sm:$0xf]
    %v1082 = vld [vmem:[%s1036 + $0xb4] sm:$0xf]
    %v1083 = vld [vmem:[%s1036 + $0xb8] sm:$0xf]
    %v1084 = vld [vmem:[%s1036 + $0xbc] sm:$0xf]
    %v1085 = vpack.c.b16 %v734, %v732
    %v1086 = vpack.c.b16 %v956, %v958
    %v1087 = vpack.c.b16 %v957, %v959
    %v1088 = vpack.c.b16 %v738, %v736
    %v1089 = vpack.c.b16 %v962, %v960
    %v1090 = vpack.c.b16 %v963, %v961
    %v1091 = vpack.c.b16 %v742, %v740
    %v1092 = vpack.c.b16 %v966, %v964
    %v1093 = vpack.c.b16 %v967, %v965
    %v1094 = vpack.c.b16 %v746, %v744
    %v1095 = vpack.c.b16 %v1032, %v968
    %v1096 = vpack.c.b16 %v1033, %v969
    %v1097 = vpack.c.b16 %v750, %v748
    %v1098 = vpack.c.b16 %v970, %v972
    %v1099 = vpack.c.b16 %v971, %v973
    %v1100 = vpack.c.b16 %v754, %v752
    %v1101 = vpack.c.b16 %v976, %v974
    %v1102 = vpack.c.b16 %v977, %v975
    %v1103 = vpack.c.b16 %v758, %v756
    %v1104 = vpack.c.b16 %v980, %v978
    %v1105 = vpack.c.b16 %v981, %v979
    %v1106 = vpack.c.b16 %v762, %v760
    %v1107 = vpack.c.b16 %v1034, %v982
    %v1108 = vpack.c.b16 %v1035, %v983
    %v1181 = vunpack.c.l.b16 %v1037
    %v1182 = vunpack.c.l.b16 %v1038
    %v1183 = vunpack.c.l.b16 %v1039
    %v1184 = vunpack.c.l.b16 %v1040
    %v1185 = vunpack.c.l.b16 %v1041
    %v1186 = vunpack.c.l.b16 %v1042
    %v1187 = vunpack.c.l.b16 %v1043
    %v1188 = vunpack.c.l.b16 %v1044
    %v1189 = vunpack.c.l.b16 %v1045
    %v1190 = vunpack.c.l.b16 %v1046
    %v1191 = vunpack.c.l.b16 %v1047
    %v1192 = vunpack.c.l.b16 %v1048
    %v1193 = vunpack.c.l.b16 %v1049
    %v1194 = vunpack.c.l.b16 %v1050
    %v1195 = vunpack.c.l.b16 %v1051
    %v1196 = vunpack.c.l.b16 %v1052
    %v1197 = vunpack.c.l.b16 %v1053
    %v1198 = vunpack.c.l.b16 %v1054
    %v1199 = vunpack.c.l.b16 %v1055
    %v1200 = vunpack.c.l.b16 %v1056
    %v1201 = vunpack.c.l.b16 %v1057
    %v1202 = vunpack.c.l.b16 %v1058
    %v1203 = vunpack.c.l.b16 %v1059
    %v1204 = vunpack.c.l.b16 %v1060
    %v1205 = vunpack.c.l.b16 %v1061
    %v1206 = vunpack.c.l.b16 %v1062
    %v1207 = vunpack.c.l.b16 %v1063
    %v1208 = vunpack.c.l.b16 %v1064
    %v1209 = vunpack.c.l.b16 %v1065
    %v1210 = vunpack.c.l.b16 %v1066
    %v1211 = vunpack.c.l.b16 %v1067
    %v1212 = vunpack.c.l.b16 %v1068
    %v1213 = vunpack.c.l.b16 %v1069
    %v1214 = vunpack.c.l.b16 %v1070
    %v1215 = vunpack.c.l.b16 %v1071
    %v1216 = vunpack.c.l.b16 %v1072
    %v1217 = vunpack.c.l.b16 %v1073
    %v1218 = vunpack.c.l.b16 %v1074
    %v1219 = vunpack.c.l.b16 %v1075
    %v1220 = vunpack.c.l.b16 %v1076
    %v1221 = vunpack.c.l.b16 %v1077
    %v1222 = vunpack.c.l.b16 %v1078
    %v1223 = vunpack.c.l.b16 %v1079
    %v1224 = vunpack.c.l.b16 %v1080
    %v1225 = vunpack.c.l.b16 %v1081
    %v1226 = vunpack.c.l.b16 %v1082
    %v1227 = vunpack.c.l.b16 %v1083
    %v1228 = vunpack.c.l.b16 %v1084
    %v1229 = vpack.c.b16 %v1182, %v1181
    %v1230 = vpack.c.b16 %v1184, %v1183
    %v1231 = vpack.c.b16 %v1186, %v1185
    %v1232 = vpack.c.b16 %v1188, %v1187
    %v1233 = vpack.c.b16 %v1190, %v1189
    %v1234 = vpack.c.b16 %v1192, %v1191
    %v1235 = vpack.c.b16 %v1194, %v1193
    %v1236 = vpack.c.b16 %v1196, %v1195
    %v1237 = vpack.c.b16 %v1198, %v1197
    %v1238 = vpack.c.b16 %v1200, %v1199
    %v1239 = vpack.c.b16 %v1202, %v1201
    %v1240 = vpack.c.b16 %v1204, %v1203
    %v1241 = vpack.c.b16 %v1206, %v1205
    %v1242 = vpack.c.b16 %v1208, %v1207
    %v1243 = vpack.c.b16 %v1210, %v1209
    %v1244 = vpack.c.b16 %v1212, %v1211
    %v1245 = vpack.c.b16 %v1214, %v1213
    %v1246 = vpack.c.b16 %v1216, %v1215
    %v1247 = vpack.c.b16 %v1218, %v1217
    %v1248 = vpack.c.b16 %v1220, %v1219
    %v1249 = vpack.c.b16 %v1222, %v1221
    %v1250 = vpack.c.b16 %v1224, %v1223
    %v1251 = vpack.c.b16 %v1226, %v1225
    %v1252 = vpack.c.b16 %v1228, %v1227
    %1277 = vmatprep.subr.bf16.mxu0 0
    %1278 = vmatpush1.bf16.msra.mxu0 %v1229
    %1279 = vmatprep.subr.bf16.mxu0 0
    %1280 = vmatpush1.bf16.msra.mxu0 %v1230
    %1281 = vmatprep.subr.bf16.mxu0 0
    %1282 = vmatpush1.bf16.msra.mxu0 %v1231
    %1283 = vmatprep.subr.bf16.mxu0 0
    %1284 = vmatpush1.bf16.msra.mxu0 %v1232
    %1285 = vmatprep.subr.bf16.mxu0 0
    %1286 = vmatpush1.bf16.msra.mxu0 %v1233
    %1287 = vmatprep.subr.bf16.mxu0 0
    %1288 = vmatpush1.bf16.msra.mxu0 %v1234
    %1289 = vmatprep.subr.bf16.mxu0 0
    %1290 = vmatpush1.bf16.msra.mxu0 %v1235
    %1291 = vmatprep.subr.bf16.mxu0 0
    %1292 = vmatpush1.bf16.msra.mxu0 %v1236
    %1293 = vmatprep.subr.bf16.mxu0 0
    %1294 = vmatpush1.bf16.msra.mxu0 %v1237
    %1295 = vmatprep.subr.bf16.mxu0 0
    %1296 = vmatpush1.bf16.msra.mxu0 %v1238
    %1297 = vmatprep.subr.bf16.mxu0 0
    %1298 = vmatpush1.bf16.msra.mxu0 %v1239
    %1299 = vmatprep.subr.bf16.mxu0 0
    %1300 = vmatpush1.bf16.msra.mxu0 %v1240
    %1301 = vmatprep.subr.bf16.mxu0 0
    %1302 = vmatpush1.bf16.msra.mxu0 %v1241
    %1303 = vmatprep.subr.bf16.mxu0 0
    %1304 = vmatpush1.bf16.msra.mxu0 %v1242
    %1305 = vmatprep.subr.bf16.mxu0 0
    %1306 = vmatpush1.bf16.msra.mxu0 %v1243
    %1307 = vmatprep.subr.bf16.mxu0 0
    %1308 = vmatpush1.bf16.msra.mxu0 %v1244
    %1309 = vmatprep.mubr.bf16.mxu0 %v1086
    %1310 = vmatmul.mubr.bf16.gmra.mrb[0].mxu0 %v1085
    %v1311 = vpop.f32.mrb[0].mxu0
    %v1312 = vadd.f32 0.0, %v1311
    %v1313 = vpop.f32.mrb[0].mxu0
    %v1314 = vpop.f32.mrb[0].mxu0
    %v1315 = vadd.f32 0.0, %v1314
    %v1316 = vpop.f32.mrb[0].mxu0
    %1317 = vmatprep.mubr.bf16.mxu0 %v1089
    %1318 = vmatmul.mubr.bf16.gmra.mrb[0].mxu0 %v1088
    %v1319 = vpop.f32.mrb[0].mxu0
    %v1320 = vadd.f32 0.0, %v1319
    %v1321 = vpop.f32.mrb[0].mxu0
    %v1322 = vpop.f32.mrb[0].mxu0
    %v1323 = vadd.f32 0.0, %v1322
    %v1324 = vpop.f32.mrb[0].mxu0
    %1325 = vmatprep.mubr.bf16.mxu0 %v1092
    %1326 = vmatmul.mubr.bf16.gmra.mrb[0].mxu0 %v1091
    %v1327 = vpop.f32.mrb[0].mxu0
    %v1328 = vadd.f32 0.0, %v1327
    %v1329 = vpop.f32.mrb[0].mxu0
    %v1330 = vpop.f32.mrb[0].mxu0
    %v1331 = vadd.f32 0.0, %v1330
    %v1332 = vpop.f32.mrb[0].mxu0
    %1333 = vmatprep.mubr.bf16.mxu0 %v1095
    %1334 = vmatmul.mubr.bf16.gmra.mrb[0].mxu0 %v1094
    %v1335 = vpop.f32.mrb[0].mxu0
    %v1336 = vadd.f32 0.0, %v1335
    %v1337 = vpop.f32.mrb[0].mxu0
    %v1338 = vpop.f32.mrb[0].mxu0
    %v1339 = vadd.f32 0.0, %v1338
    %v1340 = vpop.f32.mrb[0].mxu0
    %1341 = vmatprep.mubr.bf16.mxu0 %v1098
    %1342 = vmatmul.mubr.bf16.gmra.mrb[0].mxu0 %v1097
    %v1343 = vpop.f32.mrb[0].mxu0
    %v1344 = vadd.f32 0.0, %v1343
    %v1345 = vpop.f32.mrb[0].mxu0
    %v1346 = vpop.f32.mrb[0].mxu0
    %v1347 = vadd.f32 0.0, %v1346
    %v1348 = vpop.f32.mrb[0].mxu0
    %1349 = vmatprep.mubr.bf16.mxu0 %v1101
    %1350 = vmatmul.mubr.bf16.gmra.mrb[0].mxu0 %v1100
    %v1351 = vpop.f32.mrb[0].mxu0
    %v1352 = vadd.f32 0.0, %v1351
    %v1353 = vpop.f32.mrb[0].mxu0
    %v1354 = vpop.f32.mrb[0].mxu0
    %v1355 = vadd.f32 0.0, %v1354
    %v1356 = vpop.f32.mrb[0].mxu0
    %1357 = vmatprep.mubr.bf16.mxu0 %v1104
    %1358 = vmatmul.mubr.bf16.gmra.mrb[0].mxu0 %v1103
    %v1359 = vpop.f32.mrb[0].mxu0
    %v1360 = vadd.f32 0.0, %v1359
    %v1361 = vpop.f32.mrb[0].mxu0
    %v1362 = vpop.f32.mrb[0].mxu0
    %v1363 = vadd.f32 0.0, %v1362
    %v1364 = vpop.f32.mrb[0].mxu0
    %1365 = vmatprep.mubr.bf16.mxu0 %v1107
    %1366 = vmatmul.mubr.bf16.gmra.mrb[0].mxu0 %v1106
    %v1367 = vpop.f32.mrb[0].mxu0
    %v1368 = vadd.f32 0.0, %v1367
    %v1369 = vpop.f32.mrb[0].mxu0
    %v1370 = vpop.f32.mrb[0].mxu0
    %v1371 = vadd.f32 0.0, %v1370
    %v1372 = vpop.f32.mrb[0].mxu0
    %1373 = vdwg.mxu0
    %1374 = vmatprep.subr.bf16.mxu0 0
    %1375 = vmatpush1.bf16.msra.mxu0 %v1245
    %1376 = vmatprep.subr.bf16.mxu0 0
    %1377 = vmatpush1.bf16.msra.mxu0 %v1246
    %1378 = vmatprep.subr.bf16.mxu0 0
    %1379 = vmatpush1.bf16.msra.mxu0 %v1247
    %1380 = vmatprep.subr.bf16.mxu0 0
    %1381 = vmatpush1.bf16.msra.mxu0 %v1248
    %1382 = vmatprep.subr.bf16.mxu0 0
    %1383 = vmatpush1.bf16.msra.mxu0 %v1249
    %1384 = vmatprep.subr.bf16.mxu0 0
    %1385 = vmatpush1.bf16.msra.mxu0 %v1250
    %1386 = vmatprep.subr.bf16.mxu0 0
    %1387 = vmatpush1.bf16.msra.mxu0 %v1251
    %1388 = vmatprep.subr.bf16.mxu0 0
    %1389 = vmatpush1.bf16.msra.mxu0 %v1252
    %1390 = vmatprep.subr.bf16.mxu0 0
    %1391 = vmatpush1.bf16.msra.mxu0 0
    %1392 = vmatprep.subr.bf16.mxu0 0
    %1393 = vmatpush1.bf16.msra.mxu0 0
    %1394 = vmatprep.subr.bf16.mxu0 0
    %1395 = vmatpush1.bf16.msra.mxu0 0
    %1396 = vmatprep.subr.bf16.mxu0 0
    %1397 = vmatpush1.bf16.msra.mxu0 0
    %1398 = vmatprep.subr.bf16.mxu0 0
    %1399 = vmatpush1.bf16.msra.mxu0 0
    %1400 = vmatprep.subr.bf16.mxu0 0
    %1401 = vmatpush1.bf16.msra.mxu0 0
    %1402 = vmatprep.subr.bf16.mxu0 0
    %1403 = vmatpush1.bf16.msra.mxu0 0
    %1404 = vmatprep.subr.bf16.mxu0 0
    %1405 = vmatpush1.bf16.msra.mxu0 0
    %1406 = vmatprep.mubr.bf16.mxu0 0
    %1407 = vmatmul.mubr.bf16.gmra.mrb[0].mxu0 %v1087
    %v1408 = vpop.f32.mrb[0].mxu0
    %v1409 = vadd.f32 %v1312, %v1408
    %v1410 = vpop.f32.mrb[0].mxu0
    %v1411 = vpop.f32.mrb[0].mxu0
    %v1412 = vadd.f32 %v1315, %v1411
    %v1413 = vpop.f32.mrb[0].mxu0
    %1414 = vmatprep.mubr.bf16.mxu0 0
    %1415 = vmatmul.mubr.bf16.gmra.mrb[0].mxu0 %v1090
    %v1416 = vpop.f32.mrb[0].mxu0
    %v1417 = vadd.f32 %v1320, %v1416
    %v1418 = vpop.f32.mrb[0].mxu0
    %v1419 = vpop.f32.mrb[0].mxu0
    %v1420 = vadd.f32 %v1323, %v1419
    %v1421 = vpop.f32.mrb[0].mxu0
    %1422 = vmatprep.mubr.bf16.mxu0 0
    %1423 = vmatmul.mubr.bf16.gmra.mrb[0].mxu0 %v1093
    %v1424 = vpop.f32.mrb[0].mxu0
    %v1425 = vadd.f32 %v1328, %v1424
    %v1426 = vpop.f32.mrb[0].mxu0
    %v1427 = vpop.f32.mrb[0].mxu0
    %v1428 = vadd.f32 %v1331, %v1427
    %v1429 = vpop.f32.mrb[0].mxu0
    %1430 = vmatprep.mubr.bf16.mxu0 0
    %1431 = vmatmul.mubr.bf16.gmra.mrb[0].mxu0 %v1096
    %v1432 = vpop.f32.mrb[0].mxu0
    %v1433 = vadd.f32 %v1336, %v1432
    %v1434 = vpop.f32.mrb[0].mxu0
    %v1435 = vpop.f32.mrb[0].mxu0
    %v1436 = vadd.f32 %v1339, %v1435
    %v1437 = vpop.f32.mrb[0].mxu0
    %1438 = vmatprep.mubr.bf16.mxu0 0
    %1439 = vmatmul.mubr.bf16.gmra.mrb[0].mxu0 %v1099
    %v1440 = vpop.f32.mrb[0].mxu0
    %v1441 = vadd.f32 %v1344, %v1440
    %v1442 = vpop.f32.mrb[0].mxu0
    %v1443 = vpop.f32.mrb[0].mxu0
    %v1444 = vadd.f32 %v1347, %v1443
    %v1445 = vpop.f32.mrb[0].mxu0
    %1446 = vmatprep.mubr.bf16.mxu0 0
    %1447 = vmatmul.mubr.bf16.gmra.mrb[0].mxu0 %v1102
    %v1448 = vpop.f32.mrb[0].mxu0
    %v1449 = vadd.f32 %v1352, %v1448
    %v1450 = vpop.f32.mrb[0].mxu0
    %v1451 = vpop.f32.mrb[0].mxu0
    %v1452 = vadd.f32 %v1355, %v1451
    %v1453 = vpop.f32.mrb[0].mxu0
    %1454 = vmatprep.mubr.bf16.mxu0 0
    %1455 = vmatmul.mubr.bf16.gmra.mrb[0].mxu0 %v1105
    %v1456 = vpop.f32.mrb[0].mxu0
    %v1457 = vadd.f32 %v1360, %v1456
    %v1458 = vpop.f32.mrb[0].mxu0
    %v1459 = vpop.f32.mrb[0].mxu0
    %v1460 = vadd.f32 %v1363, %v1459
    %v1461 = vpop.f32.mrb[0].mxu0
    %1462 = vmatprep.mubr.bf16.mxu0 0
    %1463 = vmatmul.mubr.bf16.gmra.mrb[0].mxu0 %v1108
    %v1464 = vpop.f32.mrb[0].mxu0
    %v1465 = vadd.f32 %v1368, %v1464
    %v1466 = vpop.f32.mrb[0].mxu0
    %v1467 = vpop.f32.mrb[0].mxu0
    %v1468 = vadd.f32 %v1371, %v1467
    %v1469 = vpop.f32.mrb[0].mxu0
    %1470 = vdwg.mxu0
    %v1471 = vpack.c.b16 %v732, %v734
    %v1472 = vpack.c.b16 %v958, %v956
    %v1473 = vpack.c.b16 %v959, %v957
    %v1474 = vpack.c.b16 %v736, %v734
    %v1475 = vpack.c.b16 %v960, %v956
    %v1476 = vpack.c.b16 %v961, %v957
    %v1477 = vpack.c.b16 %v740, %v738
    %v1478 = vpack.c.b16 %v964, %v962
    %v1479 = vpack.c.b16 %v965, %v963
    %v1480 = vpack.c.b16 %v744, %v742
    %v1481 = vpack.c.b16 %v968, %v966
    %v1482 = vpack.c.b16 %v969, %v967
    %v1483 = vpack.c.b16 %v748, %v750
    %v1484 = vpack.c.b16 %v972, %v970
    %v1485 = vpack.c.b16 %v973, %v971
    %v1486 = vpack.c.b16 %v752, %v750
    %v1487 = vpack.c.b16 %v974, %v970
    %v1488 = vpack.c.b16 %v975, %v971
    %v1489 = vpack.c.b16 %v756, %v754
    %v1490 = vpack.c.b16 %v978, %v976
    %v1491 = vpack.c.b16 %v979, %v977
    %v1492 = vpack.c.b16 %v760, %v758
    %v1493 = vpack.c.b16 %v982, %v980
    %v1494 = vpack.c.b16 %v983, %v981
    %v1567 = vunpack.c.l.b16 %v984
    %v1568 = vunpack.c.l.b16 %v985
    %v1569 = vunpack.c.l.b16 %v986
    %v1570 = vunpack.c.l.b16 %v987
    %v1571 = vunpack.c.l.b16 %v988
    %v1572 = vunpack.c.l.b16 %v989
    %v1573 = vunpack.c.l.b16 %v990
    %v1574 = vunpack.c.l.b16 %v991
    %v1575 = vunpack.c.l.b16 %v992
    %v1576 = vunpack.c.l.b16 %v993
    %v1577 = vunpack.c.l.b16 %v994
    %v1578 = vunpack.c.l.b16 %v995
    %v1579 = vunpack.c.l.b16 %v996
    %v1580 = vunpack.c.l.b16 %v997
    %v1581 = vunpack.c.l.b16 %v998
    %v1582 = vunpack.c.l.b16 %v999
    %v1583 = vunpack.c.l.b16 %v1000
    %v1584 = vunpack.c.l.b16 %v1001
    %v1585 = vunpack.c.l.b16 %v1002
    %v1586 = vunpack.c.l.b16 %v1003
    %v1587 = vunpack.c.l.b16 %v1004
    %v1588 = vunpack.c.l.b16 %v1005
    %v1589 = vunpack.c.l.b16 %v1006
    %v1590 = vunpack.c.l.b16 %v1007
    %v1591 = vunpack.c.l.b16 %v1008
    %v1592 = vunpack.c.l.b16 %v1009
    %v1593 = vunpack.c.l.b16 %v1010
    %v1594 = vunpack.c.l.b16 %v1011
    %v1595 = vunpack.c.l.b16 %v1012
    %v1596 = vunpack.c.l.b16 %v1013
    %v1597 = vunpack.c.l.b16 %v1014
    %v1598 = vunpack.c.l.b16 %v1015
    %v1599 = vunpack.c.l.b16 %v1016
    %v1600 = vunpack.c.l.b16 %v1017
    %v1601 = vunpack.c.l.b16 %v1018
    %v1602 = vunpack.c.l.b16 %v1019
    %v1603 = vunpack.c.l.b16 %v1020
    %v1604 = vunpack.c.l.b16 %v1021
    %v1605 = vunpack.c.l.b16 %v1022
    %v1606 = vunpack.c.l.b16 %v1023
    %v1607 = vunpack.c.l.b16 %v1024
    %v1608 = vunpack.c.l.b16 %v1025
    %v1609 = vunpack.c.l.b16 %v1026
    %v1610 = vunpack.c.l.b16 %v1027
    %v1611 = vunpack.c.l.b16 %v1028
    %v1612 = vunpack.c.l.b16 %v1029
    %v1613 = vunpack.c.l.b16 %v1030
    %v1614 = vunpack.c.l.b16 %v1031
    %v1615 = vpack.c.b16 %v1568, %v1567
    %v1616 = vpack.c.b16 %v1570, %v1569
    %v1617 = vpack.c.b16 %v1572, %v1571
    %v1618 = vpack.c.b16 %v1574, %v1573
    %v1619 = vpack.c.b16 %v1576, %v1575
    %v1620 = vpack.c.b16 %v1578, %v1577
    %v1621 = vpack.c.b16 %v1580, %v1579
    %v1622 = vpack.c.b16 %v1582, %v1581
    %v1623 = vpack.c.b16 %v1584, %v1583
    %v1624 = vpack.c.b16 %v1586, %v1585
    %v1625 = vpack.c.b16 %v1588, %v1587
    %v1626 = vpack.c.b16 %v1590, %v1589
    %v1627 = vpack.c.b16 %v1592, %v1591
    %v1628 = vpack.c.b16 %v1594, %v1593
    %v1629 = vpack.c.b16 %v1596, %v1595
    %v1630 = vpack.c.b16 %v1598, %v1597
    %v1631 = vpack.c.b16 %v1600, %v1599
    %v1632 = vpack.c.b16 %v1602, %v1601
    %v1633 = vpack.c.b16 %v1604, %v1603
    %v1634 = vpack.c.b16 %v1606, %v1605
    %v1635 = vpack.c.b16 %v1608, %v1607
    %v1636 = vpack.c.b16 %v1610, %v1609
    %v1637 = vpack.c.b16 %v1612, %v1611
    %v1638 = vpack.c.b16 %v1614, %v1613
    %1663 = vmatprep.subr.bf16.mxu0 0
    %1664 = vmatpush1.bf16.msra.mxu0 %v1615
    %1665 = vmatprep.subr.bf16.mxu0 0
    %1666 = vmatpush1.bf16.msra.mxu0 %v1616
    %1667 = vmatprep.subr.bf16.mxu0 0
    %1668 = vmatpush1.bf16.msra.mxu0 %v1617
    %1669 = vmatprep.subr.bf16.mxu0 0
    %1670 = vmatpush1.bf16.msra.mxu0 %v1618
    %1671 = vmatprep.subr.bf16.mxu0 0
    %1672 = vmatpush1.bf16.msra.mxu0 %v1619
    %1673 = vmatprep.subr.bf16.mxu0 0
    %1674 = vmatpush1.bf16.msra.mxu0 %v1620
    %1675 = vmatprep.subr.bf16.mxu0 0
    %1676 = vmatpush1.bf16.msra.mxu0 %v1621
    %1677 = vmatprep.subr.bf16.mxu0 0
    %1678 = vmatpush1.bf16.msra.mxu0 %v1622
    %1679 = vmatprep.subr.bf16.mxu0 0
    %1680 = vmatpush1.bf16.msra.mxu0 %v1623
    %1681 = vmatprep.subr.bf16.mxu0 0
    %1682 = vmatpush1.bf16.msra.mxu0 %v1624
    %1683 = vmatprep.subr.bf16.mxu0 0
    %1684 = vmatpush1.bf16.msra.mxu0 %v1625
    %1685 = vmatprep.subr.bf16.mxu0 0
    %1686 = vmatpush1.bf16.msra.mxu0 %v1626
    %1687 = vmatprep.subr.bf16.mxu0 0
    %1688 = vmatpush1.bf16.msra.mxu0 %v1627
    %1689 = vmatprep.subr.bf16.mxu0 0
    %1690 = vmatpush1.bf16.msra.mxu0 %v1628
    %1691 = vmatprep.subr.bf16.mxu0 0
    %1692 = vmatpush1.bf16.msra.mxu0 %v1629
    %1693 = vmatprep.subr.bf16.mxu0 0
    %1694 = vmatpush1.bf16.msra.mxu0 %v1630
    %1695 = vmatprep.mubr.bf16.mxu0 %v1472
    %1696 = vmatmul.mubr.bf16.gmra.mrb[0].mxu0 %v1471
    %v1697 = vpop.f32.mrb[0].mxu0
    %v1698 = vadd.f32 %v1409, %v1697
    %v1699 = vpop.f32.mrb[0].mxu0
    %v1700 = vpop.f32.mrb[0].mxu0
    %v1701 = vadd.f32 %v1412, %v1700
    %v1702 = vpop.f32.mrb[0].mxu0
    %1703 = vmatprep.mubr.bf16.mxu0 %v1475
    %1704 = vmatmul.mubr.bf16.gmra.mrb[0].mxu0 %v1474
    %v1705 = vpop.f32.mrb[0].mxu0
    %v1706 = vadd.f32 %v1417, %v1705
    %v1707 = vpop.f32.mrb[0].mxu0
    %v1708 = vpop.f32.mrb[0].mxu0
    %v1709 = vadd.f32 %v1420, %v1708
    %v1710 = vpop.f32.mrb[0].mxu0
    %1711 = vmatprep.mubr.bf16.mxu0 %v1478
    %1712 = vmatmul.mubr.bf16.gmra.mrb[0].mxu0 %v1477
    %v1713 = vpop.f32.mrb[0].mxu0
    %v1714 = vadd.f32 %v1425, %v1713
    %v1715 = vpop.f32.mrb[0].mxu0
    %v1716 = vpop.f32.mrb[0].mxu0
    %v1717 = vadd.f32 %v1428, %v1716
    %v1718 = vpop.f32.mrb[0].mxu0
    %1719 = vmatprep.mubr.bf16.mxu0 %v1481
    %1720 = vmatmul.mubr.bf16.gmra.mrb[0].mxu0 %v1480
    %v1721 = vpop.f32.mrb[0].mxu0
    %v1722 = vadd.f32 %v1433, %v1721
    %v1723 = vpop.f32.mrb[0].mxu0
    %v1724 = vpop.f32.mrb[0].mxu0
    %v1725 = vadd.f32 %v1436, %v1724
    %v1726 = vpop.f32.mrb[0].mxu0
    %1727 = vmatprep.mubr.bf16.mxu0 %v1484
    %1728 = vmatmul.mubr.bf16.gmra.mrb[0].mxu0 %v1483
    %v1729 = vpop.f32.mrb[0].mxu0
    %v1730 = vadd.f32 %v1441, %v1729
    %v1731 = vpop.f32.mrb[0].mxu0
    %v1732 = vpop.f32.mrb[0].mxu0
    %v1733 = vadd.f32 %v1444, %v1732
    %v1734 = vpop.f32.mrb[0].mxu0
    %1735 = vmatprep.mubr.bf16.mxu0 %v1487
    %1736 = vmatmul.mubr.bf16.gmra.mrb[0].mxu0 %v1486
    %v1737 = vpop.f32.mrb[0].mxu0
    %v1738 = vadd.f32 %v1449, %v1737
    %v1739 = vpop.f32.mrb[0].mxu0
    %v1740 = vpop.f32.mrb[0].mxu0
    %v1741 = vadd.f32 %v1452, %v1740
    %v1742 = vpop.f32.mrb[0].mxu0
    %1743 = vmatprep.mubr.bf16.mxu0 %v1490
    %1744 = vmatmul.mubr.bf16.gmra.mrb[0].mxu0 %v1489
    %v1745 = vpop.f32.mrb[0].mxu0
    %v1746 = vadd.f32 %v1457, %v1745
    %v1747 = vpop.f32.mrb[0].mxu0
    %v1748 = vpop.f32.mrb[0].mxu0
    %v1749 = vadd.f32 %v1460, %v1748
    %v1750 = vpop.f32.mrb[0].mxu0
    %1751 = vmatprep.mubr.bf16.mxu0 %v1493
    %1752 = vmatmul.mubr.bf16.gmra.mrb[0].mxu0 %v1492
    %v1753 = vpop.f32.mrb[0].mxu0
    %v1754 = vadd.f32 %v1465, %v1753
    %v1755 = vpop.f32.mrb[0].mxu0
    %v1756 = vpop.f32.mrb[0].mxu0
    %v1757 = vadd.f32 %v1468, %v1756
    %v1758 = vpop.f32.mrb[0].mxu0
    %1759 = vdwg.mxu0
    %1760 = vmatprep.subr.bf16.mxu0 0
    %1761 = vmatpush1.bf16.msra.mxu0 %v1631
    %1762 = vmatprep.subr.bf16.mxu0 0
    %1763 = vmatpush1.bf16.msra.mxu0 %v1632
    %1764 = vmatprep.subr.bf16.mxu0 0
    %1765 = vmatpush1.bf16.msra.mxu0 %v1633
    %1766 = vmatprep.subr.bf16.mxu0 0
    %1767 = vmatpush1.bf16.msra.mxu0 %v1634
    %1768 = vmatprep.subr.bf16.mxu0 0
    %1769 = vmatpush1.bf16.msra.mxu0 %v1635
    %1770 = vmatprep.subr.bf16.mxu0 0
    %1771 = vmatpush1.bf16.msra.mxu0 %v1636
    %1772 = vmatprep.subr.bf16.mxu0 0
    %1773 = vmatpush1.bf16.msra.mxu0 %v1637
    %1774 = vmatprep.subr.bf16.mxu0 0
    %1775 = vmatpush1.bf16.msra.mxu0 %v1638
    %1776 = vmatprep.subr.bf16.mxu0 0
    %1777 = vmatpush1.bf16.msra.mxu0 0
    %1778 = vmatprep.subr.bf16.mxu0 0
    %1779 = vmatpush1.bf16.msra.mxu0 0
    %1780 = vmatprep.subr.bf16.mxu0 0
    %1781 = vmatpush1.bf16.msra.mxu0 0
    %1782 = vmatprep.subr.bf16.mxu0 0
    %1783 = vmatpush1.bf16.msra.mxu0 0
    %1784 = vmatprep.subr.bf16.mxu0 0
    %1785 = vmatpush1.bf16.msra.mxu0 0
    %1786 = vmatprep.subr.bf16.mxu0 0
    %1787 = vmatpush1.bf16.msra.mxu0 0
    %1788 = vmatprep.subr.bf16.mxu0 0
    %1789 = vmatpush1.bf16.msra.mxu0 0
    %1790 = vmatprep.subr.bf16.mxu0 0
    %1791 = vmatpush1.bf16.msra.mxu0 0
    %1792 = vmatprep.mubr.bf16.mxu0 0
    %1793 = vmatmul.mubr.bf16.gmra.mrb[0].mxu0 %v1473
    %v1794 = vpop.f32.mrb[0].mxu0
    %v1795 = vadd.f32 %v1698, %v1794
    %v1796 = vpop.f32.mrb[0].mxu0
    %v1797 = vpop.f32.mrb[0].mxu0
    %v1798 = vadd.f32 %v1701, %v1797
    %v1799 = vpop.f32.mrb[0].mxu0
    %1800 = vmatprep.mubr.bf16.mxu0 0
    %1801 = vmatmul.mubr.bf16.gmra.mrb[0].mxu0 %v1476
    %v1802 = vpop.f32.mrb[0].mxu0
    %v1803 = vadd.f32 %v1706, %v1802
    %v1804 = vpop.f32.mrb[0].mxu0
    %v1805 = vpop.f32.mrb[0].mxu0
    %v1806 = vadd.f32 %v1709, %v1805
    %v1807 = vpop.f32.mrb[0].mxu0
    %1808 = vmatprep.mubr.bf16.mxu0 0
    %1809 = vmatmul.mubr.bf16.gmra.mrb[0].mxu0 %v1479
    %v1810 = vpop.f32.mrb[0].mxu0
    %v1811 = vadd.f32 %v1714, %v1810
    %v1812 = vpop.f32.mrb[0].mxu0
    %v1813 = vpop.f32.mrb[0].mxu0
    %v1814 = vadd.f32 %v1717, %v1813
    %v1815 = vpop.f32.mrb[0].mxu0
    %1816 = vmatprep.mubr.bf16.mxu0 0
    %1817 = vmatmul.mubr.bf16.gmra.mrb[0].mxu0 %v1482
    %v1818 = vpop.f32.mrb[0].mxu0
    %v1819 = vadd.f32 %v1722, %v1818
    %v1820 = vpop.f32.mrb[0].mxu0
    %v1821 = vpop.f32.mrb[0].mxu0
    %v1822 = vadd.f32 %v1725, %v1821
    %v1823 = vpop.f32.mrb[0].mxu0
    %1824 = vmatprep.mubr.bf16.mxu0 0
    %1825 = vmatmul.mubr.bf16.gmra.mrb[0].mxu0 %v1485
    %v1826 = vpop.f32.mrb[0].mxu0
    %v1827 = vadd.f32 %v1730, %v1826
    %v1828 = vpop.f32.mrb[0].mxu0
    %v1829 = vpop.f32.mrb[0].mxu0
    %v1830 = vadd.f32 %v1733, %v1829
    %v1831 = vpop.f32.mrb[0].mxu0
    %1832 = vmatprep.mubr.bf16.mxu0 0
    %1833 = vmatmul.mubr.bf16.gmra.mrb[0].mxu0 %v1488
    %v1834 = vpop.f32.mrb[0].mxu0
    %v1835 = vadd.f32 %v1738, %v1834
    %v1836 = vpop.f32.mrb[0].mxu0
    %v1837 = vpop.f32.mrb[0].mxu0
    %v1838 = vadd.f32 %v1741, %v1837
    %v1839 = vpop.f32.mrb[0].mxu0
    %1840 = vmatprep.mubr.bf16.mxu0 0
    %1841 = vmatmul.mubr.bf16.gmra.mrb[0].mxu0 %v1491
    %v1842 = vpop.f32.mrb[0].mxu0
    %v1843 = vadd.f32 %v1746, %v1842
    %v1844 = vpop.f32.mrb[0].mxu0
    %v1845 = vpop.f32.mrb[0].mxu0
    %v1846 = vadd.f32 %v1749, %v1845
    %v1847 = vpop.f32.mrb[0].mxu0
    %1848 = vmatprep.mubr.bf16.mxu0 0
    %1849 = vmatmul.mubr.bf16.gmra.mrb[0].mxu0 %v1494
    %v1850 = vpop.f32.mrb[0].mxu0
    %v1851 = vadd.f32 %v1754, %v1850
    %v1852 = vpop.f32.mrb[0].mxu0
    %v1853 = vpop.f32.mrb[0].mxu0
    %v1854 = vadd.f32 %v1757, %v1853
    %v1855 = vpop.f32.mrb[0].mxu0
    %1856 = vdwg.mxu0
    %s1857 = scalar_lea.vmem %s1, 384
    %v1858 = vld [vmem:[%s1857] sm:$0xf]
    %v1859 = vld [vmem:[%s1857 + $0x4] sm:$0xf]
    %v1860 = vld [vmem:[%s1857 + $0x8] sm:$0xf]
    %v1861 = vld [vmem:[%s1857 + $0xc] sm:$0xf]
    %v1862 = vld [vmem:[%s1857 + $0x10] sm:$0xf]
    %v1863 = vld [vmem:[%s1857 + $0x14] sm:$0xf]
    %v1864 = vld [vmem:[%s1857 + $0x18] sm:$0xf]
    %v1865 = vld [vmem:[%s1857 + $0x1c] sm:$0xf]
    %v1866 = vld [vmem:[%s1857 + $0x20] sm:$0xf]
    %v1867 = vld [vmem:[%s1857 + $0x24] sm:$0xf]
    %v1868 = vld [vmem:[%s1857 + $0x28] sm:$0xf]
    %v1869 = vld [vmem:[%s1857 + $0x2c] sm:$0xf]
    %v1870 = vld [vmem:[%s1857 + $0x30] sm:$0xf]
    %v1871 = vld [vmem:[%s1857 + $0x34] sm:$0xf]
    %v1872 = vld [vmem:[%s1857 + $0x38] sm:$0xf]
    %v1873 = vld [vmem:[%s1857 + $0x3c] sm:$0xf]
    %v1874 = vld [vmem:[%s1857 + $0x40] sm:$0xf]
    %v1875 = vld [vmem:[%s1857 + $0x44] sm:$0xf]
    %v1876 = vld [vmem:[%s1857 + $0x48] sm:$0xf]
    %v1877 = vld [vmem:[%s1857 + $0x4c] sm:$0xf]
    %v1878 = vld [vmem:[%s1857 + $0x50] sm:$0xf]
    %v1879 = vld [vmem:[%s1857 + $0x54] sm:$0xf]
    %v1880 = vld [vmem:[%s1857 + $0x58] sm:$0xf]
    %v1881 = vld [vmem:[%s1857 + $0x5c] sm:$0xf]
    %v1882 = vld [vmem:[%s1857 + $0x60] sm:$0xf]
    %v1883 = vld [vmem:[%s1857 + $0x64] sm:$0xf]
    %v1884 = vld [vmem:[%s1857 + $0x68] sm:$0xf]
    %v1885 = vld [vmem:[%s1857 + $0x6c] sm:$0xf]
    %v1886 = vld [vmem:[%s1857 + $0x70] sm:$0xf]
    %v1887 = vld [vmem:[%s1857 + $0x74] sm:$0xf]
    %v1888 = vld [vmem:[%s1857 + $0x78] sm:$0xf]
    %v1889 = vld [vmem:[%s1857 + $0x7c] sm:$0xf]
    %v1890 = vld [vmem:[%s1857 + $0x80] sm:$0xf]
    %v1891 = vld [vmem:[%s1857 + $0x84] sm:$0xf]
    %v1892 = vld [vmem:[%s1857 + $0x88] sm:$0xf]
    %v1893 = vld [vmem:[%s1857 + $0x8c] sm:$0xf]
    %v1894 = vld [vmem:[%s1857 + $0x90] sm:$0xf]
    %v1895 = vld [vmem:[%s1857 + $0x94] sm:$0xf]
    %v1896 = vld [vmem:[%s1857 + $0x98] sm:$0xf]
    %v1897 = vld [vmem:[%s1857 + $0x9c] sm:$0xf]
    %v1898 = vld [vmem:[%s1857 + $0xa0] sm:$0xf]
    %v1899 = vld [vmem:[%s1857 + $0xa4] sm:$0xf]
    %v1900 = vld [vmem:[%s1857 + $0xa8] sm:$0xf]
    %v1901 = vld [vmem:[%s1857 + $0xac] sm:$0xf]
    %v1902 = vld [vmem:[%s1857 + $0xb0] sm:$0xf]
    %v1903 = vld [vmem:[%s1857 + $0xb4] sm:$0xf]
    %v1904 = vld [vmem:[%s1857 + $0xb8] sm:$0xf]
    %v1905 = vld [vmem:[%s1857 + $0xbc] sm:$0xf]
    %v1906 = vpack.c.b16 %v744, %v746
    %v1907 = vpack.c.b16 %v968, %v1032
    %v1908 = vpack.c.b16 %v969, %v1033
    %v1909 = vpack.c.b16 %v760, %v762
    %v1910 = vpack.c.b16 %v982, %v1034
    %v1911 = vpack.c.b16 %v983, %v1035
    %v1966 = vunpack.c.l.b16 %v1858
    %v1967 = vunpack.c.l.b16 %v1859
    %v1968 = vunpack.c.l.b16 %v1860
    %v1969 = vunpack.c.l.b16 %v1861
    %v1970 = vunpack.c.l.b16 %v1862
    %v1971 = vunpack.c.l.b16 %v1863
    %v1972 = vunpack.c.l.b16 %v1864
    %v1973 = vunpack.c.l.b16 %v1865
    %v1974 = vunpack.c.l.b16 %v1866
    %v1975 = vunpack.c.l.b16 %v1867
    %v1976 = vunpack.c.l.b16 %v1868
    %v1977 = vunpack.c.l.b16 %v1869
    %v1978 = vunpack.c.l.b16 %v1870
    %v1979 = vunpack.c.l.b16 %v1871
    %v1980 = vunpack.c.l.b16 %v1872
    %v1981 = vunpack.c.l.b16 %v1873
    %v1982 = vunpack.c.l.b16 %v1874
    %v1983 = vunpack.c.l.b16 %v1875
    %v1984 = vunpack.c.l.b16 %v1876
    %v1985 = vunpack.c.l.b16 %v1877
    %v1986 = vunpack.c.l.b16 %v1878
    %v1987 = vunpack.c.l.b16 %v1879
    %v1988 = vunpack.c.l.b16 %v1880
    %v1989 = vunpack.c.l.b16 %v1881
    %v1990 = vunpack.c.l.b16 %v1882
    %v1991 = vunpack.c.l.b16 %v1883
    %v1992 = vunpack.c.l.b16 %v1884
    %v1993 = vunpack.c.l.b16 %v1885
    %v1994 = vunpack.c.l.b16 %v1886
    %v1995 = vunpack.c.l.b16 %v1887
    %v1996 = vunpack.c.l.b16 %v1888
    %v1997 = vunpack.c.l.b16 %v1889
    %v1998 = vunpack.c.l.b16 %v1890
    %v1999 = vunpack.c.l.b16 %v1891
    %v2000 = vunpack.c.l.b16 %v1892
    %v2001 = vunpack.c.l.b16 %v1893
    %v2002 = vunpack.c.l.b16 %v1894
    %v2003 = vunpack.c.l.b16 %v1895
    %v2004 = vunpack.c.l.b16 %v1896
    %v2005 = vunpack.c.l.b16 %v1897
    %v2006 = vunpack.c.l.b16 %v1898
    %v2007 = vunpack.c.l.b16 %v1899
    %v2008 = vunpack.c.l.b16 %v1900
    %v2009 = vunpack.c.l.b16 %v1901
    %v2010 = vunpack.c.l.b16 %v1902
    %v2011 = vunpack.c.l.b16 %v1903
    %v2012 = vunpack.c.l.b16 %v1904
    %v2013 = vunpack.c.l.b16 %v1905
    %v2014 = vpack.c.b16 %v1967, %v1966
    %v2015 = vpack.c.b16 %v1969, %v1968
    %v2016 = vpack.c.b16 %v1971, %v1970
    %v2017 = vpack.c.b16 %v1973, %v1972
    %v2018 = vpack.c.b16 %v1975, %v1974
    %v2019 = vpack.c.b16 %v1977, %v1976
    %v2020 = vpack.c.b16 %v1979, %v1978
    %v2021 = vpack.c.b16 %v1981, %v1980
    %v2022 = vpack.c.b16 %v1983, %v1982
    %v2023 = vpack.c.b16 %v1985, %v1984
    %v2024 = vpack.c.b16 %v1987, %v1986
    %v2025 = vpack.c.b16 %v1989, %v1988
    %v2026 = vpack.c.b16 %v1991, %v1990
    %v2027 = vpack.c.b16 %v1993, %v1992
    %v2028 = vpack.c.b16 %v1995, %v1994
    %v2029 = vpack.c.b16 %v1997, %v1996
    %v2030 = vpack.c.b16 %v1999, %v1998
    %v2031 = vpack.c.b16 %v2001, %v2000
    %v2032 = vpack.c.b16 %v2003, %v2002
    %v2033 = vpack.c.b16 %v2005, %v2004
    %v2034 = vpack.c.b16 %v2007, %v2006
    %v2035 = vpack.c.b16 %v2009, %v2008
    %v2036 = vpack.c.b16 %v2011, %v2010
    %v2037 = vpack.c.b16 %v2013, %v2012
    %2062 = vmatprep.subr.bf16.mxu0 0
    %2063 = vmatpush1.bf16.msra.mxu0 %v2014
    %2064 = vmatprep.subr.bf16.mxu0 0
    %2065 = vmatpush1.bf16.msra.mxu0 %v2015
    %2066 = vmatprep.subr.bf16.mxu0 0
    %2067 = vmatpush1.bf16.msra.mxu0 %v2016
    %2068 = vmatprep.subr.bf16.mxu0 0
    %2069 = vmatpush1.bf16.msra.mxu0 %v2017
    %2070 = vmatprep.subr.bf16.mxu0 0
    %2071 = vmatpush1.bf16.msra.mxu0 %v2018
    %2072 = vmatprep.subr.bf16.mxu0 0
    %2073 = vmatpush1.bf16.msra.mxu0 %v2019
    %2074 = vmatprep.subr.bf16.mxu0 0
    %2075 = vmatpush1.bf16.msra.mxu0 %v2020
    %2076 = vmatprep.subr.bf16.mxu0 0
    %2077 = vmatpush1.bf16.msra.mxu0 %v2021
    %2078 = vmatprep.subr.bf16.mxu0 0
    %2079 = vmatpush1.bf16.msra.mxu0 %v2022
    %2080 = vmatprep.subr.bf16.mxu0 0
    %2081 = vmatpush1.bf16.msra.mxu0 %v2023
    %2082 = vmatprep.subr.bf16.mxu0 0
    %2083 = vmatpush1.bf16.msra.mxu0 %v2024
    %2084 = vmatprep.subr.bf16.mxu0 0
    %2085 = vmatpush1.bf16.msra.mxu0 %v2025
    %2086 = vmatprep.subr.bf16.mxu0 0
    %2087 = vmatpush1.bf16.msra.mxu0 %v2026
    %2088 = vmatprep.subr.bf16.mxu0 0
    %2089 = vmatpush1.bf16.msra.mxu0 %v2027
    %2090 = vmatprep.subr.bf16.mxu0 0
    %2091 = vmatpush1.bf16.msra.mxu0 %v2028
    %2092 = vmatprep.subr.bf16.mxu0 0
    %2093 = vmatpush1.bf16.msra.mxu0 %v2029
    %2094 = vmatprep.mubr.bf16.mxu0 %v1475
    %2095 = vmatmul.mubr.bf16.gmra.mrb[0].mxu0 %v1474
    %v2096 = vpop.f32.mrb[0].mxu0
    %v2097 = vadd.f32 0.0, %v2096
    %v2098 = vpop.f32.mrb[0].mxu0
    %v2099 = vpop.f32.mrb[0].mxu0
    %v2100 = vadd.f32 0.0, %v2099
    %v2101 = vpop.f32.mrb[0].mxu0
    %2102 = vmatprep.mubr.bf16.mxu0 %v1478
    %2103 = vmatmul.mubr.bf16.gmra.mrb[0].mxu0 %v1477
    %v2104 = vpop.f32.mrb[0].mxu0
    %v2105 = vadd.f32 0.0, %v2104
    %v2106 = vpop.f32.mrb[0].mxu0
    %v2107 = vpop.f32.mrb[0].mxu0
    %v2108 = vadd.f32 0.0, %v2107
    %v2109 = vpop.f32.mrb[0].mxu0
    %2110 = vmatprep.mubr.bf16.mxu0 %v1481
    %2111 = vmatmul.mubr.bf16.gmra.mrb[0].mxu0 %v1480
    %v2112 = vpop.f32.mrb[0].mxu0
    %v2113 = vadd.f32 0.0, %v2112
    %v2114 = vpop.f32.mrb[0].mxu0
    %v2115 = vpop.f32.mrb[0].mxu0
    %v2116 = vadd.f32 0.0, %v2115
    %v2117 = vpop.f32.mrb[0].mxu0
    %2118 = vmatprep.mubr.bf16.mxu0 %v1907
    %2119 = vmatmul.mubr.bf16.gmra.mrb[0].mxu0 %v1906
    %v2120 = vpop.f32.mrb[0].mxu0
    %v2121 = vadd.f32 0.0, %v2120
    %v2122 = vpop.f32.mrb[0].mxu0
    %v2123 = vpop.f32.mrb[0].mxu0
    %v2124 = vadd.f32 0.0, %v2123
    %v2125 = vpop.f32.mrb[0].mxu0
    %2126 = vmatprep.mubr.bf16.mxu0 %v1487
    %2127 = vmatmul.mubr.bf16.gmra.mrb[0].mxu0 %v1486
    %v2128 = vpop.f32.mrb[0].mxu0
    %v2129 = vadd.f32 0.0, %v2128
    %v2130 = vpop.f32.mrb[0].mxu0
    %v2131 = vpop.f32.mrb[0].mxu0
    %v2132 = vadd.f32 0.0, %v2131
    %v2133 = vpop.f32.mrb[0].mxu0
    %2134 = vmatprep.mubr.bf16.mxu0 %v1490
    %2135 = vmatmul.mubr.bf16.gmra.mrb[0].mxu0 %v1489
    %v2136 = vpop.f32.mrb[0].mxu0
    %v2137 = vadd.f32 0.0, %v2136
    %v2138 = vpop.f32.mrb[0].mxu0
    %v2139 = vpop.f32.mrb[0].mxu0
    %v2140 = vadd.f32 0.0, %v2139
    %v2141 = vpop.f32.mrb[0].mxu0
    %2142 = vmatprep.mubr.bf16.mxu0 %v1493
    %2143 = vmatmul.mubr.bf16.gmra.mrb[0].mxu0 %v1492
    %v2144 = vpop.f32.mrb[0].mxu0
    %v2145 = vadd.f32 0.0, %v2144
    %v2146 = vpop.f32.mrb[0].mxu0
    %v2147 = vpop.f32.mrb[0].mxu0
    %v2148 = vadd.f32 0.0, %v2147
    %v2149 = vpop.f32.mrb[0].mxu0
    %2150 = vmatprep.mubr.bf16.mxu0 %v1910
    %2151 = vmatmul.mubr.bf16.gmra.mrb[0].mxu0 %v1909
    %v2152 = vpop.f32.mrb[0].mxu0
    %v2153 = vadd.f32 0.0, %v2152
    %v2154 = vpop.f32.mrb[0].mxu0
    %v2155 = vpop.f32.mrb[0].mxu0
    %v2156 = vadd.f32 0.0, %v2155
    %v2157 = vpop.f32.mrb[0].mxu0
    %2158 = vdwg.mxu0
    %2159 = vmatprep.subr.bf16.mxu0 0
    %2160 = vmatpush1.bf16.msra.mxu0 %v2030
    %2161 = vmatprep.subr.bf16.mxu0 0
    %2162 = vmatpush1.bf16.msra.mxu0 %v2031
    %2163 = vmatprep.subr.bf16.mxu0 0
    %2164 = vmatpush1.bf16.msra.mxu0 %v2032
    %2165 = vmatprep.subr.bf16.mxu0 0
    %2166 = vmatpush1.bf16.msra.mxu0 %v2033
    %2167 = vmatprep.subr.bf16.mxu0 0
    %2168 = vmatpush1.bf16.msra.mxu0 %v2034
    %2169 = vmatprep.subr.bf16.mxu0 0
    %2170 = vmatpush1.bf16.msra.mxu0 %v2035
    %2171 = vmatprep.subr.bf16.mxu0 0
    %2172 = vmatpush1.bf16.msra.mxu0 %v2036
    %2173 = vmatprep.subr.bf16.mxu0 0
    %2174 = vmatpush1.bf16.msra.mxu0 %v2037
    %2175 = vmatprep.subr.bf16.mxu0 0
    %2176 = vmatpush1.bf16.msra.mxu0 0
    %2177 = vmatprep.subr.bf16.mxu0 0
    %2178 = vmatpush1.bf16.msra.mxu0 0
    %2179 = vmatprep.subr.bf16.mxu0 0
    %2180 = vmatpush1.bf16.msra.mxu0 0
    %2181 = vmatprep.subr.bf16.mxu0 0
    %2182 = vmatpush1.bf16.msra.mxu0 0
    %2183 = vmatprep.subr.bf16.mxu0 0
    %2184 = vmatpush1.bf16.msra.mxu0 0
    %2185 = vmatprep.subr.bf16.mxu0 0
    %2186 = vmatpush1.bf16.msra.mxu0 0
    %2187 = vmatprep.subr.bf16.mxu0 0
    %2188 = vmatpush1.bf16.msra.mxu0 0
    %2189 = vmatprep.subr.bf16.mxu0 0
    %2190 = vmatpush1.bf16.msra.mxu0 0
    %2191 = vmatprep.mubr.bf16.mxu0 0
    %2192 = vmatmul.mubr.bf16.gmra.mrb[0].mxu0 %v1476
    %v2193 = vpop.f32.mrb[0].mxu0
    %v2194 = vadd.f32 %v2097, %v2193
    %v2195 = vpop.f32.mrb[0].mxu0
    %v2196 = vpop.f32.mrb[0].mxu0
    %v2197 = vadd.f32 %v2100, %v2196
    %v2198 = vpop.f32.mrb[0].mxu0
    %2199 = vmatprep.mubr.bf16.mxu0 0
    %2200 = vmatmul.mubr.bf16.gmra.mrb[0].mxu0 %v1479
    %v2201 = vpop.f32.mrb[0].mxu0
    %v2202 = vadd.f32 %v2105, %v2201
    %v2203 = vpop.f32.mrb[0].mxu0
    %v2204 = vpop.f32.mrb[0].mxu0
    %v2205 = vadd.f32 %v2108, %v2204
    %v2206 = vpop.f32.mrb[0].mxu0
    %2207 = vmatprep.mubr.bf16.mxu0 0
    %2208 = vmatmul.mubr.bf16.gmra.mrb[0].mxu0 %v1482
    %v2209 = vpop.f32.mrb[0].mxu0
    %v2210 = vadd.f32 %v2113, %v2209
    %v2211 = vpop.f32.mrb[0].mxu0
    %v2212 = vpop.f32.mrb[0].mxu0
    %v2213 = vadd.f32 %v2116, %v2212
    %v2214 = vpop.f32.mrb[0].mxu0
    %2215 = vmatprep.mubr.bf16.mxu0 0
    %2216 = vmatmul.mubr.bf16.gmra.mrb[0].mxu0 %v1908
    %v2217 = vpop.f32.mrb[0].mxu0
    %v2218 = vadd.f32 %v2121, %v2217
    %v2219 = vpop.f32.mrb[0].mxu0
    %v2220 = vpop.f32.mrb[0].mxu0
    %v2221 = vadd.f32 %v2124, %v2220
    %v2222 = vpop.f32.mrb[0].mxu0
    %2223 = vmatprep.mubr.bf16.mxu0 0
    %2224 = vmatmul.mubr.bf16.gmra.mrb[0].mxu0 %v1488
    %v2225 = vpop.f32.mrb[0].mxu0
    %v2226 = vadd.f32 %v2129, %v2225
    %v2227 = vpop.f32.mrb[0].mxu0
    %v2228 = vpop.f32.mrb[0].mxu0
    %v2229 = vadd.f32 %v2132, %v2228
    %v2230 = vpop.f32.mrb[0].mxu0
    %2231 = vmatprep.mubr.bf16.mxu0 0
    %2232 = vmatmul.mubr.bf16.gmra.mrb[0].mxu0 %v1491
    %v2233 = vpop.f32.mrb[0].mxu0
    %v2234 = vadd.f32 %v2137, %v2233
    %v2235 = vpop.f32.mrb[0].mxu0
    %v2236 = vpop.f32.mrb[0].mxu0
    %v2237 = vadd.f32 %v2140, %v2236
    %v2238 = vpop.f32.mrb[0].mxu0
    %2239 = vmatprep.mubr.bf16.mxu0 0
    %2240 = vmatmul.mubr.bf16.gmra.mrb[0].mxu0 %v1494
    %v2241 = vpop.f32.mrb[0].mxu0
    %v2242 = vadd.f32 %v2145, %v2241
    %v2243 = vpop.f32.mrb[0].mxu0
    %v2244 = vpop.f32.mrb[0].mxu0
    %v2245 = vadd.f32 %v2148, %v2244
    %v2246 = vpop.f32.mrb[0].mxu0
    %2247 = vmatprep.mubr.bf16.mxu0 0
    %2248 = vmatmul.mubr.bf16.gmra.mrb[0].mxu0 %v1911
    %v2249 = vpop.f32.mrb[0].mxu0
    %v2250 = vadd.f32 %v2153, %v2249
    %v2251 = vpop.f32.mrb[0].mxu0
    %v2252 = vpop.f32.mrb[0].mxu0
    %v2253 = vadd.f32 %v2156, %v2252
    %v2254 = vpop.f32.mrb[0].mxu0
    %2255 = vdwg.mxu0
    %v2256 = vadd.f32 %v1795, %v2194
    %v2257 = vadd.f32 %v1798, %v2197
    %v2258 = vadd.f32 %v1803, %v2202
    %v2259 = vadd.f32 %v1806, %v2205
    %v2260 = vadd.f32 %v1811, %v2210
    %v2261 = vadd.f32 %v1814, %v2213
    %v2262 = vadd.f32 %v1819, %v2218
    %v2263 = vadd.f32 %v1822, %v2221
    %v2264 = vadd.f32 %v1827, %v2226
    %v2265 = vadd.f32 %v1830, %v2229
    %v2266 = vadd.f32 %v1835, %v2234
    %v2267 = vadd.f32 %v1838, %v2237
    %v2268 = vadd.f32 %v1843, %v2242
    %v2269 = vadd.f32 %v1846, %v2245
    %v2270 = vadd.f32 %v1851, %v2250
    %v2271 = vadd.f32 %v1854, %v2253
    %v2272 = vadd.f32 %v2256, %v2257
    %v2273 = vadd.f32 %v2272, %v2258
    %v2274 = vadd.f32 %v2273, %v2259
    %v2275 = vadd.f32 %v2274, %v2260
    %v2276 = vadd.f32 %v2275, %v2261
    %v2277 = vadd.f32 %v2276, %v2262
    %v2278 = vadd.f32 %v2277, %v2263
    %v2279 = vrot.slane %v2278, 4
    %v2280 = vadd.f32 %v2278, %v2279
    %v2281 = vrot.slane %v2280, 2
    %v2282 = vadd.f32 %v2280, %v2281
    %v2283 = vrot.slane %v2282, 1
    %v2284 = vadd.f32 %v2282, %v2283
    %v2285 = vadd.f32 %v2264, %v2265
    %v2286 = vadd.f32 %v2285, %v2266
    %v2287 = vadd.f32 %v2286, %v2267
    %v2288 = vadd.f32 %v2287, %v2268
    %v2289 = vadd.f32 %v2288, %v2269
    %v2290 = vadd.f32 %v2289, %v2270
    %v2291 = vadd.f32 %v2290, %v2271
    %v2292 = vrot.slane %v2291, 4
    %v2293 = vadd.f32 %v2291, %v2292
    %v2294 = vrot.slane %v2293, 2
    %v2295 = vadd.f32 %v2293, %v2294
    %v2296 = vrot.slane %v2295, 1
    %v2297 = vadd.f32 %v2295, %v2296
    %v2298 = vmul.f32 %v2256, %v2256
    %v2299 = vmul.f32 %v2257, %v2257
    %v2300 = vmul.f32 %v2258, %v2258
    %v2301 = vmul.f32 %v2259, %v2259
    %v2302 = vmul.f32 %v2260, %v2260
    %v2303 = vmul.f32 %v2261, %v2261
    %v2304 = vmul.f32 %v2262, %v2262
    %v2305 = vmul.f32 %v2263, %v2263
    %v2306 = vmul.f32 %v2264, %v2264
    %v2307 = vmul.f32 %v2265, %v2265
    %v2308 = vmul.f32 %v2266, %v2266
    %v2309 = vmul.f32 %v2267, %v2267
    %v2310 = vmul.f32 %v2268, %v2268
    %v2311 = vmul.f32 %v2269, %v2269
    %v2312 = vmul.f32 %v2270, %v2270
    %v2313 = vmul.f32 %v2271, %v2271
    %v2314 = vadd.f32 %v2298, %v2299
    %v2315 = vadd.f32 %v2314, %v2300
    %v2316 = vadd.f32 %v2315, %v2301
    %v2317 = vadd.f32 %v2316, %v2302
    %v2318 = vadd.f32 %v2317, %v2303
    %v2319 = vadd.f32 %v2318, %v2304
    %v2320 = vadd.f32 %v2319, %v2305
    %v2321 = vrot.slane %v2320, 4
    %v2322 = vadd.f32 %v2320, %v2321
    %v2323 = vrot.slane %v2322, 2
    %v2324 = vadd.f32 %v2322, %v2323
    %v2325 = vrot.slane %v2324, 1
    %v2326 = vadd.f32 %v2324, %v2325
    %v2327 = vadd.f32 %v2306, %v2307
    %v2328 = vadd.f32 %v2327, %v2308
    %v2329 = vadd.f32 %v2328, %v2309
    %v2330 = vadd.f32 %v2329, %v2310
    %v2331 = vadd.f32 %v2330, %v2311
    %v2332 = vadd.f32 %v2331, %v2312
    %v2333 = vadd.f32 %v2332, %v2313
    %v2334 = vrot.slane %v2333, 4
    %v2335 = vadd.f32 %v2333, %v2334
    %v2336 = vrot.slane %v2335, 2
    %v2337 = vadd.f32 %v2335, %v2336
    %v2338 = vrot.slane %v2337, 1
    %v2339 = vadd.f32 %v2337, %v2338
    %v2340 = vmul.f32 %v2284, 0.015625
    %v2341 = vmul.f32 %v2297, 0.015625
    %v2342 = vmul.f32 %v2326, 0.015625
    %v2343 = vmul.f32 %v2339, 0.015625
    %v2344 = vmul.f32 %v2340, %v2340
    %v2345 = vmul.f32 %v2341, %v2341
    %v2346 = vsub.f32 %v2342, %v2344
    %v2347 = vsub.f32 %v2343, %v2345
    %v2348 = vmax.f32 %v2346, 0.0
    %v2349 = vmax.f32 %v2347, 0.0
    %v2350 = vadd.f32 %v2348, 1e-05
    %v2351 = vadd.f32 %v2349, 1e-05
    %v2352 = vrsqrt.pop %v2350
    %v2353 = vrsqrt.pop %v2351
    %v2354 = vsub.f32 %v2256, %v2340
    %v2355 = vsub.f32 %v2257, %v2340
    %v2356 = vsub.f32 %v2258, %v2340
    %v2357 = vsub.f32 %v2259, %v2340
    %v2358 = vsub.f32 %v2260, %v2340
    %v2359 = vsub.f32 %v2261, %v2340
    %v2360 = vsub.f32 %v2262, %v2340
    %v2361 = vsub.f32 %v2263, %v2340
    %v2362 = vsub.f32 %v2264, %v2341
    %v2363 = vsub.f32 %v2265, %v2341
    %v2364 = vsub.f32 %v2266, %v2341
    %v2365 = vsub.f32 %v2267, %v2341
    %v2366 = vsub.f32 %v2268, %v2341
    %v2367 = vsub.f32 %v2269, %v2341
    %v2368 = vsub.f32 %v2270, %v2341
    %v2369 = vsub.f32 %v2271, %v2341
    %v2370 = vmul.f32 %v2354, %v2352
    %v2371 = vmul.f32 %v2355, %v2352
    %v2372 = vmul.f32 %v2356, %v2352
    %v2373 = vmul.f32 %v2357, %v2352
    %v2374 = vmul.f32 %v2358, %v2352
    %v2375 = vmul.f32 %v2359, %v2352
    %v2376 = vmul.f32 %v2360, %v2352
    %v2377 = vmul.f32 %v2361, %v2352
    %v2378 = vmul.f32 %v2362, %v2353
    %v2379 = vmul.f32 %v2363, %v2353
    %v2380 = vmul.f32 %v2364, %v2353
    %v2381 = vmul.f32 %v2365, %v2353
    %v2382 = vmul.f32 %v2366, %v2353
    %v2383 = vmul.f32 %v2367, %v2353
    %v2384 = vmul.f32 %v2368, %v2353
    %v2385 = vmul.f32 %v2369, %v2353
    %v2386 = vmax.f32 %v2370, 0.0
    %v2387 = vmax.f32 %v2371, 0.0
    %v2388 = vmax.f32 %v2372, 0.0
    %v2389 = vmax.f32 %v2373, 0.0
    %v2390 = vmax.f32 %v2374, 0.0
    %v2391 = vmax.f32 %v2375, 0.0
    %v2392 = vmax.f32 %v2376, 0.0
    %v2393 = vmax.f32 %v2377, 0.0
    %v2394 = vmax.f32 %v2378, 0.0
    %v2395 = vmax.f32 %v2379, 0.0
    %v2396 = vmax.f32 %v2380, 0.0
    %v2397 = vmax.f32 %v2381, 0.0
    %v2398 = vmax.f32 %v2382, 0.0
    %v2399 = vmax.f32 %v2383, 0.0
    %v2400 = vmax.f32 %v2384, 0.0
    %v2401 = vmax.f32 %v2385, 0.0
    %v2402 = vpack.c.bf16 %v2386, %v2386
    %v2403 = vpack.c.bf16 %v2387, %v2387
    %v2404 = vpack.c.bf16 %v2388, %v2388
    %v2405 = vpack.c.bf16 %v2389, %v2389
    %v2406 = vpack.c.bf16 %v2390, %v2390
    %v2407 = vpack.c.bf16 %v2391, %v2391
    %v2408 = vpack.c.bf16 %v2392, %v2392
    %v2409 = vpack.c.bf16 %v2393, %v2393
    %v2410 = vpack.c.bf16 %v2394, %v2394
    %v2411 = vpack.c.bf16 %v2395, %v2395
    %v2412 = vpack.c.bf16 %v2396, %v2396
    %v2413 = vpack.c.bf16 %v2397, %v2397
    %v2414 = vpack.c.bf16 %v2398, %v2398
    %v2415 = vpack.c.bf16 %v2399, %v2399
    %v2416 = vpack.c.bf16 %v2400, %v2400
    %v2417 = vpack.c.bf16 %v2401, %v2401
    %v2434 = vunpack.c.l.b16 %v2402
    %v2435 = vunpack.c.l.b16 %v2403
    %v2436 = vunpack.c.l.b16 %v2404
    %v2437 = vunpack.c.l.b16 %v2405
    %v2438 = vunpack.c.l.b16 %v2406
    %v2439 = vunpack.c.l.b16 %v2407
    %v2440 = vunpack.c.l.b16 %v2408
    %v2441 = vunpack.c.l.b16 %v2409
    %v2442 = vunpack.c.l.b16 %v2410
    %v2443 = vunpack.c.l.b16 %v2411
    %v2444 = vunpack.c.l.b16 %v2412
    %v2445 = vunpack.c.l.b16 %v2413
    %v2446 = vunpack.c.l.b16 %v2414
    %v2447 = vunpack.c.l.b16 %v2415
    %v2448 = vunpack.c.l.b16 %v2416
    %v2449 = vunpack.c.l.b16 %v2417
    %v2450 = vpack.c.b16 %v2434, %v2434
    %v2451 = vpack.c.b16 %v2435, %v2435
    %v2452 = vpack.c.b16 %v2436, %v2436
    %v2453 = vpack.c.b16 %v2437, %v2437
    %v2454 = vpack.c.b16 %v2438, %v2438
    %v2455 = vpack.c.b16 %v2439, %v2439
    %v2456 = vpack.c.b16 %v2440, %v2440
    %v2457 = vpack.c.b16 %v2441, %v2441
    %v2458 = vpack.c.b16 %v2442, %v2442
    %v2459 = vpack.c.b16 %v2443, %v2443
    %v2460 = vpack.c.b16 %v2444, %v2444
    %v2461 = vpack.c.b16 %v2445, %v2445
    %v2462 = vpack.c.b16 %v2446, %v2446
    %v2463 = vpack.c.b16 %v2447, %v2447
    %v2464 = vpack.c.b16 %v2448, %v2448
    %v2465 = vpack.c.b16 %v2449, %v2449
    %v2467 = vshrl.u32 %v2450, 16
    %v2469 = vrot.slane %v2467, 7
    %v2470 = vshll.u32 %v2450, 16
    %v2472 = vor.u32 %v2469, %v2470
    %v2473 = vrot.slane %v2469, 4
    %v2475 = vshrl.u32 %v2451, 16
    %v2477 = vrot.slane %v2475, 7
    %v2478 = vshll.u32 %v2451, 16
    %v2480 = vor.u32 %v2477, %v2478
    %v2481 = vrot.slane %v2477, 4
    %v2483 = vshrl.u32 %v2452, 16
    %v2485 = vrot.slane %v2483, 7
    %v2486 = vshll.u32 %v2452, 16
    %v2488 = vor.u32 %v2485, %v2486
    %v2489 = vrot.slane %v2485, 4
    %v2491 = vshrl.u32 %v2453, 16
    %v2493 = vrot.slane %v2491, 7
    %v2494 = vshll.u32 %v2453, 16
    %v2496 = vor.u32 %v2493, %v2494
    %v2497 = vrot.slane %v2493, 4
    %v2499 = vshrl.u32 %v2454, 16
    %v2501 = vrot.slane %v2499, 7
    %v2502 = vshll.u32 %v2454, 16
    %v2504 = vor.u32 %v2501, %v2502
    %v2505 = vrot.slane %v2501, 4
    %v2507 = vshrl.u32 %v2455, 16
    %v2509 = vrot.slane %v2507, 7
    %v2510 = vshll.u32 %v2455, 16
    %v2512 = vor.u32 %v2509, %v2510
    %v2513 = vrot.slane %v2509, 4
    %v2515 = vshrl.u32 %v2456, 16
    %v2517 = vrot.slane %v2515, 7
    %v2518 = vshll.u32 %v2456, 16
    %v2520 = vor.u32 %v2517, %v2518
    %v2521 = vrot.slane %v2517, 4
    %v2523 = vshrl.u32 %v2457, 16
    %v2525 = vrot.slane %v2523, 7
    %v2526 = vshll.u32 %v2457, 16
    %v2528 = vor.u32 %v2525, %v2526
    %v2529 = vrot.slane %v2525, 4
    %v2531 = vshrl.u32 %v2458, 16
    %v2533 = vrot.slane %v2531, 7
    %v2534 = vshll.u32 %v2458, 16
    %v2536 = vor.u32 %v2533, %v2534
    %v2537 = vrot.slane %v2533, 4
    %v2539 = vshrl.u32 %v2459, 16
    %v2541 = vrot.slane %v2539, 7
    %v2542 = vshll.u32 %v2459, 16
    %v2544 = vor.u32 %v2541, %v2542
    %v2545 = vrot.slane %v2541, 4
    %v2547 = vshrl.u32 %v2460, 16
    %v2549 = vrot.slane %v2547, 7
    %v2550 = vshll.u32 %v2460, 16
    %v2552 = vor.u32 %v2549, %v2550
    %v2553 = vrot.slane %v2549, 4
    %v2555 = vshrl.u32 %v2461, 16
    %v2557 = vrot.slane %v2555, 7
    %v2558 = vshll.u32 %v2461, 16
    %v2560 = vor.u32 %v2557, %v2558
    %v2561 = vrot.slane %v2557, 4
    %v2563 = vshrl.u32 %v2462, 16
    %v2565 = vrot.slane %v2563, 7
    %v2566 = vshll.u32 %v2462, 16
    %v2568 = vor.u32 %v2565, %v2566
    %v2569 = vrot.slane %v2565, 4
    %v2571 = vshrl.u32 %v2463, 16
    %v2573 = vrot.slane %v2571, 7
    %v2574 = vshll.u32 %v2463, 16
    %v2576 = vor.u32 %v2573, %v2574
    %v2577 = vrot.slane %v2573, 4
    %v2579 = vshrl.u32 %v2464, 16
    %v2581 = vrot.slane %v2579, 7
    %v2582 = vshll.u32 %v2464, 16
    %v2584 = vor.u32 %v2581, %v2582
    %v2585 = vrot.slane %v2581, 4
    %v2587 = vshrl.u32 %v2465, 16
    %v2589 = vrot.slane %v2587, 7
    %v2590 = vshll.u32 %v2465, 16
    %v2592 = vor.u32 %v2589, %v2590
    %v2593 = vrot.slane %v2589, 4
    %vm2626 = vcmask 1043456
    %vm2627 = vmand %vm2626, %vm292
    %v2628 = vsel %vm2627, %v2472, %v652
    %2629 = vst [vmem:[#allocation2] sm:$0xf] %v2628
    %v2630 = vld [vmem:[#allocation2 + $0x4] sm:$0x1]
    %v2631 = vsel %vm474, %v2473, %v2630
    %2632 = vst [vmem:[#allocation2 + $0x4] sm:$0x1] %v2631
    %v2633 = vld [vmem:[#allocation2 + $0x8] sm:$0xf]
    %v2634 = vsel %vm2627, %v2480, %v2633
    %2635 = vst [vmem:[#allocation2 + $0x8] sm:$0xf] %v2634
    %v2636 = vld [vmem:[#allocation2 + $0xc] sm:$0x1]
    %v2637 = vsel %vm474, %v2481, %v2636
    %2638 = vst [vmem:[#allocation2 + $0xc] sm:$0x1] %v2637
    %v2639 = vld [vmem:[#allocation2 + $0x10] sm:$0xf]
    %v2640 = vsel %vm2627, %v2488, %v2639
    %2641 = vst [vmem:[#allocation2 + $0x10] sm:$0xf] %v2640
    %v2642 = vld [vmem:[#allocation2 + $0x14] sm:$0x1]
    %v2643 = vsel %vm474, %v2489, %v2642
    %2644 = vst [vmem:[#allocation2 + $0x14] sm:$0x1] %v2643
    %v2645 = vld [vmem:[#allocation2 + $0x18] sm:$0xf]
    %v2646 = vsel %vm2627, %v2496, %v2645
    %2647 = vst [vmem:[#allocation2 + $0x18] sm:$0xf] %v2646
    %v2648 = vld [vmem:[#allocation2 + $0x1c] sm:$0x1]
    %v2649 = vsel %vm474, %v2497, %v2648
    %2650 = vst [vmem:[#allocation2 + $0x1c] sm:$0x1] %v2649
    %v2651 = vld [vmem:[#allocation2 + $0x20] sm:$0xf]
    %v2652 = vsel %vm2627, %v2504, %v2651
    %2653 = vst [vmem:[#allocation2 + $0x20] sm:$0xf] %v2652
    %v2654 = vld [vmem:[#allocation2 + $0x24] sm:$0x1]
    %v2655 = vsel %vm474, %v2505, %v2654
    %2656 = vst [vmem:[#allocation2 + $0x24] sm:$0x1] %v2655
    %v2657 = vld [vmem:[#allocation2 + $0x28] sm:$0xf]
    %v2658 = vsel %vm2627, %v2512, %v2657
    %2659 = vst [vmem:[#allocation2 + $0x28] sm:$0xf] %v2658
    %v2660 = vld [vmem:[#allocation2 + $0x2c] sm:$0x1]
    %v2661 = vsel %vm474, %v2513, %v2660
    %2662 = vst [vmem:[#allocation2 + $0x2c] sm:$0x1] %v2661
    %v2663 = vld [vmem:[#allocation2 + $0x30] sm:$0xf]
    %v2664 = vsel %vm2627, %v2520, %v2663
    %2665 = vst [vmem:[#allocation2 + $0x30] sm:$0xf] %v2664
    %v2666 = vld [vmem:[#allocation2 + $0x34] sm:$0x1]
    %v2667 = vsel %vm474, %v2521, %v2666
    %2668 = vst [vmem:[#allocation2 + $0x34] sm:$0x1] %v2667
    %v2669 = vld [vmem:[#allocation2 + $0x38] sm:$0xf]
    %v2670 = vsel %vm2627, %v2528, %v2669
    %2671 = vst [vmem:[#allocation2 + $0x38] sm:$0xf] %v2670
    %v2672 = vld [vmem:[#allocation2 + $0x3c] sm:$0x1]
    %v2673 = vsel %vm474, %v2529, %v2672
    %2674 = vst [vmem:[#allocation2 + $0x3c] sm:$0x1] %v2673
    %v2675 = vld [vmem:[#allocation2 + $0x40] sm:$0xf]
    %v2676 = vsel %vm2627, %v2536, %v2675
    %2677 = vst [vmem:[#allocation2 + $0x40] sm:$0xf] %v2676
    %v2678 = vld [vmem:[#allocation2 + $0x44] sm:$0x1]
    %v2679 = vsel %vm474, %v2537, %v2678
    %2680 = vst [vmem:[#allocation2 + $0x44] sm:$0x1] %v2679
    %v2681 = vld [vmem:[#allocation2 + $0x48] sm:$0xf]
    %v2682 = vsel %vm2627, %v2544, %v2681
    %2683 = vst [vmem:[#allocation2 + $0x48] sm:$0xf] %v2682
    %v2684 = vld [vmem:[#allocation2 + $0x4c] sm:$0x1]
    %v2685 = vsel %vm474, %v2545, %v2684
    %2686 = vst [vmem:[#allocation2 + $0x4c] sm:$0x1] %v2685
    %v2687 = vld [vmem:[#allocation2 + $0x50] sm:$0xf]
    %v2688 = vsel %vm2627, %v2552, %v2687
    %2689 = vst [vmem:[#allocation2 + $0x50] sm:$0xf] %v2688
    %v2690 = vld [vmem:[#allocation2 + $0x54] sm:$0x1]
    %v2691 = vsel %vm474, %v2553, %v2690
    %2692 = vst [vmem:[#allocation2 + $0x54] sm:$0x1] %v2691
    %v2693 = vld [vmem:[#allocation2 + $0x58] sm:$0xf]
    %v2694 = vsel %vm2627, %v2560, %v2693
    %2695 = vst [vmem:[#allocation2 + $0x58] sm:$0xf] %v2694
    %v2696 = vld [vmem:[#allocation2 + $0x5c] sm:$0x1]
    %v2697 = vsel %vm474, %v2561, %v2696
    %2698 = vst [vmem:[#allocation2 + $0x5c] sm:$0x1] %v2697
    %v2699 = vld [vmem:[#allocation2 + $0x60] sm:$0xf]
    %v2700 = vsel %vm2627, %v2568, %v2699
    %2701 = vst [vmem:[#allocation2 + $0x60] sm:$0xf] %v2700
    %v2702 = vld [vmem:[#allocation2 + $0x64] sm:$0x1]
    %v2703 = vsel %vm474, %v2569, %v2702
    %2704 = vst [vmem:[#allocation2 + $0x64] sm:$0x1] %v2703
    %v2705 = vld [vmem:[#allocation2 + $0x68] sm:$0xf]
    %v2706 = vsel %vm2627, %v2576, %v2705
    %2707 = vst [vmem:[#allocation2 + $0x68] sm:$0xf] %v2706
    %v2708 = vld [vmem:[#allocation2 + $0x6c] sm:$0x1]
    %v2709 = vsel %vm474, %v2577, %v2708
    %2710 = vst [vmem:[#allocation2 + $0x6c] sm:$0x1] %v2709
    %v2711 = vld [vmem:[#allocation2 + $0x70] sm:$0xf]
    %v2712 = vsel %vm2627, %v2584, %v2711
    %2713 = vst [vmem:[#allocation2 + $0x70] sm:$0xf] %v2712
    %v2714 = vld [vmem:[#allocation2 + $0x74] sm:$0x1]
    %v2715 = vsel %vm474, %v2585, %v2714
    %2716 = vst [vmem:[#allocation2 + $0x74] sm:$0x1] %v2715
    %v2717 = vld [vmem:[#allocation2 + $0x78] sm:$0xf]
    %v2718 = vsel %vm2627, %v2592, %v2717
    %2719 = vst [vmem:[#allocation2 + $0x78] sm:$0xf] %v2718
    %v2720 = vld [vmem:[#allocation2 + $0x7c] sm:$0x1]
    %v2721 = vsel %vm474, %v2593, %v2720
    %2722 = vst [vmem:[#allocation2 + $0x7c] sm:$0x1] %v2721
    %v2723 = vld [vmem:[#allocation2] sm:$0x2]
    %v2724 = vld [vmem:[#allocation2 + $0x8] sm:$0x2]
    %v2725 = vld [vmem:[#allocation2 + $0x10] sm:$0x2]
    %v2726 = vld [vmem:[#allocation2 + $0x18] sm:$0x2]
    %v2727 = vld [vmem:[#allocation2 + $0x20] sm:$0x2]
    %v2728 = vld [vmem:[#allocation2 + $0x28] sm:$0x2]
    %v2729 = vld [vmem:[#allocation2 + $0x30] sm:$0x2]
    %v2730 = vld [vmem:[#allocation2 + $0x38] sm:$0x2]
    %v2731 = vld [vmem:[#allocation2 + $0x40] sm:$0x2]
    %v2732 = vld [vmem:[#allocation2 + $0x48] sm:$0x2]
    %v2733 = vld [vmem:[#allocation2 + $0x50] sm:$0x2]
    %v2734 = vld [vmem:[#allocation2 + $0x58] sm:$0x2]
    %v2735 = vld [vmem:[#allocation2 + $0x60] sm:$0x2]
    %v2736 = vld [vmem:[#allocation2 + $0x68] sm:$0x2]
    %v2737 = vld [vmem:[#allocation2 + $0x70] sm:$0x2]
    %v2738 = vld [vmem:[#allocation2 + $0x78] sm:$0x2]
    %v2755 = vrot.slane %v2723, 5
    %v2756 = vrot.slane %v2755, 4
    %v2757 = vrot.slane %v2724, 5
    %v2758 = vrot.slane %v2757, 4
    %v2759 = vrot.slane %v2725, 5
    %v2760 = vrot.slane %v2759, 4
    %v2761 = vrot.slane %v2726, 5
    %v2762 = vrot.slane %v2761, 4
    %v2763 = vrot.slane %v2727, 5
    %v2764 = vrot.slane %v2763, 4
    %v2765 = vrot.slane %v2728, 5
    %v2766 = vrot.slane %v2765, 4
    %v2767 = vrot.slane %v2729, 5
    %v2768 = vrot.slane %v2767, 4
    %v2769 = vrot.slane %v2730, 5
    %v2770 = vrot.slane %v2769, 4
    %v2771 = vrot.slane %v2731, 5
    %v2772 = vrot.slane %v2771, 4
    %v2773 = vrot.slane %v2732, 5
    %v2774 = vrot.slane %v2773, 4
    %v2775 = vrot.slane %v2733, 5
    %v2776 = vrot.slane %v2775, 4
    %v2777 = vrot.slane %v2734, 5
    %v2778 = vrot.slane %v2777, 4
    %v2779 = vrot.slane %v2735, 5
    %v2780 = vrot.slane %v2779, 4
    %v2781 = vrot.slane %v2736, 5
    %v2782 = vrot.slane %v2781, 4
    %v2783 = vrot.slane %v2737, 5
    %v2784 = vrot.slane %v2783, 4
    %v2785 = vrot.slane %v2738, 5
    %v2786 = vrot.slane %v2785, 4
    %v2803 = vld [vmem:[#allocation2] sm:$0x1]
    %v2804 = vsel %vm474, %v2756, %v2803
    %2805 = vst [vmem:[#allocation2] sm:$0x1] %v2804
    %v2806 = vld [vmem:[#allocation2 + $0x8] sm:$0x1]
    %v2807 = vsel %vm474, %v2758, %v2806
    %2808 = vst [vmem:[#allocation2 + $0x8] sm:$0x1] %v2807
    %v2809 = vld [vmem:[#allocation2 + $0x10] sm:$0x1]
    %v2810 = vsel %vm474, %v2760, %v2809
    %2811 = vst [vmem:[#allocation2 + $0x10] sm:$0x1] %v2810
    %v2812 = vld [vmem:[#allocation2 + $0x18] sm:$0x1]
    %v2813 = vsel %vm474, %v2762, %v2812
    %2814 = vst [vmem:[#allocation2 + $0x18] sm:$0x1] %v2813
    %v2815 = vld [vmem:[#allocation2 + $0x20] sm:$0x1]
    %v2816 = vsel %vm474, %v2764, %v2815
    %2817 = vst [vmem:[#allocation2 + $0x20] sm:$0x1] %v2816
    %v2818 = vld [vmem:[#allocation2 + $0x28] sm:$0x1]
    %v2819 = vsel %vm474, %v2766, %v2818
    %2820 = vst [vmem:[#allocation2 + $0x28] sm:$0x1] %v2819
    %v2821 = vld [vmem:[#allocation2 + $0x30] sm:$0x1]
    %v2822 = vsel %vm474, %v2768, %v2821
    %2823 = vst [vmem:[#allocation2 + $0x30] sm:$0x1] %v2822
    %v2824 = vld [vmem:[#allocation2 + $0x38] sm:$0x1]
    %v2825 = vsel %vm474, %v2770, %v2824
    %2826 = vst [vmem:[#allocation2 + $0x38] sm:$0x1] %v2825
    %v2827 = vld [vmem:[#allocation2 + $0x40] sm:$0x1]
    %v2828 = vsel %vm474, %v2772, %v2827
    %2829 = vst [vmem:[#allocation2 + $0x40] sm:$0x1] %v2828
    %v2830 = vld [vmem:[#allocation2 + $0x48] sm:$0x1]
    %v2831 = vsel %vm474, %v2774, %v2830
    %2832 = vst [vmem:[#allocation2 + $0x48] sm:$0x1] %v2831
    %v2833 = vld [vmem:[#allocation2 + $0x50] sm:$0x1]
    %v2834 = vsel %vm474, %v2776, %v2833
    %2835 = vst [vmem:[#allocation2 + $0x50] sm:$0x1] %v2834
    %v2836 = vld [vmem:[#allocation2 + $0x58] sm:$0x1]
    %v2837 = vsel %vm474, %v2778, %v2836
    %2838 = vst [vmem:[#allocation2 + $0x58] sm:$0x1] %v2837
    %v2839 = vld [vmem:[#allocation2 + $0x60] sm:$0x1]
    %v2840 = vsel %vm474, %v2780, %v2839
    %2841 = vst [vmem:[#allocation2 + $0x60] sm:$0x1] %v2840
    %v2842 = vld [vmem:[#allocation2 + $0x68] sm:$0x1]
    %v2843 = vsel %vm474, %v2782, %v2842
    %2844 = vst [vmem:[#allocation2 + $0x68] sm:$0x1] %v2843
    %v2845 = vld [vmem:[#allocation2 + $0x70] sm:$0x1]
    %v2846 = vsel %vm474, %v2784, %v2845
    %2847 = vst [vmem:[#allocation2 + $0x70] sm:$0x1] %v2846
    %v2848 = vld [vmem:[#allocation2 + $0x78] sm:$0x1]
    %v2849 = vsel %vm474, %v2786, %v2848
    %2850 = vst [vmem:[#allocation2 + $0x78] sm:$0x1] %v2849
    %v2851 = vld [vmem:[#allocation2] sm:$0x8]
    %v2852 = vld [vmem:[#allocation2 + $0x8] sm:$0x8]
    %v2853 = vld [vmem:[#allocation2 + $0x10] sm:$0x8]
    %v2854 = vld [vmem:[#allocation2 + $0x18] sm:$0x8]
    %v2855 = vld [vmem:[#allocation2 + $0x20] sm:$0x8]
    %v2856 = vld [vmem:[#allocation2 + $0x28] sm:$0x8]
    %v2857 = vld [vmem:[#allocation2 + $0x30] sm:$0x8]
    %v2858 = vld [vmem:[#allocation2 + $0x38] sm:$0x8]
    %v2859 = vld [vmem:[#allocation2 + $0x40] sm:$0x8]
    %v2860 = vld [vmem:[#allocation2 + $0x48] sm:$0x8]
    %v2861 = vld [vmem:[#allocation2 + $0x50] sm:$0x8]
    %v2862 = vld [vmem:[#allocation2 + $0x58] sm:$0x8]
    %v2863 = vld [vmem:[#allocation2 + $0x60] sm:$0x8]
    %v2864 = vld [vmem:[#allocation2 + $0x68] sm:$0x8]
    %v2865 = vld [vmem:[#allocation2 + $0x70] sm:$0x8]
    %v2866 = vld [vmem:[#allocation2 + $0x78] sm:$0x8]
    %v2883 = vrot.slane %v2851, 7
    %v2884 = vrot.slane %v2883, 4
    %v2885 = vrot.slane %v2852, 7
    %v2886 = vrot.slane %v2885, 4
    %v2887 = vrot.slane %v2853, 7
    %v2888 = vrot.slane %v2887, 4
    %v2889 = vrot.slane %v2854, 7
    %v2890 = vrot.slane %v2889, 4
    %v2891 = vrot.slane %v2855, 7
    %v2892 = vrot.slane %v2891, 4
    %v2893 = vrot.slane %v2856, 7
    %v2894 = vrot.slane %v2893, 4
    %v2895 = vrot.slane %v2857, 7
    %v2896 = vrot.slane %v2895, 4
    %v2897 = vrot.slane %v2858, 7
    %v2898 = vrot.slane %v2897, 4
    %v2899 = vrot.slane %v2859, 7
    %v2900 = vrot.slane %v2899, 4
    %v2901 = vrot.slane %v2860, 7
    %v2902 = vrot.slane %v2901, 4
    %v2903 = vrot.slane %v2861, 7
    %v2904 = vrot.slane %v2903, 4
    %v2905 = vrot.slane %v2862, 7
    %v2906 = vrot.slane %v2905, 4
    %v2907 = vrot.slane %v2863, 7
    %v2908 = vrot.slane %v2907, 4
    %v2909 = vrot.slane %v2864, 7
    %v2910 = vrot.slane %v2909, 4
    %v2911 = vrot.slane %v2865, 7
    %v2912 = vrot.slane %v2911, 4
    %v2913 = vrot.slane %v2866, 7
    %v2914 = vrot.slane %v2913, 4
    %v2931 = vld [vmem:[#allocation2 + $0x4] sm:$0x1]
    %v2932 = vsel %vm603, %v2884, %v2931
    %2933 = vst [vmem:[#allocation2 + $0x4] sm:$0x1] %v2932
    %v2934 = vld [vmem:[#allocation2 + $0xc] sm:$0x1]
    %v2935 = vsel %vm603, %v2886, %v2934
    %2936 = vst [vmem:[#allocation2 + $0xc] sm:$0x1] %v2935
    %v2937 = vld [vmem:[#allocation2 + $0x14] sm:$0x1]
    %v2938 = vsel %vm603, %v2888, %v2937
    %2939 = vst [vmem:[#allocation2 + $0x14] sm:$0x1] %v2938
    %v2940 = vld [vmem:[#allocation2 + $0x1c] sm:$0x1]
    %v2941 = vsel %vm603, %v2890, %v2940
    %2942 = vst [vmem:[#allocation2 + $0x1c] sm:$0x1] %v2941
    %v2943 = vld [vmem:[#allocation2 + $0x24] sm:$0x1]
    %v2944 = vsel %vm603, %v2892, %v2943
    %2945 = vst [vmem:[#allocation2 + $0x24] sm:$0x1] %v2944
    %v2946 = vld [vmem:[#allocation2 + $0x2c] sm:$0x1]
    %v2947 = vsel %vm603, %v2894, %v2946
    %2948 = vst [vmem:[#allocation2 + $0x2c] sm:$0x1] %v2947
    %v2949 = vld [vmem:[#allocation2 + $0x34] sm:$0x1]
    %v2950 = vsel %vm603, %v2896, %v2949
    %2951 = vst [vmem:[#allocation2 + $0x34] sm:$0x1] %v2950
    %v2952 = vld [vmem:[#allocation2 + $0x3c] sm:$0x1]
    %v2953 = vsel %vm603, %v2898, %v2952
    %2954 = vst [vmem:[#allocation2 + $0x3c] sm:$0x1] %v2953
    %v2955 = vld [vmem:[#allocation2 + $0x44] sm:$0x1]
    %v2956 = vsel %vm603, %v2900, %v2955
    %2957 = vst [vmem:[#allocation2 + $0x44] sm:$0x1] %v2956
    %v2958 = vld [vmem:[#allocation2 + $0x4c] sm:$0x1]
    %v2959 = vsel %vm603, %v2902, %v2958
    %2960 = vst [vmem:[#allocation2 + $0x4c] sm:$0x1] %v2959
    %v2961 = vld [vmem:[#allocation2 + $0x54] sm:$0x1]
    %v2962 = vsel %vm603, %v2904, %v2961
    %2963 = vst [vmem:[#allocation2 + $0x54] sm:$0x1] %v2962
    %v2964 = vld [vmem:[#allocation2 + $0x5c] sm:$0x1]
    %v2965 = vsel %vm603, %v2906, %v2964
    %2966 = vst [vmem:[#allocation2 + $0x5c] sm:$0x1] %v2965
    %v2967 = vld [vmem:[#allocation2 + $0x64] sm:$0x1]
    %v2968 = vsel %vm603, %v2908, %v2967
    %2969 = vst [vmem:[#allocation2 + $0x64] sm:$0x1] %v2968
    %v2970 = vld [vmem:[#allocation2 + $0x6c] sm:$0x1]
    %v2971 = vsel %vm603, %v2910, %v2970
    %2972 = vst [vmem:[#allocation2 + $0x6c] sm:$0x1] %v2971
    %v2973 = vld [vmem:[#allocation2 + $0x74] sm:$0x1]
    %v2974 = vsel %vm603, %v2912, %v2973
    %2975 = vst [vmem:[#allocation2 + $0x74] sm:$0x1] %v2974
    %v2976 = vld [vmem:[#allocation2 + $0x7c] sm:$0x1]
    %v2977 = vsel %vm603, %v2914, %v2976
    %2978 = vst [vmem:[#allocation2 + $0x7c] sm:$0x1] %v2977
    %v2979 = vld [vmem:[#allocation2] sm:$0xf]
    %v2980 = vld [vmem:[#allocation2 + $0x8] sm:$0xf]
    %v2981 = vld [vmem:[#allocation2 + $0x10] sm:$0xf]
    %v2982 = vld [vmem:[#allocation2 + $0x18] sm:$0xf]
    %v2983 = vld [vmem:[#allocation2 + $0x20] sm:$0xf]
    %v2984 = vld [vmem:[#allocation2 + $0x28] sm:$0xf]
    %v2985 = vld [vmem:[#allocation2 + $0x30] sm:$0xf]
    %v2986 = vld [vmem:[#allocation2 + $0x38] sm:$0xf]
    %v2987 = vld [vmem:[#allocation2 + $0x40] sm:$0xf]
    %v2988 = vld [vmem:[#allocation2 + $0x48] sm:$0xf]
    %v2989 = vld [vmem:[#allocation2 + $0x50] sm:$0xf]
    %v2990 = vld [vmem:[#allocation2 + $0x58] sm:$0xf]
    %v2991 = vld [vmem:[#allocation2 + $0x60] sm:$0xf]
    %v2992 = vld [vmem:[#allocation2 + $0x68] sm:$0xf]
    %v2993 = vld [vmem:[#allocation2 + $0x70] sm:$0xf]
    %v2994 = vld [vmem:[#allocation2 + $0x78] sm:$0xf]
    %v2995 = vld [vmem:[#allocation2 + $0x4] sm:$0x1]
    %v2996 = vld [vmem:[#allocation2 + $0xc] sm:$0x1]
    %v2997 = vld [vmem:[#allocation2 + $0x14] sm:$0x1]
    %v2998 = vld [vmem:[#allocation2 + $0x1c] sm:$0x1]
    %v2999 = vld [vmem:[#allocation2 + $0x24] sm:$0x1]
    %v3000 = vld [vmem:[#allocation2 + $0x2c] sm:$0x1]
    %v3001 = vld [vmem:[#allocation2 + $0x34] sm:$0x1]
    %v3002 = vld [vmem:[#allocation2 + $0x3c] sm:$0x1]
    %v3003 = vld [vmem:[#allocation2 + $0x44] sm:$0x1]
    %v3004 = vld [vmem:[#allocation2 + $0x4c] sm:$0x1]
    %v3005 = vld [vmem:[#allocation2 + $0x54] sm:$0x1]
    %v3006 = vld [vmem:[#allocation2 + $0x5c] sm:$0x1]
    %v3007 = vld [vmem:[#allocation2 + $0x64] sm:$0x1]
    %v3008 = vld [vmem:[#allocation2 + $0x6c] sm:$0x1]
    %v3009 = vld [vmem:[#allocation2 + $0x74] sm:$0x1]
    %v3010 = vld [vmem:[#allocation2 + $0x7c] sm:$0x1]
    %v3011 = vld [vmem:[#allocation2] sm:$0xe]
    %v3012 = vld [vmem:[#allocation2 + $0x8] sm:$0xe]
    %v3013 = vld [vmem:[#allocation2 + $0x10] sm:$0xe]
    %v3014 = vld [vmem:[#allocation2 + $0x18] sm:$0xe]
    %v3015 = vld [vmem:[#allocation2 + $0x20] sm:$0xe]
    %v3016 = vld [vmem:[#allocation2 + $0x28] sm:$0xe]
    %v3017 = vld [vmem:[#allocation2 + $0x30] sm:$0xe]
    %v3018 = vld [vmem:[#allocation2 + $0x38] sm:$0xe]
    %v3019 = vld [vmem:[#allocation2 + $0x40] sm:$0xe]
    %v3020 = vld [vmem:[#allocation2 + $0x48] sm:$0xe]
    %v3021 = vld [vmem:[#allocation2 + $0x50] sm:$0xe]
    %v3022 = vld [vmem:[#allocation2 + $0x58] sm:$0xe]
    %v3023 = vld [vmem:[#allocation2 + $0x60] sm:$0xe]
    %v3024 = vld [vmem:[#allocation2 + $0x68] sm:$0xe]
    %v3025 = vld [vmem:[#allocation2 + $0x70] sm:$0xe]
    %v3026 = vld [vmem:[#allocation2 + $0x78] sm:$0xe]
    %v3059 = vunpack.c.l.b16 %v2979
    %v3060 = vunpack.c.l.b16 %v2995
    %v3061 = vunpack.c.l.b16 %v2980
    %v3062 = vunpack.c.l.b16 %v2996
    %v3063 = vunpack.c.l.b16 %v2981
    %v3064 = vunpack.c.l.b16 %v2997
    %v3065 = vunpack.c.l.b16 %v2982
    %v3066 = vunpack.c.l.b16 %v2998
    %v3067 = vunpack.c.l.b16 %v2983
    %v3068 = vunpack.c.l.b16 %v2999
    %v3069 = vunpack.c.l.b16 %v2984
    %v3070 = vunpack.c.l.b16 %v3000
    %v3071 = vunpack.c.l.b16 %v2985
    %v3072 = vunpack.c.l.b16 %v3001
    %v3073 = vunpack.c.l.b16 %v2986
    %v3074 = vunpack.c.l.b16 %v3002
    %v3075 = vunpack.c.l.b16 %v2987
    %v3076 = vunpack.c.l.b16 %v3003
    %v3077 = vunpack.c.l.b16 %v2988
    %v3078 = vunpack.c.l.b16 %v3004
    %v3079 = vunpack.c.l.b16 %v2989
    %v3080 = vunpack.c.l.b16 %v3005
    %v3081 = vunpack.c.l.b16 %v2990
    %v3082 = vunpack.c.l.b16 %v3006
    %v3083 = vunpack.c.l.b16 %v2991
    %v3084 = vunpack.c.l.b16 %v3007
    %v3085 = vunpack.c.l.b16 %v2992
    %v3086 = vunpack.c.l.b16 %v3008
    %v3087 = vunpack.c.l.b16 %v2993
    %v3088 = vunpack.c.l.b16 %v3009
    %v3089 = vunpack.c.l.b16 %v2994
    %v3090 = vunpack.c.l.b16 %v3010
    %v3091 = vpack.c.b16 %v3060, %v3059
    %v3092 = vpack.c.b16 %v3062, %v3061
    %v3093 = vpack.c.b16 %v3064, %v3063
    %v3094 = vpack.c.b16 %v3066, %v3065
    %v3095 = vpack.c.b16 %v3068, %v3067
    %v3096 = vpack.c.b16 %v3070, %v3069
    %v3097 = vpack.c.b16 %v3072, %v3071
    %v3098 = vpack.c.b16 %v3074, %v3073
    %v3099 = vpack.c.b16 %v3076, %v3075
    %v3100 = vpack.c.b16 %v3078, %v3077
    %v3101 = vpack.c.b16 %v3080, %v3079
    %v3102 = vpack.c.b16 %v3082, %v3081
    %v3103 = vpack.c.b16 %v3084, %v3083
    %v3104 = vpack.c.b16 %v3086, %v3085
    %v3105 = vpack.c.b16 %v3088, %v3087
    %v3106 = vpack.c.b16 %v3090, %v3089
    %v3108 = vshrl.u32 %v3091, 16
    %v3110 = vshll.u32 %v3091, 16
    %v3112 = vrot.slane %v3110, 1
    %v3113 = vor.u32 %v3108, %v3112
    %v3115 = vshrl.u32 %v3092, 16
    %v3117 = vshll.u32 %v3092, 16
    %v3119 = vrot.slane %v3117, 1
    %v3120 = vor.u32 %v3115, %v3119
    %v3122 = vshrl.u32 %v3093, 16
    %v3124 = vshll.u32 %v3093, 16
    %v3126 = vrot.slane %v3124, 1
    %v3127 = vor.u32 %v3122, %v3126
    %v3129 = vshrl.u32 %v3094, 16
    %v3131 = vshll.u32 %v3094, 16
    %v3133 = vrot.slane %v3131, 1
    %v3134 = vor.u32 %v3129, %v3133
    %v3136 = vshrl.u32 %v3095, 16
    %v3138 = vshll.u32 %v3095, 16
    %v3140 = vrot.slane %v3138, 1
    %v3141 = vor.u32 %v3136, %v3140
    %v3143 = vshrl.u32 %v3096, 16
    %v3145 = vshll.u32 %v3096, 16
    %v3147 = vrot.slane %v3145, 1
    %v3148 = vor.u32 %v3143, %v3147
    %v3150 = vshrl.u32 %v3097, 16
    %v3152 = vshll.u32 %v3097, 16
    %v3154 = vrot.slane %v3152, 1
    %v3155 = vor.u32 %v3150, %v3154
    %v3157 = vshrl.u32 %v3098, 16
    %v3159 = vshll.u32 %v3098, 16
    %v3161 = vrot.slane %v3159, 1
    %v3162 = vor.u32 %v3157, %v3161
    %v3164 = vshrl.u32 %v3099, 16
    %v3166 = vshll.u32 %v3099, 16
    %v3168 = vrot.slane %v3166, 1
    %v3169 = vor.u32 %v3164, %v3168
    %v3171 = vshrl.u32 %v3100, 16
    %v3173 = vshll.u32 %v3100, 16
    %v3175 = vrot.slane %v3173, 1
    %v3176 = vor.u32 %v3171, %v3175
    %v3178 = vshrl.u32 %v3101, 16
    %v3180 = vshll.u32 %v3101, 16
    %v3182 = vrot.slane %v3180, 1
    %v3183 = vor.u32 %v3178, %v3182
    %v3185 = vshrl.u32 %v3102, 16
    %v3187 = vshll.u32 %v3102, 16
    %v3189 = vrot.slane %v3187, 1
    %v3190 = vor.u32 %v3185, %v3189
    %v3192 = vshrl.u32 %v3103, 16
    %v3194 = vshll.u32 %v3103, 16
    %v3196 = vrot.slane %v3194, 1
    %v3197 = vor.u32 %v3192, %v3196
    %v3199 = vshrl.u32 %v3104, 16
    %v3201 = vshll.u32 %v3104, 16
    %v3203 = vrot.slane %v3201, 1
    %v3204 = vor.u32 %v3199, %v3203
    %v3206 = vshrl.u32 %v3105, 16
    %v3208 = vshll.u32 %v3105, 16
    %v3210 = vrot.slane %v3208, 1
    %v3211 = vor.u32 %v3206, %v3210
    %v3213 = vshrl.u32 %v3106, 16
    %v3215 = vshll.u32 %v3106, 16
    %v3217 = vrot.slane %v3215, 1
    %v3218 = vor.u32 %v3213, %v3217
    %v3235 = vunpack.c.l.b16 %v3011
    %v3236 = vunpack.c.l.b16 %v3012
    %v3237 = vunpack.c.l.b16 %v3013
    %v3238 = vunpack.c.l.b16 %v3014
    %v3239 = vunpack.c.l.b16 %v3015
    %v3240 = vunpack.c.l.b16 %v3016
    %v3241 = vunpack.c.l.b16 %v3017
    %v3242 = vunpack.c.l.b16 %v3018
    %v3243 = vunpack.c.l.b16 %v3019
    %v3244 = vunpack.c.l.b16 %v3020
    %v3245 = vunpack.c.l.b16 %v3021
    %v3246 = vunpack.c.l.b16 %v3022
    %v3247 = vunpack.c.l.b16 %v3023
    %v3248 = vunpack.c.l.b16 %v3024
    %v3249 = vunpack.c.l.b16 %v3025
    %v3250 = vunpack.c.l.b16 %v3026
    %v3251 = vpack.c.b16 %v3060, %v3235
    %v3252 = vpack.c.b16 %v3062, %v3236
    %v3253 = vpack.c.b16 %v3064, %v3237
    %v3254 = vpack.c.b16 %v3066, %v3238
    %v3255 = vpack.c.b16 %v3068, %v3239
    %v3256 = vpack.c.b16 %v3070, %v3240
    %v3257 = vpack.c.b16 %v3072, %v3241
    %v3258 = vpack.c.b16 %v3074, %v3242
    %v3259 = vpack.c.b16 %v3076, %v3243
    %v3260 = vpack.c.b16 %v3078, %v3244
    %v3261 = vpack.c.b16 %v3080, %v3245
    %v3262 = vpack.c.b16 %v3082, %v3246
    %v3263 = vpack.c.b16 %v3084, %v3247
    %v3264 = vpack.c.b16 %v3086, %v3248
    %v3265 = vpack.c.b16 %v3088, %v3249
    %v3266 = vpack.c.b16 %v3090, %v3250
    %v3267 = vrot.slane %v3251, 1
    %v3268 = vrot.slane %v3252, 1
    %v3269 = vrot.slane %v3253, 1
    %v3270 = vrot.slane %v3254, 1
    %v3271 = vrot.slane %v3255, 1
    %v3272 = vrot.slane %v3256, 1
    %v3273 = vrot.slane %v3257, 1
    %v3274 = vrot.slane %v3258, 1
    %v3275 = vrot.slane %v3259, 1
    %v3276 = vrot.slane %v3260, 1
    %v3277 = vrot.slane %v3261, 1
    %v3278 = vrot.slane %v3262, 1
    %v3279 = vrot.slane %v3263, 1
    %v3280 = vrot.slane %v3264, 1
    %v3281 = vrot.slane %v3265, 1
    %v3282 = vrot.slane %v3266, 1
    %v3283 = vunpack.c.l.b16 %v3120
    %v3284 = vunpack.c.l.b16 %v3268
    %v3285 = vunpack.c.l.b16 %v3113
    %v3286 = vunpack.c.l.b16 %v3267
    %v3287 = vunpack.c.l.b16 %v3127
    %v3288 = vunpack.c.l.b16 %v3269
    %v3289 = vunpack.c.l.b16 %v3134
    %v3290 = vunpack.c.l.b16 %v3270
    %v3291 = vunpack.c.l.b16 %v3141
    %v3292 = vunpack.c.l.b16 %v3271
    %v3293 = vunpack.c.l.b16 %v3148
    %v3294 = vunpack.c.l.b16 %v3272
    %v3295 = vunpack.c.l.b16 %v3155
    %v3296 = vunpack.c.l.b16 %v3273
    %v3297 = vunpack.c.l.b16 %v3176
    %v3298 = vunpack.c.l.b16 %v3276
    %v3299 = vunpack.c.l.b16 %v3169
    %v3300 = vunpack.c.l.b16 %v3275
    %v3301 = vunpack.c.l.b16 %v3183
    %v3302 = vunpack.c.l.b16 %v3277
    %v3303 = vunpack.c.l.b16 %v3190
    %v3304 = vunpack.c.l.b16 %v3278
    %v3305 = vunpack.c.l.b16 %v3197
    %v3306 = vunpack.c.l.b16 %v3279
    %v3307 = vunpack.c.l.b16 %v3204
    %v3308 = vunpack.c.l.b16 %v3280
    %v3309 = vunpack.c.l.b16 %v3211
    %v3310 = vunpack.c.l.b16 %v3281
    %v3311 = vld [vmem:[%s2] sm:$0xf]
    %v3312 = vld [vmem:[%s2 + $0x4] sm:$0xf]
    %v3313 = vld [vmem:[%s2 + $0x8] sm:$0xf]
    %v3314 = vld [vmem:[%s2 + $0xc] sm:$0xf]
    %v3315 = vld [vmem:[%s2 + $0x10] sm:$0xf]
    %v3316 = vld [vmem:[%s2 + $0x14] sm:$0xf]
    %v3317 = vld [vmem:[%s2 + $0x18] sm:$0xf]
    %v3318 = vld [vmem:[%s2 + $0x1c] sm:$0xf]
    %v3319 = vld [vmem:[%s2 + $0x20] sm:$0xf]
    %v3320 = vld [vmem:[%s2 + $0x24] sm:$0xf]
    %v3321 = vld [vmem:[%s2 + $0x28] sm:$0xf]
    %v3322 = vld [vmem:[%s2 + $0x2c] sm:$0xf]
    %v3323 = vld [vmem:[%s2 + $0x30] sm:$0xf]
    %v3324 = vld [vmem:[%s2 + $0x34] sm:$0xf]
    %v3325 = vld [vmem:[%s2 + $0x38] sm:$0xf]
    %v3326 = vld [vmem:[%s2 + $0x3c] sm:$0xf]
    %v3327 = vld [vmem:[%s2 + $0x40] sm:$0xf]
    %v3328 = vld [vmem:[%s2 + $0x44] sm:$0xf]
    %v3329 = vld [vmem:[%s2 + $0x48] sm:$0xf]
    %v3330 = vld [vmem:[%s2 + $0x4c] sm:$0xf]
    %v3331 = vld [vmem:[%s2 + $0x50] sm:$0xf]
    %v3332 = vld [vmem:[%s2 + $0x54] sm:$0xf]
    %v3333 = vld [vmem:[%s2 + $0x58] sm:$0xf]
    %v3334 = vld [vmem:[%s2 + $0x5c] sm:$0xf]
    %v3335 = vld [vmem:[%s2 + $0x60] sm:$0xf]
    %v3336 = vld [vmem:[%s2 + $0x64] sm:$0xf]
    %v3337 = vld [vmem:[%s2 + $0x68] sm:$0xf]
    %v3338 = vld [vmem:[%s2 + $0x6c] sm:$0xf]
    %v3339 = vld [vmem:[%s2 + $0x70] sm:$0xf]
    %v3340 = vld [vmem:[%s2 + $0x74] sm:$0xf]
    %v3341 = vld [vmem:[%s2 + $0x78] sm:$0xf]
    %v3342 = vld [vmem:[%s2 + $0x7c] sm:$0xf]
    %v3343 = vld [vmem:[%s2 + $0x80] sm:$0xf]
    %v3344 = vld [vmem:[%s2 + $0x84] sm:$0xf]
    %v3345 = vld [vmem:[%s2 + $0x88] sm:$0xf]
    %v3346 = vld [vmem:[%s2 + $0x8c] sm:$0xf]
    %v3347 = vld [vmem:[%s2 + $0x90] sm:$0xf]
    %v3348 = vld [vmem:[%s2 + $0x94] sm:$0xf]
    %v3349 = vld [vmem:[%s2 + $0x98] sm:$0xf]
    %v3350 = vld [vmem:[%s2 + $0x9c] sm:$0xf]
    %v3351 = vld [vmem:[%s2 + $0xa0] sm:$0xf]
    %v3352 = vld [vmem:[%s2 + $0xa4] sm:$0xf]
    %v3353 = vld [vmem:[%s2 + $0xa8] sm:$0xf]
    %v3354 = vld [vmem:[%s2 + $0xac] sm:$0xf]
    %v3355 = vld [vmem:[%s2 + $0xb0] sm:$0xf]
    %v3356 = vld [vmem:[%s2 + $0xb4] sm:$0xf]
    %v3357 = vld [vmem:[%s2 + $0xb8] sm:$0xf]
    %v3358 = vld [vmem:[%s2 + $0xbc] sm:$0xf]
    %v3359 = vunpack.c.l.b16 %v3162
    %v3360 = vunpack.c.l.b16 %v3274
    %v3361 = vunpack.c.l.b16 %v3218
    %v3362 = vunpack.c.l.b16 %v3282
    %s3363 = scalar_lea.vmem %s2, 192
    %v3364 = vld [vmem:[%s3363] sm:$0xf]
    %v3365 = vld [vmem:[%s3363 + $0x4] sm:$0xf]
    %v3366 = vld [vmem:[%s3363 + $0x8] sm:$0xf]
    %v3367 = vld [vmem:[%s3363 + $0xc] sm:$0xf]
    %v3368 = vld [vmem:[%s3363 + $0x10] sm:$0xf]
    %v3369 = vld [vmem:[%s3363 + $0x14] sm:$0xf]
    %v3370 = vld [vmem:[%s3363 + $0x18] sm:$0xf]
    %v3371 = vld [vmem:[%s3363 + $0x1c] sm:$0xf]
    %v3372 = vld [vmem:[%s3363 + $0x20] sm:$0xf]
    %v3373 = vld [vmem:[%s3363 + $0x24] sm:$0xf]
    %v3374 = vld [vmem:[%s3363 + $0x28] sm:$0xf]
    %v3375 = vld [vmem:[%s3363 + $0x2c] sm:$0xf]
    %v3376 = vld [vmem:[%s3363 + $0x30] sm:$0xf]
    %v3377 = vld [vmem:[%s3363 + $0x34] sm:$0xf]
    %v3378 = vld [vmem:[%s3363 + $0x38] sm:$0xf]
    %v3379 = vld [vmem:[%s3363 + $0x3c] sm:$0xf]
    %v3380 = vld [vmem:[%s3363 + $0x40] sm:$0xf]
    %v3381 = vld [vmem:[%s3363 + $0x44] sm:$0xf]
    %v3382 = vld [vmem:[%s3363 + $0x48] sm:$0xf]
    %v3383 = vld [vmem:[%s3363 + $0x4c] sm:$0xf]
    %v3384 = vld [vmem:[%s3363 + $0x50] sm:$0xf]
    %v3385 = vld [vmem:[%s3363 + $0x54] sm:$0xf]
    %v3386 = vld [vmem:[%s3363 + $0x58] sm:$0xf]
    %v3387 = vld [vmem:[%s3363 + $0x5c] sm:$0xf]
    %v3388 = vld [vmem:[%s3363 + $0x60] sm:$0xf]
    %v3389 = vld [vmem:[%s3363 + $0x64] sm:$0xf]
    %v3390 = vld [vmem:[%s3363 + $0x68] sm:$0xf]
    %v3391 = vld [vmem:[%s3363 + $0x6c] sm:$0xf]
    %v3392 = vld [vmem:[%s3363 + $0x70] sm:$0xf]
    %v3393 = vld [vmem:[%s3363 + $0x74] sm:$0xf]
    %v3394 = vld [vmem:[%s3363 + $0x78] sm:$0xf]
    %v3395 = vld [vmem:[%s3363 + $0x7c] sm:$0xf]
    %v3396 = vld [vmem:[%s3363 + $0x80] sm:$0xf]
    %v3397 = vld [vmem:[%s3363 + $0x84] sm:$0xf]
    %v3398 = vld [vmem:[%s3363 + $0x88] sm:$0xf]
    %v3399 = vld [vmem:[%s3363 + $0x8c] sm:$0xf]
    %v3400 = vld [vmem:[%s3363 + $0x90] sm:$0xf]
    %v3401 = vld [vmem:[%s3363 + $0x94] sm:$0xf]
    %v3402 = vld [vmem:[%s3363 + $0x98] sm:$0xf]
    %v3403 = vld [vmem:[%s3363 + $0x9c] sm:$0xf]
    %v3404 = vld [vmem:[%s3363 + $0xa0] sm:$0xf]
    %v3405 = vld [vmem:[%s3363 + $0xa4] sm:$0xf]
    %v3406 = vld [vmem:[%s3363 + $0xa8] sm:$0xf]
    %v3407 = vld [vmem:[%s3363 + $0xac] sm:$0xf]
    %v3408 = vld [vmem:[%s3363 + $0xb0] sm:$0xf]
    %v3409 = vld [vmem:[%s3363 + $0xb4] sm:$0xf]
    %v3410 = vld [vmem:[%s3363 + $0xb8] sm:$0xf]
    %v3411 = vld [vmem:[%s3363 + $0xbc] sm:$0xf]
    %v3412 = vpack.c.b16 %v3061, %v3059
    %v3413 = vpack.c.b16 %v3283, %v3285
    %v3414 = vpack.c.b16 %v3284, %v3286
    %v3415 = vpack.c.b16 %v3065, %v3063
    %v3416 = vpack.c.b16 %v3289, %v3287
    %v3417 = vpack.c.b16 %v3290, %v3288
    %v3418 = vpack.c.b16 %v3069, %v3067
    %v3419 = vpack.c.b16 %v3293, %v3291
    %v3420 = vpack.c.b16 %v3294, %v3292
    %v3421 = vpack.c.b16 %v3073, %v3071
    %v3422 = vpack.c.b16 %v3359, %v3295
    %v3423 = vpack.c.b16 %v3360, %v3296
    %v3424 = vpack.c.b16 %v3077, %v3075
    %v3425 = vpack.c.b16 %v3297, %v3299
    %v3426 = vpack.c.b16 %v3298, %v3300
    %v3427 = vpack.c.b16 %v3081, %v3079
    %v3428 = vpack.c.b16 %v3303, %v3301
    %v3429 = vpack.c.b16 %v3304, %v3302
    %v3430 = vpack.c.b16 %v3085, %v3083
    %v3431 = vpack.c.b16 %v3307, %v3305
    %v3432 = vpack.c.b16 %v3308, %v3306
    %v3433 = vpack.c.b16 %v3089, %v3087
    %v3434 = vpack.c.b16 %v3361, %v3309
    %v3435 = vpack.c.b16 %v3362, %v3310
    %v3508 = vunpack.c.l.b16 %v3364
    %v3509 = vunpack.c.l.b16 %v3365
    %v3510 = vunpack.c.l.b16 %v3366
    %v3511 = vunpack.c.l.b16 %v3367
    %v3512 = vunpack.c.l.b16 %v3368
    %v3513 = vunpack.c.l.b16 %v3369
    %v3514 = vunpack.c.l.b16 %v3370
    %v3515 = vunpack.c.l.b16 %v3371
    %v3516 = vunpack.c.l.b16 %v3372
    %v3517 = vunpack.c.l.b16 %v3373
    %v3518 = vunpack.c.l.b16 %v3374
    %v3519 = vunpack.c.l.b16 %v3375
    %v3520 = vunpack.c.l.b16 %v3376
    %v3521 = vunpack.c.l.b16 %v3377
    %v3522 = vunpack.c.l.b16 %v3378
    %v3523 = vunpack.c.l.b16 %v3379
    %v3524 = vunpack.c.l.b16 %v3380
    %v3525 = vunpack.c.l.b16 %v3381
    %v3526 = vunpack.c.l.b16 %v3382
    %v3527 = vunpack.c.l.b16 %v3383
    %v3528 = vunpack.c.l.b16 %v3384
    %v3529 = vunpack.c.l.b16 %v3385
    %v3530 = vunpack.c.l.b16 %v3386
    %v3531 = vunpack.c.l.b16 %v3387
    %v3532 = vunpack.c.l.b16 %v3388
    %v3533 = vunpack.c.l.b16 %v3389
    %v3534 = vunpack.c.l.b16 %v3390
    %v3535 = vunpack.c.l.b16 %v3391
    %v3536 = vunpack.c.l.b16 %v3392
    %v3537 = vunpack.c.l.b16 %v3393
    %v3538 = vunpack.c.l.b16 %v3394
    %v3539 = vunpack.c.l.b16 %v3395
    %v3540 = vunpack.c.l.b16 %v3396
    %v3541 = vunpack.c.l.b16 %v3397
    %v3542 = vunpack.c.l.b16 %v3398
    %v3543 = vunpack.c.l.b16 %v3399
    %v3544 = vunpack.c.l.b16 %v3400
    %v3545 = vunpack.c.l.b16 %v3401
    %v3546 = vunpack.c.l.b16 %v3402
    %v3547 = vunpack.c.l.b16 %v3403
    %v3548 = vunpack.c.l.b16 %v3404
    %v3549 = vunpack.c.l.b16 %v3405
    %v3550 = vunpack.c.l.b16 %v3406
    %v3551 = vunpack.c.l.b16 %v3407
    %v3552 = vunpack.c.l.b16 %v3408
    %v3553 = vunpack.c.l.b16 %v3409
    %v3554 = vunpack.c.l.b16 %v3410
    %v3555 = vunpack.c.l.b16 %v3411
    %v3556 = vpack.c.b16 %v3509, %v3508
    %v3557 = vpack.c.b16 %v3511, %v3510
    %v3558 = vpack.c.b16 %v3513, %v3512
    %v3559 = vpack.c.b16 %v3515, %v3514
    %v3560 = vpack.c.b16 %v3517, %v3516
    %v3561 = vpack.c.b16 %v3519, %v3518
    %v3562 = vpack.c.b16 %v3521, %v3520
    %v3563 = vpack.c.b16 %v3523, %v3522
    %v3564 = vpack.c.b16 %v3525, %v3524
    %v3565 = vpack.c.b16 %v3527, %v3526
    %v3566 = vpack.c.b16 %v3529, %v3528
    %v3567 = vpack.c.b16 %v3531, %v3530
    %v3568 = vpack.c.b16 %v3533, %v3532
    %v3569 = vpack.c.b16 %v3535, %v3534
    %v3570 = vpack.c.b16 %v3537, %v3536
    %v3571 = vpack.c.b16 %v3539, %v3538
    %v3572 = vpack.c.b16 %v3541, %v3540
    %v3573 = vpack.c.b16 %v3543, %v3542
    %v3574 = vpack.c.b16 %v3545, %v3544
    %v3575 = vpack.c.b16 %v3547, %v3546
    %v3576 = vpack.c.b16 %v3549, %v3548
    %v3577 = vpack.c.b16 %v3551, %v3550
    %v3578 = vpack.c.b16 %v3553, %v3552
    %v3579 = vpack.c.b16 %v3555, %v3554
    %3604 = vmatprep.subr.bf16.mxu0 0
    %3605 = vmatpush1.bf16.msra.mxu0 %v3556
    %3606 = vmatprep.subr.bf16.mxu0 0
    %3607 = vmatpush1.bf16.msra.mxu0 %v3557
    %3608 = vmatprep.subr.bf16.mxu0 0
    %3609 = vmatpush1.bf16.msra.mxu0 %v3558
    %3610 = vmatprep.subr.bf16.mxu0 0
    %3611 = vmatpush1.bf16.msra.mxu0 %v3559
    %3612 = vmatprep.subr.bf16.mxu0 0
    %3613 = vmatpush1.bf16.msra.mxu0 %v3560
    %3614 = vmatprep.subr.bf16.mxu0 0
    %3615 = vmatpush1.bf16.msra.mxu0 %v3561
    %3616 = vmatprep.subr.bf16.mxu0 0
    %3617 = vmatpush1.bf16.msra.mxu0 %v3562
    %3618 = vmatprep.subr.bf16.mxu0 0
    %3619 = vmatpush1.bf16.msra.mxu0 %v3563
    %3620 = vmatprep.subr.bf16.mxu0 0
    %3621 = vmatpush1.bf16.msra.mxu0 %v3564
    %3622 = vmatprep.subr.bf16.mxu0 0
    %3623 = vmatpush1.bf16.msra.mxu0 %v3565
    %3624 = vmatprep.subr.bf16.mxu0 0
    %3625 = vmatpush1.bf16.msra.mxu0 %v3566
    %3626 = vmatprep.subr.bf16.mxu0 0
    %3627 = vmatpush1.bf16.msra.mxu0 %v3567
    %3628 = vmatprep.subr.bf16.mxu0 0
    %3629 = vmatpush1.bf16.msra.mxu0 %v3568
    %3630 = vmatprep.subr.bf16.mxu0 0
    %3631 = vmatpush1.bf16.msra.mxu0 %v3569
    %3632 = vmatprep.subr.bf16.mxu0 0
    %3633 = vmatpush1.bf16.msra.mxu0 %v3570
    %3634 = vmatprep.subr.bf16.mxu0 0
    %3635 = vmatpush1.bf16.msra.mxu0 %v3571
    %3636 = vmatprep.mubr.bf16.mxu0 %v3413
    %3637 = vmatmul.mubr.bf16.gmra.mrb[0].mxu0 %v3412
    %v3638 = vpop.f32.mrb[0].mxu0
    %v3639 = vadd.f32 0.0, %v3638
    %v3640 = vpop.f32.mrb[0].mxu0
    %v3641 = vpop.f32.mrb[0].mxu0
    %v3642 = vadd.f32 0.0, %v3641
    %v3643 = vpop.f32.mrb[0].mxu0
    %3644 = vmatprep.mubr.bf16.mxu0 %v3416
    %3645 = vmatmul.mubr.bf16.gmra.mrb[0].mxu0 %v3415
    %v3646 = vpop.f32.mrb[0].mxu0
    %v3647 = vadd.f32 0.0, %v3646
    %v3648 = vpop.f32.mrb[0].mxu0
    %v3649 = vpop.f32.mrb[0].mxu0
    %v3650 = vadd.f32 0.0, %v3649
    %v3651 = vpop.f32.mrb[0].mxu0
    %3652 = vmatprep.mubr.bf16.mxu0 %v3419
    %3653 = vmatmul.mubr.bf16.gmra.mrb[0].mxu0 %v3418
    %v3654 = vpop.f32.mrb[0].mxu0
    %v3655 = vadd.f32 0.0, %v3654
    %v3656 = vpop.f32.mrb[0].mxu0
    %v3657 = vpop.f32.mrb[0].mxu0
    %v3658 = vadd.f32 0.0, %v3657
    %v3659 = vpop.f32.mrb[0].mxu0
    %3660 = vmatprep.mubr.bf16.mxu0 %v3422
    %3661 = vmatmul.mubr.bf16.gmra.mrb[0].mxu0 %v3421
    %v3662 = vpop.f32.mrb[0].mxu0
    %v3663 = vadd.f32 0.0, %v3662
    %v3664 = vpop.f32.mrb[0].mxu0
    %v3665 = vpop.f32.mrb[0].mxu0
    %v3666 = vadd.f32 0.0, %v3665
    %v3667 = vpop.f32.mrb[0].mxu0
    %3668 = vmatprep.mubr.bf16.mxu0 %v3425
    %3669 = vmatmul.mubr.bf16.gmra.mrb[0].mxu0 %v3424
    %v3670 = vpop.f32.mrb[0].mxu0
    %v3671 = vadd.f32 0.0, %v3670
    %v3672 = vpop.f32.mrb[0].mxu0
    %v3673 = vpop.f32.mrb[0].mxu0
    %v3674 = vadd.f32 0.0, %v3673
    %v3675 = vpop.f32.mrb[0].mxu0
    %3676 = vmatprep.mubr.bf16.mxu0 %v3428
    %3677 = vmatmul.mubr.bf16.gmra.mrb[0].mxu0 %v3427
    %v3678 = vpop.f32.mrb[0].mxu0
    %v3679 = vadd.f32 0.0, %v3678
    %v3680 = vpop.f32.mrb[0].mxu0
    %v3681 = vpop.f32.mrb[0].mxu0
    %v3682 = vadd.f32 0.0, %v3681
    %v3683 = vpop.f32.mrb[0].mxu0
    %3684 = vmatprep.mubr.bf16.mxu0 %v3431
    %3685 = vmatmul.mubr.bf16.gmra.mrb[0].mxu0 %v3430
    %v3686 = vpop.f32.mrb[0].mxu0
    %v3687 = vadd.f32 0.0, %v3686
    %v3688 = vpop.f32.mrb[0].mxu0
    %v3689 = vpop.f32.mrb[0].mxu0
    %v3690 = vadd.f32 0.0, %v3689
    %v3691 = vpop.f32.mrb[0].mxu0
    %3692 = vmatprep.mubr.bf16.mxu0 %v3434
    %3693 = vmatmul.mubr.bf16.gmra.mrb[0].mxu0 %v3433
    %v3694 = vpop.f32.mrb[0].mxu0
    %v3695 = vadd.f32 0.0, %v3694
    %v3696 = vpop.f32.mrb[0].mxu0
    %v3697 = vpop.f32.mrb[0].mxu0
    %v3698 = vadd.f32 0.0, %v3697
    %v3699 = vpop.f32.mrb[0].mxu0
    %3700 = vdwg.mxu0
    %3701 = vmatprep.subr.bf16.mxu0 0
    %3702 = vmatpush1.bf16.msra.mxu0 %v3572
    %3703 = vmatprep.subr.bf16.mxu0 0
    %3704 = vmatpush1.bf16.msra.mxu0 %v3573
    %3705 = vmatprep.subr.bf16.mxu0 0
    %3706 = vmatpush1.bf16.msra.mxu0 %v3574
    %3707 = vmatprep.subr.bf16.mxu0 0
    %3708 = vmatpush1.bf16.msra.mxu0 %v3575
    %3709 = vmatprep.subr.bf16.mxu0 0
    %3710 = vmatpush1.bf16.msra.mxu0 %v3576
    %3711 = vmatprep.subr.bf16.mxu0 0
    %3712 = vmatpush1.bf16.msra.mxu0 %v3577
    %3713 = vmatprep.subr.bf16.mxu0 0
    %3714 = vmatpush1.bf16.msra.mxu0 %v3578
    %3715 = vmatprep.subr.bf16.mxu0 0
    %3716 = vmatpush1.bf16.msra.mxu0 %v3579
    %3717 = vmatprep.subr.bf16.mxu0 0
    %3718 = vmatpush1.bf16.msra.mxu0 0
    %3719 = vmatprep.subr.bf16.mxu0 0
    %3720 = vmatpush1.bf16.msra.mxu0 0
    %3721 = vmatprep.subr.bf16.mxu0 0
    %3722 = vmatpush1.bf16.msra.mxu0 0
    %3723 = vmatprep.subr.bf16.mxu0 0
    %3724 = vmatpush1.bf16.msra.mxu0 0
    %3725 = vmatprep.subr.bf16.mxu0 0
    %3726 = vmatpush1.bf16.msra.mxu0 0
    %3727 = vmatprep.subr.bf16.mxu0 0
    %3728 = vmatpush1.bf16.msra.mxu0 0
    %3729 = vmatprep.subr.bf16.mxu0 0
    %3730 = vmatpush1.bf16.msra.mxu0 0
    %3731 = vmatprep.subr.bf16.mxu0 0
    %3732 = vmatpush1.bf16.msra.mxu0 0
    %3733 = vmatprep.mubr.bf16.mxu0 0
    %3734 = vmatmul.mubr.bf16.gmra.mrb[0].mxu0 %v3414
    %v3735 = vpop.f32.mrb[0].mxu0
    %v3736 = vadd.f32 %v3639, %v3735
    %v3737 = vpop.f32.mrb[0].mxu0
    %v3738 = vpop.f32.mrb[0].mxu0
    %v3739 = vadd.f32 %v3642, %v3738
    %v3740 = vpop.f32.mrb[0].mxu0
    %3741 = vmatprep.mubr.bf16.mxu0 0
    %3742 = vmatmul.mubr.bf16.gmra.mrb[0].mxu0 %v3417
    %v3743 = vpop.f32.mrb[0].mxu0
    %v3744 = vadd.f32 %v3647, %v3743
    %v3745 = vpop.f32.mrb[0].mxu0
    %v3746 = vpop.f32.mrb[0].mxu0
    %v3747 = vadd.f32 %v3650, %v3746
    %v3748 = vpop.f32.mrb[0].mxu0
    %3749 = vmatprep.mubr.bf16.mxu0 0
    %3750 = vmatmul.mubr.bf16.gmra.mrb[0].mxu0 %v3420
    %v3751 = vpop.f32.mrb[0].mxu0
    %v3752 = vadd.f32 %v3655, %v3751
    %v3753 = vpop.f32.mrb[0].mxu0
    %v3754 = vpop.f32.mrb[0].mxu0
    %v3755 = vadd.f32 %v3658, %v3754
    %v3756 = vpop.f32.mrb[0].mxu0
    %3757 = vmatprep.mubr.bf16.mxu0 0
    %3758 = vmatmul.mubr.bf16.gmra.mrb[0].mxu0 %v3423
    %v3759 = vpop.f32.mrb[0].mxu0
    %v3760 = vadd.f32 %v3663, %v3759
    %v3761 = vpop.f32.mrb[0].mxu0
    %v3762 = vpop.f32.mrb[0].mxu0
    %v3763 = vadd.f32 %v3666, %v3762
    %v3764 = vpop.f32.mrb[0].mxu0
    %3765 = vmatprep.mubr.bf16.mxu0 0
    %3766 = vmatmul.mubr.bf16.gmra.mrb[0].mxu0 %v3426
    %v3767 = vpop.f32.mrb[0].mxu0
    %v3768 = vadd.f32 %v3671, %v3767
    %v3769 = vpop.f32.mrb[0].mxu0
    %v3770 = vpop.f32.mrb[0].mxu0
    %v3771 = vadd.f32 %v3674, %v3770
    %v3772 = vpop.f32.mrb[0].mxu0
    %3773 = vmatprep.mubr.bf16.mxu0 0
    %3774 = vmatmul.mubr.bf16.gmra.mrb[0].mxu0 %v3429
    %v3775 = vpop.f32.mrb[0].mxu0
    %v3776 = vadd.f32 %v3679, %v3775
    %v3777 = vpop.f32.mrb[0].mxu0
    %v3778 = vpop.f32.mrb[0].mxu0
    %v3779 = vadd.f32 %v3682, %v3778
    %v3780 = vpop.f32.mrb[0].mxu0
    %3781 = vmatprep.mubr.bf16.mxu0 0
    %3782 = vmatmul.mubr.bf16.gmra.mrb[0].mxu0 %v3432
    %v3783 = vpop.f32.mrb[0].mxu0
    %v3784 = vadd.f32 %v3687, %v3783
    %v3785 = vpop.f32.mrb[0].mxu0
    %v3786 = vpop.f32.mrb[0].mxu0
    %v3787 = vadd.f32 %v3690, %v3786
    %v3788 = vpop.f32.mrb[0].mxu0
    %3789 = vmatprep.mubr.bf16.mxu0 0
    %3790 = vmatmul.mubr.bf16.gmra.mrb[0].mxu0 %v3435
    %v3791 = vpop.f32.mrb[0].mxu0
    %v3792 = vadd.f32 %v3695, %v3791
    %v3793 = vpop.f32.mrb[0].mxu0
    %v3794 = vpop.f32.mrb[0].mxu0
    %v3795 = vadd.f32 %v3698, %v3794
    %v3796 = vpop.f32.mrb[0].mxu0
    %3797 = vdwg.mxu0
    %v3798 = vpack.c.b16 %v3059, %v3061
    %v3799 = vpack.c.b16 %v3285, %v3283
    %v3800 = vpack.c.b16 %v3286, %v3284
    %v3801 = vpack.c.b16 %v3063, %v3061
    %v3802 = vpack.c.b16 %v3287, %v3283
    %v3803 = vpack.c.b16 %v3288, %v3284
    %v3804 = vpack.c.b16 %v3067, %v3065
    %v3805 = vpack.c.b16 %v3291, %v3289
    %v3806 = vpack.c.b16 %v3292, %v3290
    %v3807 = vpack.c.b16 %v3071, %v3069
    %v3808 = vpack.c.b16 %v3295, %v3293
    %v3809 = vpack.c.b16 %v3296, %v3294
    %v3810 = vpack.c.b16 %v3075, %v3077
    %v3811 = vpack.c.b16 %v3299, %v3297
    %v3812 = vpack.c.b16 %v3300, %v3298
    %v3813 = vpack.c.b16 %v3079, %v3077
    %v3814 = vpack.c.b16 %v3301, %v3297
    %v3815 = vpack.c.b16 %v3302, %v3298
    %v3816 = vpack.c.b16 %v3083, %v3081
    %v3817 = vpack.c.b16 %v3305, %v3303
    %v3818 = vpack.c.b16 %v3306, %v3304
    %v3819 = vpack.c.b16 %v3087, %v3085
    %v3820 = vpack.c.b16 %v3309, %v3307
    %v3821 = vpack.c.b16 %v3310, %v3308
    %v3894 = vunpack.c.l.b16 %v3311
    %v3895 = vunpack.c.l.b16 %v3312
    %v3896 = vunpack.c.l.b16 %v3313
    %v3897 = vunpack.c.l.b16 %v3314
    %v3898 = vunpack.c.l.b16 %v3315
    %v3899 = vunpack.c.l.b16 %v3316
    %v3900 = vunpack.c.l.b16 %v3317
    %v3901 = vunpack.c.l.b16 %v3318
    %v3902 = vunpack.c.l.b16 %v3319
    %v3903 = vunpack.c.l.b16 %v3320
    %v3904 = vunpack.c.l.b16 %v3321
    %v3905 = vunpack.c.l.b16 %v3322
    %v3906 = vunpack.c.l.b16 %v3323
    %v3907 = vunpack.c.l.b16 %v3324
    %v3908 = vunpack.c.l.b16 %v3325
    %v3909 = vunpack.c.l.b16 %v3326
    %v3910 = vunpack.c.l.b16 %v3327
    %v3911 = vunpack.c.l.b16 %v3328
    %v3912 = vunpack.c.l.b16 %v3329
    %v3913 = vunpack.c.l.b16 %v3330
    %v3914 = vunpack.c.l.b16 %v3331
    %v3915 = vunpack.c.l.b16 %v3332
    %v3916 = vunpack.c.l.b16 %v3333
    %v3917 = vunpack.c.l.b16 %v3334
    %v3918 = vunpack.c.l.b16 %v3335
    %v3919 = vunpack.c.l.b16 %v3336
    %v3920 = vunpack.c.l.b16 %v3337
    %v3921 = vunpack.c.l.b16 %v3338
    %v3922 = vunpack.c.l.b16 %v3339
    %v3923 = vunpack.c.l.b16 %v3340
    %v3924 = vunpack.c.l.b16 %v3341
    %v3925 = vunpack.c.l.b16 %v3342
    %v3926 = vunpack.c.l.b16 %v3343
    %v3927 = vunpack.c.l.b16 %v3344
    %v3928 = vunpack.c.l.b16 %v3345
    %v3929 = vunpack.c.l.b16 %v3346
    %v3930 = vunpack.c.l.b16 %v3347
    %v3931 = vunpack.c.l.b16 %v3348
    %v3932 = vunpack.c.l.b16 %v3349
    %v3933 = vunpack.c.l.b16 %v3350
    %v3934 = vunpack.c.l.b16 %v3351
    %v3935 = vunpack.c.l.b16 %v3352
    %v3936 = vunpack.c.l.b16 %v3353
    %v3937 = vunpack.c.l.b16 %v3354
    %v3938 = vunpack.c.l.b16 %v3355
    %v3939 = vunpack.c.l.b16 %v3356
    %v3940 = vunpack.c.l.b16 %v3357
    %v3941 = vunpack.c.l.b16 %v3358
    %v3942 = vpack.c.b16 %v3895, %v3894
    %v3943 = vpack.c.b16 %v3897, %v3896
    %v3944 = vpack.c.b16 %v3899, %v3898
    %v3945 = vpack.c.b16 %v3901, %v3900
    %v3946 = vpack.c.b16 %v3903, %v3902
    %v3947 = vpack.c.b16 %v3905, %v3904
    %v3948 = vpack.c.b16 %v3907, %v3906
    %v3949 = vpack.c.b16 %v3909, %v3908
    %v3950 = vpack.c.b16 %v3911, %v3910
    %v3951 = vpack.c.b16 %v3913, %v3912
    %v3952 = vpack.c.b16 %v3915, %v3914
    %v3953 = vpack.c.b16 %v3917, %v3916
    %v3954 = vpack.c.b16 %v3919, %v3918
    %v3955 = vpack.c.b16 %v3921, %v3920
    %v3956 = vpack.c.b16 %v3923, %v3922
    %v3957 = vpack.c.b16 %v3925, %v3924
    %v3958 = vpack.c.b16 %v3927, %v3926
    %v3959 = vpack.c.b16 %v3929, %v3928
    %v3960 = vpack.c.b16 %v3931, %v3930
    %v3961 = vpack.c.b16 %v3933, %v3932
    %v3962 = vpack.c.b16 %v3935, %v3934
    %v3963 = vpack.c.b16 %v3937, %v3936
    %v3964 = vpack.c.b16 %v3939, %v3938
    %v3965 = vpack.c.b16 %v3941, %v3940
    %3990 = vmatprep.subr.bf16.mxu0 0
    %3991 = vmatpush1.bf16.msra.mxu0 %v3942
    %3992 = vmatprep.subr.bf16.mxu0 0
    %3993 = vmatpush1.bf16.msra.mxu0 %v3943
    %3994 = vmatprep.subr.bf16.mxu0 0
    %3995 = vmatpush1.bf16.msra.mxu0 %v3944
    %3996 = vmatprep.subr.bf16.mxu0 0
    %3997 = vmatpush1.bf16.msra.mxu0 %v3945
    %3998 = vmatprep.subr.bf16.mxu0 0
    %3999 = vmatpush1.bf16.msra.mxu0 %v3946
    %4000 = vmatprep.subr.bf16.mxu0 0
    %4001 = vmatpush1.bf16.msra.mxu0 %v3947
    %4002 = vmatprep.subr.bf16.mxu0 0
    %4003 = vmatpush1.bf16.msra.mxu0 %v3948
    %4004 = vmatprep.subr.bf16.mxu0 0
    %4005 = vmatpush1.bf16.msra.mxu0 %v3949
    %4006 = vmatprep.subr.bf16.mxu0 0
    %4007 = vmatpush1.bf16.msra.mxu0 %v3950
    %4008 = vmatprep.subr.bf16.mxu0 0
    %4009 = vmatpush1.bf16.msra.mxu0 %v3951
    %4010 = vmatprep.subr.bf16.mxu0 0
    %4011 = vmatpush1.bf16.msra.mxu0 %v3952
    %4012 = vmatprep.subr.bf16.mxu0 0
    %4013 = vmatpush1.bf16.msra.mxu0 %v3953
    %4014 = vmatprep.subr.bf16.mxu0 0
    %4015 = vmatpush1.bf16.msra.mxu0 %v3954
    %4016 = vmatprep.subr.bf16.mxu0 0
    %4017 = vmatpush1.bf16.msra.mxu0 %v3955
    %4018 = vmatprep.subr.bf16.mxu0 0
    %4019 = vmatpush1.bf16.msra.mxu0 %v3956
    %4020 = vmatprep.subr.bf16.mxu0 0
    %4021 = vmatpush1.bf16.msra.mxu0 %v3957
    %4022 = vmatprep.mubr.bf16.mxu0 %v3799
    %4023 = vmatmul.mubr.bf16.gmra.mrb[0].mxu0 %v3798
    %v4024 = vpop.f32.mrb[0].mxu0
    %v4025 = vadd.f32 %v3736, %v4024
    %v4026 = vpop.f32.mrb[0].mxu0
    %v4027 = vpop.f32.mrb[0].mxu0
    %v4028 = vadd.f32 %v3739, %v4027
    %v4029 = vpop.f32.mrb[0].mxu0
    %4030 = vmatprep.mubr.bf16.mxu0 %v3802
    %4031 = vmatmul.mubr.bf16.gmra.mrb[0].mxu0 %v3801
    %v4032 = vpop.f32.mrb[0].mxu0
    %v4033 = vadd.f32 %v3744, %v4032
    %v4034 = vpop.f32.mrb[0].mxu0
    %v4035 = vpop.f32.mrb[0].mxu0
    %v4036 = vadd.f32 %v3747, %v4035
    %v4037 = vpop.f32.mrb[0].mxu0
    %4038 = vmatprep.mubr.bf16.mxu0 %v3805
    %4039 = vmatmul.mubr.bf16.gmra.mrb[0].mxu0 %v3804
    %v4040 = vpop.f32.mrb[0].mxu0
    %v4041 = vadd.f32 %v3752, %v4040
    %v4042 = vpop.f32.mrb[0].mxu0
    %v4043 = vpop.f32.mrb[0].mxu0
    %v4044 = vadd.f32 %v3755, %v4043
    %v4045 = vpop.f32.mrb[0].mxu0
    %4046 = vmatprep.mubr.bf16.mxu0 %v3808
    %4047 = vmatmul.mubr.bf16.gmra.mrb[0].mxu0 %v3807
    %v4048 = vpop.f32.mrb[0].mxu0
    %v4049 = vadd.f32 %v3760, %v4048
    %v4050 = vpop.f32.mrb[0].mxu0
    %v4051 = vpop.f32.mrb[0].mxu0
    %v4052 = vadd.f32 %v3763, %v4051
    %v4053 = vpop.f32.mrb[0].mxu0
    %4054 = vmatprep.mubr.bf16.mxu0 %v3811
    %4055 = vmatmul.mubr.bf16.gmra.mrb[0].mxu0 %v3810
    %v4056 = vpop.f32.mrb[0].mxu0
    %v4057 = vadd.f32 %v3768, %v4056
    %v4058 = vpop.f32.mrb[0].mxu0
    %v4059 = vpop.f32.mrb[0].mxu0
    %v4060 = vadd.f32 %v3771, %v4059
    %v4061 = vpop.f32.mrb[0].mxu0
    %4062 = vmatprep.mubr.bf16.mxu0 %v3814
    %4063 = vmatmul.mubr.bf16.gmra.mrb[0].mxu0 %v3813
    %v4064 = vpop.f32.mrb[0].mxu0
    %v4065 = vadd.f32 %v3776, %v4064
    %v4066 = vpop.f32.mrb[0].mxu0
    %v4067 = vpop.f32.mrb[0].mxu0
    %v4068 = vadd.f32 %v3779, %v4067
    %v4069 = vpop.f32.mrb[0].mxu0
    %4070 = vmatprep.mubr.bf16.mxu0 %v3817
    %4071 = vmatmul.mubr.bf16.gmra.mrb[0].mxu0 %v3816
    %v4072 = vpop.f32.mrb[0].mxu0
    %v4073 = vadd.f32 %v3784, %v4072
    %v4074 = vpop.f32.mrb[0].mxu0
    %v4075 = vpop.f32.mrb[0].mxu0
    %v4076 = vadd.f32 %v3787, %v4075
    %v4077 = vpop.f32.mrb[0].mxu0
    %4078 = vmatprep.mubr.bf16.mxu0 %v3820
    %4079 = vmatmul.mubr.bf16.gmra.mrb[0].mxu0 %v3819
    %v4080 = vpop.f32.mrb[0].mxu0
    %v4081 = vadd.f32 %v3792, %v4080
    %v4082 = vpop.f32.mrb[0].mxu0
    %v4083 = vpop.f32.mrb[0].mxu0
    %v4084 = vadd.f32 %v3795, %v4083
    %v4085 = vpop.f32.mrb[0].mxu0
    %4086 = vdwg.mxu0
    %4087 = vmatprep.subr.bf16.mxu0 0
    %4088 = vmatpush1.bf16.msra.mxu0 %v3958
    %4089 = vmatprep.subr.bf16.mxu0 0
    %4090 = vmatpush1.bf16.msra.mxu0 %v3959
    %4091 = vmatprep.subr.bf16.mxu0 0
    %4092 = vmatpush1.bf16.msra.mxu0 %v3960
    %4093 = vmatprep.subr.bf16.mxu0 0
    %4094 = vmatpush1.bf16.msra.mxu0 %v3961
    %4095 = vmatprep.subr.bf16.mxu0 0
    %4096 = vmatpush1.bf16.msra.mxu0 %v3962
    %4097 = vmatprep.subr.bf16.mxu0 0
    %4098 = vmatpush1.bf16.msra.mxu0 %v3963
    %4099 = vmatprep.subr.bf16.mxu0 0
    %4100 = vmatpush1.bf16.msra.mxu0 %v3964
    %4101 = vmatprep.subr.bf16.mxu0 0
    %4102 = vmatpush1.bf16.msra.mxu0 %v3965
    %4103 = vmatprep.subr.bf16.mxu0 0
    %4104 = vmatpush1.bf16.msra.mxu0 0
    %4105 = vmatprep.subr.bf16.mxu0 0
    %4106 = vmatpush1.bf16.msra.mxu0 0
    %4107 = vmatprep.subr.bf16.mxu0 0
    %4108 = vmatpush1.bf16.msra.mxu0 0
    %4109 = vmatprep.subr.bf16.mxu0 0
    %4110 = vmatpush1.bf16.msra.mxu0 0
    %4111 = vmatprep.subr.bf16.mxu0 0
    %4112 = vmatpush1.bf16.msra.mxu0 0
    %4113 = vmatprep.subr.bf16.mxu0 0
    %4114 = vmatpush1.bf16.msra.mxu0 0
    %4115 = vmatprep.subr.bf16.mxu0 0
    %4116 = vmatpush1.bf16.msra.mxu0 0
    %4117 = vmatprep.subr.bf16.mxu0 0
    %4118 = vmatpush1.bf16.msra.mxu0 0
    %4119 = vmatprep.mubr.bf16.mxu0 0
    %4120 = vmatmul.mubr.bf16.gmra.mrb[0].mxu0 %v3800
    %v4121 = vpop.f32.mrb[0].mxu0
    %v4122 = vadd.f32 %v4025, %v4121
    %v4123 = vpop.f32.mrb[0].mxu0
    %v4124 = vpop.f32.mrb[0].mxu0
    %v4125 = vadd.f32 %v4028, %v4124
    %v4126 = vpop.f32.mrb[0].mxu0
    %4127 = vmatprep.mubr.bf16.mxu0 0
    %4128 = vmatmul.mubr.bf16.gmra.mrb[0].mxu0 %v3803
    %v4129 = vpop.f32.mrb[0].mxu0
    %v4130 = vadd.f32 %v4033, %v4129
    %v4131 = vpop.f32.mrb[0].mxu0
    %v4132 = vpop.f32.mrb[0].mxu0
    %v4133 = vadd.f32 %v4036, %v4132
    %v4134 = vpop.f32.mrb[0].mxu0
    %4135 = vmatprep.mubr.bf16.mxu0 0
    %4136 = vmatmul.mubr.bf16.gmra.mrb[0].mxu0 %v3806
    %v4137 = vpop.f32.mrb[0].mxu0
    %v4138 = vadd.f32 %v4041, %v4137
    %v4139 = vpop.f32.mrb[0].mxu0
    %v4140 = vpop.f32.mrb[0].mxu0
    %v4141 = vadd.f32 %v4044, %v4140
    %v4142 = vpop.f32.mrb[0].mxu0
    %4143 = vmatprep.mubr.bf16.mxu0 0
    %4144 = vmatmul.mubr.bf16.gmra.mrb[0].mxu0 %v3809
    %v4145 = vpop.f32.mrb[0].mxu0
    %v4146 = vadd.f32 %v4049, %v4145
    %v4147 = vpop.f32.mrb[0].mxu0
    %v4148 = vpop.f32.mrb[0].mxu0
    %v4149 = vadd.f32 %v4052, %v4148
    %v4150 = vpop.f32.mrb[0].mxu0
    %4151 = vmatprep.mubr.bf16.mxu0 0
    %4152 = vmatmul.mubr.bf16.gmra.mrb[0].mxu0 %v3812
    %v4153 = vpop.f32.mrb[0].mxu0
    %v4154 = vadd.f32 %v4057, %v4153
    %v4155 = vpop.f32.mrb[0].mxu0
    %v4156 = vpop.f32.mrb[0].mxu0
    %v4157 = vadd.f32 %v4060, %v4156
    %v4158 = vpop.f32.mrb[0].mxu0
    %4159 = vmatprep.mubr.bf16.mxu0 0
    %4160 = vmatmul.mubr.bf16.gmra.mrb[0].mxu0 %v3815
    %v4161 = vpop.f32.mrb[0].mxu0
    %v4162 = vadd.f32 %v4065, %v4161
    %v4163 = vpop.f32.mrb[0].mxu0
    %v4164 = vpop.f32.mrb[0].mxu0
    %v4165 = vadd.f32 %v4068, %v4164
    %v4166 = vpop.f32.mrb[0].mxu0
    %4167 = vmatprep.mubr.bf16.mxu0 0
    %4168 = vmatmul.mubr.bf16.gmra.mrb[0].mxu0 %v3818
    %v4169 = vpop.f32.mrb[0].mxu0
    %v4170 = vadd.f32 %v4073, %v4169
    %v4171 = vpop.f32.mrb[0].mxu0
    %v4172 = vpop.f32.mrb[0].mxu0
    %v4173 = vadd.f32 %v4076, %v4172
    %v4174 = vpop.f32.mrb[0].mxu0
    %4175 = vmatprep.mubr.bf16.mxu0 0
    %4176 = vmatmul.mubr.bf16.gmra.mrb[0].mxu0 %v3821
    %v4177 = vpop.f32.mrb[0].mxu0
    %v4178 = vadd.f32 %v4081, %v4177
    %v4179 = vpop.f32.mrb[0].mxu0
    %v4180 = vpop.f32.mrb[0].mxu0
    %v4181 = vadd.f32 %v4084, %v4180
    %v4182 = vpop.f32.mrb[0].mxu0
    %4183 = vdwg.mxu0
    %s4184 = scalar_lea.vmem %s2, 384
    %v4185 = vld [vmem:[%s4184] sm:$0xf]
    %v4186 = vld [vmem:[%s4184 + $0x4] sm:$0xf]
    %v4187 = vld [vmem:[%s4184 + $0x8] sm:$0xf]
    %v4188 = vld [vmem:[%s4184 + $0xc] sm:$0xf]
    %v4189 = vld [vmem:[%s4184 + $0x10] sm:$0xf]
    %v4190 = vld [vmem:[%s4184 + $0x14] sm:$0xf]
    %v4191 = vld [vmem:[%s4184 + $0x18] sm:$0xf]
    %v4192 = vld [vmem:[%s4184 + $0x1c] sm:$0xf]
    %v4193 = vld [vmem:[%s4184 + $0x20] sm:$0xf]
    %v4194 = vld [vmem:[%s4184 + $0x24] sm:$0xf]
    %v4195 = vld [vmem:[%s4184 + $0x28] sm:$0xf]
    %v4196 = vld [vmem:[%s4184 + $0x2c] sm:$0xf]
    %v4197 = vld [vmem:[%s4184 + $0x30] sm:$0xf]
    %v4198 = vld [vmem:[%s4184 + $0x34] sm:$0xf]
    %v4199 = vld [vmem:[%s4184 + $0x38] sm:$0xf]
    %v4200 = vld [vmem:[%s4184 + $0x3c] sm:$0xf]
    %v4201 = vld [vmem:[%s4184 + $0x40] sm:$0xf]
    %v4202 = vld [vmem:[%s4184 + $0x44] sm:$0xf]
    %v4203 = vld [vmem:[%s4184 + $0x48] sm:$0xf]
    %v4204 = vld [vmem:[%s4184 + $0x4c] sm:$0xf]
    %v4205 = vld [vmem:[%s4184 + $0x50] sm:$0xf]
    %v4206 = vld [vmem:[%s4184 + $0x54] sm:$0xf]
    %v4207 = vld [vmem:[%s4184 + $0x58] sm:$0xf]
    %v4208 = vld [vmem:[%s4184 + $0x5c] sm:$0xf]
    %v4209 = vld [vmem:[%s4184 + $0x60] sm:$0xf]
    %v4210 = vld [vmem:[%s4184 + $0x64] sm:$0xf]
    %v4211 = vld [vmem:[%s4184 + $0x68] sm:$0xf]
    %v4212 = vld [vmem:[%s4184 + $0x6c] sm:$0xf]
    %v4213 = vld [vmem:[%s4184 + $0x70] sm:$0xf]
    %v4214 = vld [vmem:[%s4184 + $0x74] sm:$0xf]
    %v4215 = vld [vmem:[%s4184 + $0x78] sm:$0xf]
    %v4216 = vld [vmem:[%s4184 + $0x7c] sm:$0xf]
    %v4217 = vld [vmem:[%s4184 + $0x80] sm:$0xf]
    %v4218 = vld [vmem:[%s4184 + $0x84] sm:$0xf]
    %v4219 = vld [vmem:[%s4184 + $0x88] sm:$0xf]
    %v4220 = vld [vmem:[%s4184 + $0x8c] sm:$0xf]
    %v4221 = vld [vmem:[%s4184 + $0x90] sm:$0xf]
    %v4222 = vld [vmem:[%s4184 + $0x94] sm:$0xf]
    %v4223 = vld [vmem:[%s4184 + $0x98] sm:$0xf]
    %v4224 = vld [vmem:[%s4184 + $0x9c] sm:$0xf]
    %v4225 = vld [vmem:[%s4184 + $0xa0] sm:$0xf]
    %v4226 = vld [vmem:[%s4184 + $0xa4] sm:$0xf]
    %v4227 = vld [vmem:[%s4184 + $0xa8] sm:$0xf]
    %v4228 = vld [vmem:[%s4184 + $0xac] sm:$0xf]
    %v4229 = vld [vmem:[%s4184 + $0xb0] sm:$0xf]
    %v4230 = vld [vmem:[%s4184 + $0xb4] sm:$0xf]
    %v4231 = vld [vmem:[%s4184 + $0xb8] sm:$0xf]
    %v4232 = vld [vmem:[%s4184 + $0xbc] sm:$0xf]
    %v4233 = vpack.c.b16 %v3071, %v3073
    %v4234 = vpack.c.b16 %v3295, %v3359
    %v4235 = vpack.c.b16 %v3296, %v3360
    %v4236 = vpack.c.b16 %v3087, %v3089
    %v4237 = vpack.c.b16 %v3309, %v3361
    %v4238 = vpack.c.b16 %v3310, %v3362
    %v4293 = vunpack.c.l.b16 %v4185
    %v4294 = vunpack.c.l.b16 %v4186
    %v4295 = vunpack.c.l.b16 %v4187
    %v4296 = vunpack.c.l.b16 %v4188
    %v4297 = vunpack.c.l.b16 %v4189
    %v4298 = vunpack.c.l.b16 %v4190
    %v4299 = vunpack.c.l.b16 %v4191
    %v4300 = vunpack.c.l.b16 %v4192
    %v4301 = vunpack.c.l.b16 %v4193
    %v4302 = vunpack.c.l.b16 %v4194
    %v4303 = vunpack.c.l.b16 %v4195
    %v4304 = vunpack.c.l.b16 %v4196
    %v4305 = vunpack.c.l.b16 %v4197
    %v4306 = vunpack.c.l.b16 %v4198
    %v4307 = vunpack.c.l.b16 %v4199
    %v4308 = vunpack.c.l.b16 %v4200
    %v4309 = vunpack.c.l.b16 %v4201
    %v4310 = vunpack.c.l.b16 %v4202
    %v4311 = vunpack.c.l.b16 %v4203
    %v4312 = vunpack.c.l.b16 %v4204
    %v4313 = vunpack.c.l.b16 %v4205
    %v4314 = vunpack.c.l.b16 %v4206
    %v4315 = vunpack.c.l.b16 %v4207
    %v4316 = vunpack.c.l.b16 %v4208
    %v4317 = vunpack.c.l.b16 %v4209
    %v4318 = vunpack.c.l.b16 %v4210
    %v4319 = vunpack.c.l.b16 %v4211
    %v4320 = vunpack.c.l.b16 %v4212
    %v4321 = vunpack.c.l.b16 %v4213
    %v4322 = vunpack.c.l.b16 %v4214
    %v4323 = vunpack.c.l.b16 %v4215
    %v4324 = vunpack.c.l.b16 %v4216
    %v4325 = vunpack.c.l.b16 %v4217
    %v4326 = vunpack.c.l.b16 %v4218
    %v4327 = vunpack.c.l.b16 %v4219
    %v4328 = vunpack.c.l.b16 %v4220
    %v4329 = vunpack.c.l.b16 %v4221
    %v4330 = vunpack.c.l.b16 %v4222
    %v4331 = vunpack.c.l.b16 %v4223
    %v4332 = vunpack.c.l.b16 %v4224
    %v4333 = vunpack.c.l.b16 %v4225
    %v4334 = vunpack.c.l.b16 %v4226
    %v4335 = vunpack.c.l.b16 %v4227
    %v4336 = vunpack.c.l.b16 %v4228
    %v4337 = vunpack.c.l.b16 %v4229
    %v4338 = vunpack.c.l.b16 %v4230
    %v4339 = vunpack.c.l.b16 %v4231
    %v4340 = vunpack.c.l.b16 %v4232
    %v4341 = vpack.c.b16 %v4294, %v4293
    %v4342 = vpack.c.b16 %v4296, %v4295
    %v4343 = vpack.c.b16 %v4298, %v4297
    %v4344 = vpack.c.b16 %v4300, %v4299
    %v4345 = vpack.c.b16 %v4302, %v4301
    %v4346 = vpack.c.b16 %v4304, %v4303
    %v4347 = vpack.c.b16 %v4306, %v4305
    %v4348 = vpack.c.b16 %v4308, %v4307
    %v4349 = vpack.c.b16 %v4310, %v4309
    %v4350 = vpack.c.b16 %v4312, %v4311
    %v4351 = vpack.c.b16 %v4314, %v4313
    %v4352 = vpack.c.b16 %v4316, %v4315
    %v4353 = vpack.c.b16 %v4318, %v4317
    %v4354 = vpack.c.b16 %v4320, %v4319
    %v4355 = vpack.c.b16 %v4322, %v4321
    %v4356 = vpack.c.b16 %v4324, %v4323
    %v4357 = vpack.c.b16 %v4326, %v4325
    %v4358 = vpack.c.b16 %v4328, %v4327
    %v4359 = vpack.c.b16 %v4330, %v4329
    %v4360 = vpack.c.b16 %v4332, %v4331
    %v4361 = vpack.c.b16 %v4334, %v4333
    %v4362 = vpack.c.b16 %v4336, %v4335
    %v4363 = vpack.c.b16 %v4338, %v4337
    %v4364 = vpack.c.b16 %v4340, %v4339
    %4389 = vmatprep.subr.bf16.mxu0 0
    %4390 = vmatpush1.bf16.msra.mxu0 %v4341
    %4391 = vmatprep.subr.bf16.mxu0 0
    %4392 = vmatpush1.bf16.msra.mxu0 %v4342
    %4393 = vmatprep.subr.bf16.mxu0 0
    %4394 = vmatpush1.bf16.msra.mxu0 %v4343
    %4395 = vmatprep.subr.bf16.mxu0 0
    %4396 = vmatpush1.bf16.msra.mxu0 %v4344
    %4397 = vmatprep.subr.bf16.mxu0 0
    %4398 = vmatpush1.bf16.msra.mxu0 %v4345
    %4399 = vmatprep.subr.bf16.mxu0 0
    %4400 = vmatpush1.bf16.msra.mxu0 %v4346
    %4401 = vmatprep.subr.bf16.mxu0 0
    %4402 = vmatpush1.bf16.msra.mxu0 %v4347
    %4403 = vmatprep.subr.bf16.mxu0 0
    %4404 = vmatpush1.bf16.msra.mxu0 %v4348
    %4405 = vmatprep.subr.bf16.mxu0 0
    %4406 = vmatpush1.bf16.msra.mxu0 %v4349
    %4407 = vmatprep.subr.bf16.mxu0 0
    %4408 = vmatpush1.bf16.msra.mxu0 %v4350
    %4409 = vmatprep.subr.bf16.mxu0 0
    %4410 = vmatpush1.bf16.msra.mxu0 %v4351
    %4411 = vmatprep.subr.bf16.mxu0 0
    %4412 = vmatpush1.bf16.msra.mxu0 %v4352
    %4413 = vmatprep.subr.bf16.mxu0 0
    %4414 = vmatpush1.bf16.msra.mxu0 %v4353
    %4415 = vmatprep.subr.bf16.mxu0 0
    %4416 = vmatpush1.bf16.msra.mxu0 %v4354
    %4417 = vmatprep.subr.bf16.mxu0 0
    %4418 = vmatpush1.bf16.msra.mxu0 %v4355
    %4419 = vmatprep.subr.bf16.mxu0 0
    %4420 = vmatpush1.bf16.msra.mxu0 %v4356
    %4421 = vmatprep.mubr.bf16.mxu0 %v3802
    %4422 = vmatmul.mubr.bf16.gmra.mrb[0].mxu0 %v3801
    %v4423 = vpop.f32.mrb[0].mxu0
    %v4424 = vadd.f32 0.0, %v4423
    %v4425 = vpop.f32.mrb[0].mxu0
    %v4426 = vpop.f32.mrb[0].mxu0
    %v4427 = vadd.f32 0.0, %v4426
    %v4428 = vpop.f32.mrb[0].mxu0
    %4429 = vmatprep.mubr.bf16.mxu0 %v3805
    %4430 = vmatmul.mubr.bf16.gmra.mrb[0].mxu0 %v3804
    %v4431 = vpop.f32.mrb[0].mxu0
    %v4432 = vadd.f32 0.0, %v4431
    %v4433 = vpop.f32.mrb[0].mxu0
    %v4434 = vpop.f32.mrb[0].mxu0
    %v4435 = vadd.f32 0.0, %v4434
    %v4436 = vpop.f32.mrb[0].mxu0
    %4437 = vmatprep.mubr.bf16.mxu0 %v3808
    %4438 = vmatmul.mubr.bf16.gmra.mrb[0].mxu0 %v3807
    %v4439 = vpop.f32.mrb[0].mxu0
    %v4440 = vadd.f32 0.0, %v4439
    %v4441 = vpop.f32.mrb[0].mxu0
    %v4442 = vpop.f32.mrb[0].mxu0
    %v4443 = vadd.f32 0.0, %v4442
    %v4444 = vpop.f32.mrb[0].mxu0
    %4445 = vmatprep.mubr.bf16.mxu0 %v4234
    %4446 = vmatmul.mubr.bf16.gmra.mrb[0].mxu0 %v4233
    %v4447 = vpop.f32.mrb[0].mxu0
    %v4448 = vadd.f32 0.0, %v4447
    %v4449 = vpop.f32.mrb[0].mxu0
    %v4450 = vpop.f32.mrb[0].mxu0
    %v4451 = vadd.f32 0.0, %v4450
    %v4452 = vpop.f32.mrb[0].mxu0
    %4453 = vmatprep.mubr.bf16.mxu0 %v3814
    %4454 = vmatmul.mubr.bf16.gmra.mrb[0].mxu0 %v3813
    %v4455 = vpop.f32.mrb[0].mxu0
    %v4456 = vadd.f32 0.0, %v4455
    %v4457 = vpop.f32.mrb[0].mxu0
    %v4458 = vpop.f32.mrb[0].mxu0
    %v4459 = vadd.f32 0.0, %v4458
    %v4460 = vpop.f32.mrb[0].mxu0
    %4461 = vmatprep.mubr.bf16.mxu0 %v3817
    %4462 = vmatmul.mubr.bf16.gmra.mrb[0].mxu0 %v3816
    %v4463 = vpop.f32.mrb[0].mxu0
    %v4464 = vadd.f32 0.0, %v4463
    %v4465 = vpop.f32.mrb[0].mxu0
    %v4466 = vpop.f32.mrb[0].mxu0
    %v4467 = vadd.f32 0.0, %v4466
    %v4468 = vpop.f32.mrb[0].mxu0
    %4469 = vmatprep.mubr.bf16.mxu0 %v3820
    %4470 = vmatmul.mubr.bf16.gmra.mrb[0].mxu0 %v3819
    %v4471 = vpop.f32.mrb[0].mxu0
    %v4472 = vadd.f32 0.0, %v4471
    %v4473 = vpop.f32.mrb[0].mxu0
    %v4474 = vpop.f32.mrb[0].mxu0
    %v4475 = vadd.f32 0.0, %v4474
    %v4476 = vpop.f32.mrb[0].mxu0
    %4477 = vmatprep.mubr.bf16.mxu0 %v4237
    %4478 = vmatmul.mubr.bf16.gmra.mrb[0].mxu0 %v4236
    %v4479 = vpop.f32.mrb[0].mxu0
    %v4480 = vadd.f32 0.0, %v4479
    %v4481 = vpop.f32.mrb[0].mxu0
    %v4482 = vpop.f32.mrb[0].mxu0
    %v4483 = vadd.f32 0.0, %v4482
    %v4484 = vpop.f32.mrb[0].mxu0
    %4485 = vdwg.mxu0
    %4486 = vmatprep.subr.bf16.mxu0 0
    %4487 = vmatpush1.bf16.msra.mxu0 %v4357
    %4488 = vmatprep.subr.bf16.mxu0 0
    %4489 = vmatpush1.bf16.msra.mxu0 %v4358
    %4490 = vmatprep.subr.bf16.mxu0 0
    %4491 = vmatpush1.bf16.msra.mxu0 %v4359
    %4492 = vmatprep.subr.bf16.mxu0 0
    %4493 = vmatpush1.bf16.msra.mxu0 %v4360
    %4494 = vmatprep.subr.bf16.mxu0 0
    %4495 = vmatpush1.bf16.msra.mxu0 %v4361
    %4496 = vmatprep.subr.bf16.mxu0 0
    %4497 = vmatpush1.bf16.msra.mxu0 %v4362
    %4498 = vmatprep.subr.bf16.mxu0 0
    %4499 = vmatpush1.bf16.msra.mxu0 %v4363
    %4500 = vmatprep.subr.bf16.mxu0 0
    %4501 = vmatpush1.bf16.msra.mxu0 %v4364
    %4502 = vmatprep.subr.bf16.mxu0 0
    %4503 = vmatpush1.bf16.msra.mxu0 0
    %4504 = vmatprep.subr.bf16.mxu0 0
    %4505 = vmatpush1.bf16.msra.mxu0 0
    %4506 = vmatprep.subr.bf16.mxu0 0
    %4507 = vmatpush1.bf16.msra.mxu0 0
    %4508 = vmatprep.subr.bf16.mxu0 0
    %4509 = vmatpush1.bf16.msra.mxu0 0
    %4510 = vmatprep.subr.bf16.mxu0 0
    %4511 = vmatpush1.bf16.msra.mxu0 0
    %4512 = vmatprep.subr.bf16.mxu0 0
    %4513 = vmatpush1.bf16.msra.mxu0 0
    %4514 = vmatprep.subr.bf16.mxu0 0
    %4515 = vmatpush1.bf16.msra.mxu0 0
    %4516 = vmatprep.subr.bf16.mxu0 0
    %4517 = vmatpush1.bf16.msra.mxu0 0
    %4518 = vmatprep.mubr.bf16.mxu0 0
    %4519 = vmatmul.mubr.bf16.gmra.mrb[0].mxu0 %v3803
    %v4520 = vpop.f32.mrb[0].mxu0
    %v4521 = vadd.f32 %v4424, %v4520
    %v4522 = vpop.f32.mrb[0].mxu0
    %v4523 = vpop.f32.mrb[0].mxu0
    %v4524 = vadd.f32 %v4427, %v4523
    %v4525 = vpop.f32.mrb[0].mxu0
    %4526 = vmatprep.mubr.bf16.mxu0 0
    %4527 = vmatmul.mubr.bf16.gmra.mrb[0].mxu0 %v3806
    %v4528 = vpop.f32.mrb[0].mxu0
    %v4529 = vadd.f32 %v4432, %v4528
    %v4530 = vpop.f32.mrb[0].mxu0
    %v4531 = vpop.f32.mrb[0].mxu0
    %v4532 = vadd.f32 %v4435, %v4531
    %v4533 = vpop.f32.mrb[0].mxu0
    %4534 = vmatprep.mubr.bf16.mxu0 0
    %4535 = vmatmul.mubr.bf16.gmra.mrb[0].mxu0 %v3809
    %v4536 = vpop.f32.mrb[0].mxu0
    %v4537 = vadd.f32 %v4440, %v4536
    %v4538 = vpop.f32.mrb[0].mxu0
    %v4539 = vpop.f32.mrb[0].mxu0
    %v4540 = vadd.f32 %v4443, %v4539
    %v4541 = vpop.f32.mrb[0].mxu0
    %4542 = vmatprep.mubr.bf16.mxu0 0
    %4543 = vmatmul.mubr.bf16.gmra.mrb[0].mxu0 %v4235
    %v4544 = vpop.f32.mrb[0].mxu0
    %v4545 = vadd.f32 %v4448, %v4544
    %v4546 = vpop.f32.mrb[0].mxu0
    %v4547 = vpop.f32.mrb[0].mxu0
    %v4548 = vadd.f32 %v4451, %v4547
    %v4549 = vpop.f32.mrb[0].mxu0
    %4550 = vmatprep.mubr.bf16.mxu0 0
    %4551 = vmatmul.mubr.bf16.gmra.mrb[0].mxu0 %v3815
    %v4552 = vpop.f32.mrb[0].mxu0
    %v4553 = vadd.f32 %v4456, %v4552
    %v4554 = vpop.f32.mrb[0].mxu0
    %v4555 = vpop.f32.mrb[0].mxu0
    %v4556 = vadd.f32 %v4459, %v4555
    %v4557 = vpop.f32.mrb[0].mxu0
    %4558 = vmatprep.mubr.bf16.mxu0 0
    %4559 = vmatmul.mubr.bf16.gmra.mrb[0].mxu0 %v3818
    %v4560 = vpop.f32.mrb[0].mxu0
    %v4561 = vadd.f32 %v4464, %v4560
    %v4562 = vpop.f32.mrb[0].mxu0
    %v4563 = vpop.f32.mrb[0].mxu0
    %v4564 = vadd.f32 %v4467, %v4563
    %v4565 = vpop.f32.mrb[0].mxu0
    %4566 = vmatprep.mubr.bf16.mxu0 0
    %4567 = vmatmul.mubr.bf16.gmra.mrb[0].mxu0 %v3821
    %v4568 = vpop.f32.mrb[0].mxu0
    %v4569 = vadd.f32 %v4472, %v4568
    %v4570 = vpop.f32.mrb[0].mxu0
    %v4571 = vpop.f32.mrb[0].mxu0
    %v4572 = vadd.f32 %v4475, %v4571
    %v4573 = vpop.f32.mrb[0].mxu0
    %4574 = vmatprep.mubr.bf16.mxu0 0
    %4575 = vmatmul.mubr.bf16.gmra.mrb[0].mxu0 %v4238
    %v4576 = vpop.f32.mrb[0].mxu0
    %v4577 = vadd.f32 %v4480, %v4576
    %v4578 = vpop.f32.mrb[0].mxu0
    %v4579 = vpop.f32.mrb[0].mxu0
    %v4580 = vadd.f32 %v4483, %v4579
    %v4581 = vpop.f32.mrb[0].mxu0
    %4582 = vdwg.mxu0
    %v4583 = vadd.f32 %v4122, %v4521
    %v4584 = vadd.f32 %v4125, %v4524
    %v4585 = vadd.f32 %v4130, %v4529
    %v4586 = vadd.f32 %v4133, %v4532
    %v4587 = vadd.f32 %v4138, %v4537
    %v4588 = vadd.f32 %v4141, %v4540
    %v4589 = vadd.f32 %v4146, %v4545
    %v4590 = vadd.f32 %v4149, %v4548
    %v4591 = vadd.f32 %v4154, %v4553
    %v4592 = vadd.f32 %v4157, %v4556
    %v4593 = vadd.f32 %v4162, %v4561
    %v4594 = vadd.f32 %v4165, %v4564
    %v4595 = vadd.f32 %v4170, %v4569
    %v4596 = vadd.f32 %v4173, %v4572
    %v4597 = vadd.f32 %v4178, %v4577
    %v4598 = vadd.f32 %v4181, %v4580
    %v4599 = vld [vmem:[%s3] sm:$0x1]
    %v4600 = vadd.f32 %v4583, %v4584
    %v4601 = vadd.f32 %v4600, %v4585
    %v4602 = vadd.f32 %v4601, %v4586
    %v4603 = vadd.f32 %v4602, %v4587
    %v4604 = vadd.f32 %v4603, %v4588
    %v4605 = vadd.f32 %v4604, %v4589
    %v4606 = vadd.f32 %v4605, %v4590
    %v4607 = vrot.slane %v4606, 4
    %v4608 = vadd.f32 %v4606, %v4607
    %v4609 = vrot.slane %v4608, 2
    %v4610 = vadd.f32 %v4608, %v4609
    %v4611 = vrot.slane %v4610, 1
    %v4612 = vadd.f32 %v4610, %v4611
    %v4613 = vadd.f32 %v4591, %v4592
    %v4614 = vadd.f32 %v4613, %v4593
    %v4615 = vadd.f32 %v4614, %v4594
    %v4616 = vadd.f32 %v4615, %v4595
    %v4617 = vadd.f32 %v4616, %v4596
    %v4618 = vadd.f32 %v4617, %v4597
    %v4619 = vadd.f32 %v4618, %v4598
    %v4620 = vrot.slane %v4619, 4
    %v4621 = vadd.f32 %v4619, %v4620
    %v4622 = vrot.slane %v4621, 2
    %v4623 = vadd.f32 %v4621, %v4622
    %v4624 = vrot.slane %v4623, 1
    %v4625 = vadd.f32 %v4623, %v4624
    %v4626 = vmul.f32 %v4583, %v4583
    %v4627 = vmul.f32 %v4584, %v4584
    %v4628 = vmul.f32 %v4585, %v4585
    %v4629 = vmul.f32 %v4586, %v4586
    %v4630 = vmul.f32 %v4587, %v4587
    %v4631 = vmul.f32 %v4588, %v4588
    %v4632 = vmul.f32 %v4589, %v4589
    %v4633 = vmul.f32 %v4590, %v4590
    %v4634 = vmul.f32 %v4591, %v4591
    %v4635 = vmul.f32 %v4592, %v4592
    %v4636 = vmul.f32 %v4593, %v4593
    %v4637 = vmul.f32 %v4594, %v4594
    %v4638 = vmul.f32 %v4595, %v4595
    %v4639 = vmul.f32 %v4596, %v4596
    %v4640 = vmul.f32 %v4597, %v4597
    %v4641 = vmul.f32 %v4598, %v4598
    %v4642 = vadd.f32 %v4626, %v4627
    %v4643 = vadd.f32 %v4642, %v4628
    %v4644 = vadd.f32 %v4643, %v4629
    %v4645 = vadd.f32 %v4644, %v4630
    %v4646 = vadd.f32 %v4645, %v4631
    %v4647 = vadd.f32 %v4646, %v4632
    %v4648 = vadd.f32 %v4647, %v4633
    %v4649 = vrot.slane %v4648, 4
    %v4650 = vadd.f32 %v4648, %v4649
    %v4651 = vrot.slane %v4650, 2
    %v4652 = vadd.f32 %v4650, %v4651
    %v4653 = vrot.slane %v4652, 1
    %v4654 = vadd.f32 %v4652, %v4653
    %v4655 = vadd.f32 %v4634, %v4635
    %v4656 = vadd.f32 %v4655, %v4636
    %v4657 = vadd.f32 %v4656, %v4637
    %v4658 = vadd.f32 %v4657, %v4638
    %v4659 = vadd.f32 %v4658, %v4639
    %v4660 = vadd.f32 %v4659, %v4640
    %v4661 = vadd.f32 %v4660, %v4641
    %v4662 = vrot.slane %v4661, 4
    %v4663 = vadd.f32 %v4661, %v4662
    %v4664 = vrot.slane %v4663, 2
    %v4665 = vadd.f32 %v4663, %v4664
    %v4666 = vrot.slane %v4665, 1
    %v4667 = vadd.f32 %v4665, %v4666
    %v4668 = vmul.f32 %v4612, 0.015625
    %v4669 = vmul.f32 %v4625, 0.015625
    %v4670 = vmul.f32 %v4654, 0.015625
    %v4671 = vmul.f32 %v4667, 0.015625
    %v4672 = vmul.f32 %v4668, %v4668
    %v4673 = vmul.f32 %v4669, %v4669
    %v4674 = vsub.f32 %v4670, %v4672
    %v4675 = vsub.f32 %v4671, %v4673
    %v4676 = vmax.f32 %v4674, 0.0
    %v4677 = vmax.f32 %v4675, 0.0
    %v4678 = vadd.f32 %v4676, 1e-05
    %v4679 = vadd.f32 %v4677, 1e-05
    %v4680 = vrsqrt.pop %v4678
    %v4681 = vrsqrt.pop %v4679
    %v4682 = vmul.f32 %v4680, %v4599
    %v4683 = vmul.f32 %v4681, %v4599
    %v4684 = vsub.f32 %v4583, %v4668
    %v4685 = vsub.f32 %v4584, %v4668
    %v4686 = vsub.f32 %v4585, %v4668
    %v4687 = vsub.f32 %v4586, %v4668
    %v4688 = vsub.f32 %v4587, %v4668
    %v4689 = vsub.f32 %v4588, %v4668
    %v4690 = vsub.f32 %v4589, %v4668
    %v4691 = vsub.f32 %v4590, %v4668
    %v4692 = vsub.f32 %v4591, %v4669
    %v4693 = vsub.f32 %v4592, %v4669
    %v4694 = vsub.f32 %v4593, %v4669
    %v4695 = vsub.f32 %v4594, %v4669
    %v4696 = vsub.f32 %v4595, %v4669
    %v4697 = vsub.f32 %v4596, %v4669
    %v4698 = vsub.f32 %v4597, %v4669
    %v4699 = vsub.f32 %v4598, %v4669
    %v4700 = vlaneseq
    %v4701 = vshrl.u32 %v4700, 7
    %v4702 = vsub.s32 0, %v4701
    %v4703 = vrot.slane %v4682, %v4702
    %v4704 = vlaneseq
    %v4705 = vshrl.u32 %v4704, 7
    %v4706 = vsub.s32 0, %v4705
    %v4707 = vrot.slane %v4683, %v4706
    %v4708 = vmul.f32 %v4684, %v4703
    %v4709 = vmul.f32 %v4685, %v4703
    %v4710 = vmul.f32 %v4686, %v4703
    %v4711 = vmul.f32 %v4687, %v4703
    %v4712 = vmul.f32 %v4688, %v4703
    %v4713 = vmul.f32 %v4689, %v4703
    %v4714 = vmul.f32 %v4690, %v4703
    %v4715 = vmul.f32 %v4691, %v4703
    %v4716 = vmul.f32 %v4692, %v4707
    %v4717 = vmul.f32 %v4693, %v4707
    %v4718 = vmul.f32 %v4694, %v4707
    %v4719 = vmul.f32 %v4695, %v4707
    %v4720 = vmul.f32 %v4696, %v4707
    %v4721 = vmul.f32 %v4697, %v4707
    %v4722 = vmul.f32 %v4698, %v4707
    %v4723 = vmul.f32 %v4699, %v4707
    %v4724 = vld [vmem:[%s0] sm:$0xff]
    %v4725 = vld [vmem:[%s0 + $0x8] sm:$0xff]
    %v4726 = vld [vmem:[%s0 + $0x10] sm:$0xff]
    %v4727 = vld [vmem:[%s0 + $0x18] sm:$0xff]
    %v4728 = vld [vmem:[%s0 + $0x20] sm:$0xff]
    %v4729 = vld [vmem:[%s0 + $0x28] sm:$0xff]
    %v4730 = vld [vmem:[%s0 + $0x30] sm:$0xff]
    %v4731 = vld [vmem:[%s0 + $0x38] sm:$0xff]
    %v4732 = vld [vmem:[%s0 + $0x40] sm:$0xff]
    %v4733 = vld [vmem:[%s0 + $0x48] sm:$0xff]
    %v4734 = vld [vmem:[%s0 + $0x50] sm:$0xff]
    %v4735 = vld [vmem:[%s0 + $0x58] sm:$0xff]
    %v4736 = vld [vmem:[%s0 + $0x60] sm:$0xff]
    %v4737 = vld [vmem:[%s0 + $0x68] sm:$0xff]
    %v4738 = vld [vmem:[%s0 + $0x70] sm:$0xff]
    %v4739 = vld [vmem:[%s0 + $0x78] sm:$0xff]
    %v4740 = vadd.f32 %v4724, %v4708
    %v4741 = vadd.f32 %v4725, %v4709
    %v4742 = vadd.f32 %v4726, %v4710
    %v4743 = vadd.f32 %v4727, %v4711
    %v4744 = vadd.f32 %v4728, %v4712
    %v4745 = vadd.f32 %v4729, %v4713
    %v4746 = vadd.f32 %v4730, %v4714
    %v4747 = vadd.f32 %v4731, %v4715
    %v4748 = vadd.f32 %v4732, %v4716
    %v4749 = vadd.f32 %v4733, %v4717
    %v4750 = vadd.f32 %v4734, %v4718
    %v4751 = vadd.f32 %v4735, %v4719
    %v4752 = vadd.f32 %v4736, %v4720
    %v4753 = vadd.f32 %v4737, %v4721
    %v4754 = vadd.f32 %v4738, %v4722
    %v4755 = vadd.f32 %v4739, %v4723
    %vm4756 = vcmask 261120
    %4757 = vst.msk [vmem:[#allocation3] sm:$0xff] %vm4756, %v4740
    %4758 = vst.msk [vmem:[#allocation3 + $0x8] sm:$0xff] %vm4756, %v4741
    %4759 = vst.msk [vmem:[#allocation3 + $0x10] sm:$0xff] %vm4756, %v4742
    %4760 = vst.msk [vmem:[#allocation3 + $0x18] sm:$0xff] %vm4756, %v4743
    %4761 = vst.msk [vmem:[#allocation3 + $0x20] sm:$0xff] %vm4756, %v4744
    %4762 = vst.msk [vmem:[#allocation3 + $0x28] sm:$0xff] %vm4756, %v4745
    %4763 = vst.msk [vmem:[#allocation3 + $0x30] sm:$0xff] %vm4756, %v4746
    %4764 = vst.msk [vmem:[#allocation3 + $0x38] sm:$0xff] %vm4756, %v4747
    %4765 = vst.msk [vmem:[#allocation3 + $0x40] sm:$0xff] %vm4756, %v4748
    %4766 = vst.msk [vmem:[#allocation3 + $0x48] sm:$0xff] %vm4756, %v4749
    %4767 = vst.msk [vmem:[#allocation3 + $0x50] sm:$0xff] %vm4756, %v4750
    %4768 = vst.msk [vmem:[#allocation3 + $0x58] sm:$0xff] %vm4756, %v4751
    %4769 = vst.msk [vmem:[#allocation3 + $0x60] sm:$0xff] %vm4756, %v4752
    %4770 = vst.msk [vmem:[#allocation3 + $0x68] sm:$0xff] %vm4756, %v4753
    %4771 = vst.msk [vmem:[#allocation3 + $0x70] sm:$0xff] %vm4756, %v4754
    %4772 = vst.msk [vmem:[#allocation3 + $0x78] sm:$0xff] %vm4756, %v4755
    // Predicated region
    $region18: #{residual_block_nchw.1} parent=1 // pred_check
      _
    $region19: #{residual_block_nchw.1} parent=1 // pred_check_branch
      %4774 = sbr.rel (0) target = $region21
    $region20: #{residual_block_nchw.1} parent=1 // pred_region
      %s4776 = ssub.s32 2048, 2048
      %4777 = vsyncadd [#allocation4], %s4776
      %s4778 = sshll.u32 [#allocation3], 4
      %s4779 = int_to_ptr.vmem [resolvable:$true] %s4778
      %4784 = dma.vmem_to_hbm [thread:$0]  %s4779, 2048, %s4, [#allocation4], 128, 128, 8
    $region21: #{residual_block_nchw.1} parent=1 // pred_fallthru
      _
    // Predicated region
    $region22: #{residual_block_nchw.1} parent=1 // pred_check
      _
    $region23: #{residual_block_nchw.1} parent=1 // pred_check_branch
      %4786 = sbr.rel (0) target = $region25
    $region24: #{residual_block_nchw.1} parent=1 // pred_region
      %4787 = dma.done [#allocation4], 2048
    $region25: #{residual_block_nchw.1} parent=1 // pred_fallthru
      _
    %4788 = vsyncpa [#allocation4], 1

</llo_original>
